<compile_context>
chip_gen: v6e
topology: v6e:2x2x1
jax: 0.10.0
libtpu: 0.0.40
codegen_flags: <defaults>
</compile_context>

<pallas_src>
import numpy as np
import jax
import jax.numpy as jnp
from jax.experimental import pallas as pl
from jax.experimental.pallas import tpu as pltpu

ATOM_DIM = 13
TIME_DIM = 10
FEATS_DIM = ATOM_DIM + TIME_DIM        # 23
POS_DIM = 3
M_DIM = 16                             # EGNN_Sparse default m_dim
EDGE_IN = 2 * FEATS_DIM + 1            # 47 (x_i | x_j | rel_dist)
E_HID = 2 * EDGE_IN                    # 94
N_HID = 2 * FEATS_DIM                  # 46
C_HID = 4 * M_DIM                      # 64
NUM_LAYERS = 3
C_PAD = 32                             # lane width of the node-state slab
SLAB2 = 2 * C_PAD                      # 64 = [tgt | src] / [state | agg] lanes


def _round_up(x, m):
    return ((x + m - 1) // m) * m


def _silu(v):
    # sigmoid(v) = 0.5*(tanh(v/2)+1): routes to the EUP, robust for v << 0
    return v * (0.5 * (jnp.tanh(0.5 * v) + 1.0))


# ----------------------------- fused Pallas kernel -------------------------- #

def fused_egnn_kernel(x0_ref, st_col_ref, tgt_row_ref, P_ref,
                      we1_ref, we1d_ref, be1_ref, we2_ref, be2_ref,
                      wc1_ref, bc1_ref, wc2t_ref, bc2_ref,
                      wn1_ref, bn1_ref, wn2_ref, bn2_ref,
                      wd1_ref, bd1_ref, wd2_ref, bd2_ref,
                      out_ref, state_ref, agg_ref):
    f32 = jnp.float32
    l = pl.program_id(0)               # layer index
    e = pl.program_id(1)               # edge-tile index
    num_l = pl.num_programs(0)
    num_e = pl.num_programs(1)

    n_pad = state_ref.shape[0]
    two_et = st_col_ref.shape[1]
    et = two_et // 2

    @pl.when(jnp.logical_and(l == 0, e == 0))
    def _():
        state_ref[...] = x0_ref[...]          # [coors | feats | 0]  (n_pad, 32)

    @pl.when(e == 0)
    def _():
        agg_ref[...] = jnp.zeros_like(agg_ref)

    state = state_ref[...]                    # pre-layer node state (n_pad, 32)

    # -- fused gather of both endpoints: one in-kernel one-hot + one matmul --
    st_idx = st_col_ref[0]                    # (2*et, 1) int32: [src ids | tgt ids]
    lane_n = jax.lax.broadcasted_iota(jnp.int32, (two_et, n_pad), 1)
    gather_oh = (lane_n == st_idx).astype(f32)                         # (2*et, n_pad)
    st = jnp.dot(gather_oh, state, preferred_element_type=f32)         # (2*et, 32)
    src = st[:et]                             # rows of edge_index[0]
    tgt = st[et:]                             # rows of edge_index[1]

    rel_coors = src[:, :POS_DIM] - tgt[:, :POS_DIM]                    # (et, 3)
    rel_dist = jnp.sum(rel_coors * rel_coors, axis=-1, keepdims=True)  # (et, 1)

    # edge_mlp: fused Linear over the 64-lane [tgt | src] slab (K=64), then
    #   SiLU -> Linear(94, 16) -> SiLU      (rel_dist handled via rank-1 term)
    edge_in = jnp.concatenate([tgt, src], axis=-1)                     # (et, 64)
    h = (jnp.dot(edge_in, we1_ref[l], preferred_element_type=f32)
         + rel_dist * we1d_ref[l] + be1_ref[l])
    h = _silu(h)
    m_ij = _silu(jnp.dot(h, we2_ref[l], preferred_element_type=f32) + be2_ref[l])

    # coors_mlp: Linear(16, 64) -> SiLU -> Linear(64, 1)
    ch = _silu(jnp.dot(m_ij, wc1_ref[l], preferred_element_type=f32) + bc1_ref[l])
    coor_w = jnp.sum(ch * wc2t_ref[l], axis=-1, keepdims=True) + bc2_ref[l]   # (et, 1)

    # -- fused scatter-add to target nodes via in-kernel one-hot contraction --
    scat = jnp.concatenate(
        [coor_w * rel_coors, m_ij,
         jnp.zeros((et, C_PAD - POS_DIM - M_DIM), f32)], axis=-1)      # (et, 32)
    tgt_idx = tgt_row_ref[0]                                           # (1, et)
    sub_n = jax.lax.broadcasted_iota(jnp.int32, (n_pad, et), 0)
    scatter_oh = (sub_n == tgt_idx).astype(f32)                        # (n_pad, et)
    agg_ref[...] += jnp.dot(scatter_oh, scat, preferred_element_type=f32)

    # layer finalize: coordinate update + node_mlp residual on the state slab
    @pl.when(e == num_e - 1)
    def _():
        agg = agg_ref[...]                                             # (n_pad, 32)
        lane32 = jax.lax.broadcasted_iota(jnp.int32, (n_pad, C_PAD), 1)
        agg_coor = jnp.where(lane32 < POS_DIM, agg, 0.0)               # coor lanes only
        node_in = jnp.concatenate([state, agg], axis=-1)               # (n_pad, 64)
        nh = _silu(jnp.dot(node_in, wn1_ref[l], preferred_element_type=f32)
                   + bn1_ref[l])
        delta = jnp.dot(nh, wn2_ref[l], preferred_element_type=f32) + bn2_ref[l]
        state_ref[...] = state + agg_coor + delta                      # feats lanes only in delta

    # model finalize: scatter_mean pooling + dense head
    @pl.when(jnp.logical_and(l == num_l - 1, e == num_e - 1))
    def _():
        final = state_ref[...]                                         # (n_pad, 32)
        pooled = jnp.dot(P_ref[...], final, preferred_element_type=f32)  # (G, 32)
        z = jnp.maximum(
            jnp.dot(pooled, wd1_ref[...], preferred_element_type=f32) + bd1_ref[...],
            0.0)
        out_ref[...] = jnp.dot(z, wd2_ref[...], preferred_element_type=f32) + bd2_ref[...]


# ------------------------------ wrapper ------------------------------------- #

def time_embed(params, t):
    half = TIME_DIM // 2
    freqs = jnp.exp(jnp.arange(half, dtype=jnp.float32) * (-np.log(10000.0) / (half - 1)))
    e = t[:, None] * freqs[None, :]
    e = jnp.concatenate([jnp.sin(e), jnp.cos(e)], axis=-1)                # (G, 10)
    h = jax.nn.gelu(e @ params["wt1"] + params["bt1"], approximate=False)  # torch.nn.GELU (exact)
    return h @ params["wt2"] + params["bt2"]                              # (G, 10)


def _prep_weights(params):
    """Stack per-layer weights and zero-pad them to the 32/64-lane slab layout."""
    L = params["layers"]
    nl = len(L)

    def stack(k):
        return jnp.stack([lp[k] for lp in L])

    we1 = stack("we1")                                         # (nl, 47, 94)
    we1_full = jnp.zeros((nl, SLAB2, E_HID), jnp.float32)
    we1_full = we1_full.at[:, POS_DIM:POS_DIM + FEATS_DIM, :].set(we1[:, :FEATS_DIM])
    we1_full = we1_full.at[:, C_PAD + POS_DIM:C_PAD + POS_DIM + FEATS_DIM, :].set(
        we1[:, FEATS_DIM:2 * FEATS_DIM])
    we1_d = we1[:, 2 * FEATS_DIM:, :]                          # (nl, 1, 94)

    wn1 = stack("wn1")                                         # (nl, 39, 46)
    wn1_full = jnp.zeros((nl, SLAB2, N_HID), jnp.float32)
    wn1_full = wn1_full.at[:, POS_DIM:POS_DIM + FEATS_DIM, :].set(wn1[:, :FEATS_DIM])
    wn1_full = wn1_full.at[:, C_PAD + POS_DIM:C_PAD + POS_DIM + M_DIM, :].set(
        wn1[:, FEATS_DIM:FEATS_DIM + M_DIM])

    wn2 = stack("wn2")                                         # (nl, 46, 23)
    wn2_pad = jnp.zeros((nl, N_HID, C_PAD), jnp.float32)
    wn2_pad = wn2_pad.at[:, :, POS_DIM:POS_DIM + FEATS_DIM].set(wn2)
    bn2 = stack("bn2")                                         # (nl, 1, 23)
    bn2_pad = jnp.zeros((nl, 1, C_PAD), jnp.float32)
    bn2_pad = bn2_pad.at[:, :, POS_DIM:POS_DIM + FEATS_DIM].set(bn2)

    wc2t = jnp.stack([lp["wc2"].T for lp in L])                # (nl, 1, 64)

    wd1_pad = jnp.zeros((C_PAD, N_HID), jnp.float32)
    wd1_pad = wd1_pad.at[POS_DIM:POS_DIM + FEATS_DIM, :].set(params["wd1"])

    order = ("we1_full", "we1_d", "be1", "we2", "be2",
             "wc1", "bc1", "wc2t", "bc2",
             "wn1_full", "bn1", "wn2_pad", "bn2_pad",
             "wd1_pad", "bd1", "wd2", "bd2")
    table = dict(we1_full=we1_full, we1_d=we1_d, be1=stack("be1"),
                 we2=stack("we2"), be2=stack("be2"),
                 wc1=stack("wc1"), bc1=stack("bc1"), wc2t=wc2t, bc2=stack("bc2"),
                 wn1_full=wn1_full, bn1=stack("bn1"),
                 wn2_pad=wn2_pad, bn2_pad=bn2_pad,
                 wd1_pad=wd1_pad, bd1=params["bd1"],
                 wd2=params["wd2"], bd2=params["bd2"])
    return [table[k] for k in order]


def synth_egnn_forward(params, ligand_pos, ligand_v, edge_index, t, batch,
                       num_graphs, *, e_tile=256):
    time_emb = time_embed(params, t)                                      # (G, 10)
    feats0 = jnp.concatenate([ligand_v, time_emb[batch]], axis=-1)        # (N, 23)

    n = ligand_pos.shape[0]
    # n_pad is the lane (contraction) dim of the in-kernel gather one-hot and
    # of the pooling matrix -> pad to 128 for unmasked, fully-fed MXU work.
    n_pad = _round_up(n, 128)
    x0 = jnp.zeros((n_pad, C_PAD), jnp.float32)
    x0 = x0.at[:n, :POS_DIM].set(ligand_pos)
    x0 = x0.at[:n, POS_DIM:POS_DIM + FEATS_DIM].set(feats0)

    e = edge_index.shape[1]
    e_tile = max(8, min(_round_up(int(e_tile), 8), _round_up(e, 8)))
    e_pad = _round_up(e, e_tile)
    ke = e_pad // e_tile

    # pad value n_pad is outside the node-iota range -> padded edges get
    # all-zero one-hot rows/cols: they gather zeros and scatter nothing.
    src_p = jnp.full((e_pad,), n_pad, jnp.int32).at[:e].set(edge_index[0].astype(jnp.int32))
    tgt_p = jnp.full((e_pad,), n_pad, jnp.int32).at[:e].set(edge_index[1].astype(jnp.int32))
    src_t = src_p.reshape(ke, e_tile)
    tgt_t = tgt_p.reshape(ke, e_tile)
    st_col = jnp.concatenate([src_t, tgt_t], axis=1)[..., None]           # (ke, 2*et, 1)
    tgt_row = tgt_t[:, None, :]                                           # (ke, 1, et)

    Bm = jax.nn.one_hot(batch, num_graphs, dtype=jnp.float32).T           # (G, N)
    counts = jnp.maximum(jnp.sum(Bm, axis=1, keepdims=True), 1.0)
    P = jnp.zeros((num_graphs, n_pad), jnp.float32).at[:, :n].set(Bm / counts)

    weight_list = _prep_weights(params)
    num_layers = weight_list[0].shape[0]

    def const_spec(a):
        nd = a.ndim
        return pl.BlockSpec(a.shape, lambda l, ei, _n=nd: (0,) * _n)

    in_specs = ([const_spec(x0),
                 pl.BlockSpec((1, 2 * e_tile, 1), lambda l, ei: (ei, 0, 0)),
                 pl.BlockSpec((1, 1, e_tile), lambda l, ei: (ei, 0, 0)),
                 const_spec(P)]
                + [const_spec(a) for a in weight_list])

    flops = int(
        num_layers * (
            2 * 2 * e_pad * n_pad * C_PAD                      # fused gather
            + 2 * e_pad * n_pad * C_PAD                        # fused scatter
            + 2 * e_pad * (SLAB2 * E_HID + E_HID * M_DIM + M_DIM * C_HID + C_HID)
            + 2 * n_pad * (SLAB2 * N_HID + N_HID * C_PAD))
        + 2 * num_graphs * (n_pad * C_PAD + C_PAD * N_HID + N_HID * 2))
    transcendentals = int(num_layers * (e_pad * (E_HID + M_DIM + C_HID) + n_pad * N_HID))
    bytes_accessed = int(4 * (n_pad * C_PAD + num_graphs * (n_pad + 2)
                              + num_layers * 3 * e_pad
                              + sum(a.size for a in weight_list)))

    grid_spec = pltpu.PrefetchScalarGridSpec(
        num_scalar_prefetch=0,
        grid=(num_layers, ke),
        in_specs=in_specs,
        out_specs=pl.BlockSpec((num_graphs, 2), lambda l, ei: (0, 0)),
        scratch_shapes=[pltpu.VMEM((n_pad, C_PAD), jnp.float32),   # node-state slab
                        pltpu.VMEM((n_pad, C_PAD), jnp.float32)])  # scatter accumulator

    return pl.pallas_call(
        fused_egnn_kernel,
        out_shape=jax.ShapeDtypeStruct((num_graphs, 2), jnp.float32),
        grid_spec=grid_spec,
        compiler_params=pltpu.CompilerParams(
            # shared agg accumulator + last-tile finalize => sequential edge axis
            dimension_semantics=("arbitrary", "arbitrary"),
            vmem_limit_bytes=48 * 1024 * 1024),
        cost_estimate=pl.CostEstimate(flops=flops,
                                      transcendentals=transcendentals,
                                      bytes_accessed=bytes_accessed),
    )(x0, st_col, tgt_row, P, *weight_list)


# ------------------------------ parameters ---------------------------------- #

def init_params(key):
    keys = iter(jax.random.split(key, 64))

    def w(shape, scale=0.1):
        return scale * jax.random.normal(next(keys), shape, dtype=jnp.float32)

    params = {
        "wt1": w((TIME_DIM, 4 * TIME_DIM)), "bt1": w((1, 4 * TIME_DIM)),
        "wt2": w((4 * TIME_DIM, TIME_DIM)), "bt2": w((1, TIME_DIM)),
    }
    layers = []
    for _ in range(NUM_LAYERS):
        layers.append(dict(
            we1=w((EDGE_IN, E_HID)), be1=w((1, E_HID)),
            we2=w((E_HID, M_DIM)), be2=w((1, M_DIM)),
            wc1=w((M_DIM, C_HID)), bc1=w((1, C_HID)),
            wc2=w((C_HID, 1)), bc2=w((1, 1)),
            wn1=w((FEATS_DIM + M_DIM, N_HID)), bn1=w((1, N_HID)),
            wn2=w((N_HID, FEATS_DIM)), bn2=w((1, FEATS_DIM)),
        ))
    params["layers"] = layers
    params["wd1"] = w((FEATS_DIM, N_HID)); params["bd1"] = w((1, N_HID))
    params["wd2"] = w((N_HID, 2)); params["bd2"] = w((1, 2))
    return params


# ------------------------------ pure-JAX reference -------------------------- #

def reference_forward(params, ligand_pos, ligand_v, edge_index, t, batch, num_graphs):
    hp = jax.lax.Precision.HIGHEST
    mm = lambda a, b: jnp.dot(a, b, precision=hp)

    time_emb = time_embed(params, t)
    feats = jnp.concatenate([ligand_v, time_emb[batch]], axis=-1)
    coors = ligand_pos
    src, tgt = edge_index[0], edge_index[1]
    n = coors.shape[0]

    def silu(v):
        return v * jax.nn.sigmoid(v)

    for lp in params["layers"]:
        rel_coors = coors[src] - coors[tgt]
        rel_dist = jnp.sum(rel_coors ** 2, axis=-1, keepdims=True)
        edge_in = jnp.concatenate([feats[tgt], feats[src], rel_dist], axis=-1)
        h = silu(mm(edge_in, lp["we1"]) + lp["be1"])
        m_ij = silu(mm(h, lp["we2"]) + lp["be2"])
        ch = silu(mm(m_ij, lp["wc1"]) + lp["bc1"])
        coor_wij = mm(ch, lp["wc2"]) + lp["bc2"]
        coors = coors + jax.ops.segment_sum(coor_wij * rel_coors, tgt, num_segments=n)
        m_i = jax.ops.segment_sum(m_ij, tgt, num_segments=n)
        nh = silu(mm(jnp.concatenate([feats, m_i], axis=-1), lp["wn1"]) + lp["bn1"])
        feats = feats + (mm(nh, lp["wn2"]) + lp["bn2"])

    pooled = jax.ops.segment_sum(feats, batch, num_segments=num_graphs)
    counts = jax.ops.segment_sum(jnp.ones((n, 1), jnp.float32), batch, num_segments=num_graphs)
    pooled = pooled / jnp.maximum(counts, 1.0)
    z = jnp.maximum(mm(pooled, params["wd1"]) + params["bd1"], 0.0)
    return mm(z, params["wd2"]) + params["bd2"]


# --------------------------------- main -------------------------------------- #

if __name__ == "__main__":
    key = jax.random.PRNGKey(0)
    kp, k1, k2, k3 = jax.random.split(key, 4)
    params = init_params(kp)

    N, G = 8, 2
    ligand_pos = jax.random.normal(k1, (N, POS_DIM), dtype=jnp.float32)
    ligand_v = jax.random.normal(k2, (N, ATOM_DIM), dtype=jnp.float32)
    t = jax.random.uniform(k3, (G,), dtype=jnp.float32) * 100.0
    batch = jnp.array([0, 0, 0, 0, 1, 1, 1, 1], dtype=jnp.int32)

    # bidirectional ring within each graph -> E = 16 edges
    src_list, dst_list = [], []
    for g in range(G):
        base = g * 4
        for a, b in [(0, 1), (1, 2), (2, 3), (3, 0)]:
            src_list += [base + a, base + b]
            dst_list += [base + b, base + a]
    edge_index = jnp.array([src_list, dst_list], dtype=jnp.int32)   # (2, 16)

    # e_tile=8 -> 2 edge tiles per layer: exercises the accumulate/finalize path
    out = synth_egnn_forward(params, ligand_pos, ligand_v, edge_index, t, batch, G,
                             e_tile=8)
    out = jax.block_until_ready(out)

    ref = reference_forward(params, ligand_pos, ligand_v, edge_index, t, batch, G)
    ref = jax.block_until_ready(ref)
    np.testing.assert_allclose(np.asarray(out), np.asarray(ref), rtol=2e-3, atol=2e-3)
    assert out.shape == (G, 2)
    print("KERNEL_OK")
</pallas_src>

<mosaic_0001>
module attributes {stable_mosaic.version = 11 : i64} {
  func.func @fused_egnn_kernel(%arg0: i32, %arg1: i32, %arg2: memref<128x32xf32, #tpu.memory_space<vmem>>, %arg3: memref<1x16x1xi32, #tpu.memory_space<vmem>>, %arg4: memref<1x1x8xi32, #tpu.memory_space<vmem>>, %arg5: memref<2x128xf32, #tpu.memory_space<vmem>>, %arg6: memref<3x64x94xf32, #tpu.memory_space<vmem>>, %arg7: memref<3x1x94xf32, #tpu.memory_space<vmem>>, %arg8: memref<3x1x94xf32, #tpu.memory_space<vmem>>, %arg9: memref<3x94x16xf32, #tpu.memory_space<vmem>>, %arg10: memref<3x1x16xf32, #tpu.memory_space<vmem>>, %arg11: memref<3x16x64xf32, #tpu.memory_space<vmem>>, %arg12: memref<3x1x64xf32, #tpu.memory_space<vmem>>, %arg13: memref<3x1x64xf32, #tpu.memory_space<vmem>>, %arg14: memref<3x1x1xf32, #tpu.memory_space<vmem>>, %arg15: memref<3x64x46xf32, #tpu.memory_space<vmem>>, %arg16: memref<3x1x46xf32, #tpu.memory_space<vmem>>, %arg17: memref<3x46x32xf32, #tpu.memory_space<vmem>>, %arg18: memref<3x1x32xf32, #tpu.memory_space<vmem>>, %arg19: memref<32x46xf32, #tpu.memory_space<vmem>>, %arg20: memref<1x46xf32, #tpu.memory_space<vmem>>, %arg21: memref<46x2xf32, #tpu.memory_space<vmem>>, %arg22: memref<1x2xf32, #tpu.memory_space<vmem>>, %arg23: memref<2x2xf32, #tpu.memory_space<vmem>>, %arg24: memref<128x32xf32, #tpu.memory_space<vmem>>, %arg25: memref<128x32xf32, #tpu.memory_space<vmem>>) attributes {dimension_semantics = [#tpu.dimension_semantics<arbitrary>, #tpu.dimension_semantics<arbitrary>], iteration_bounds = array<i64: 3, 2>, scalar_prefetch = 0 : i64, scratch_operands = 2 : i64, tpu.core_type = #tpu.core_type<tc>, window_params = [{pipeline_mode = #tpu.pipeline_mode<synchronous>, transform_indices = @transform_0, window_bounds = array<i64: 128, 32>}, {transform_indices = @transform_1, window_bounds = array<i64: 1, 16, 1>}, {transform_indices = @transform_2, window_bounds = array<i64: 1, 1, 8>}, {pipeline_mode = #tpu.pipeline_mode<synchronous>, transform_indices = @transform_3, window_bounds = array<i64: 2, 128>}, {pipeline_mode = #tpu.pipeline_mode<synchronous>, transform_indices = @transform_4, window_bounds = array<i64: 3, 64, 94>}, {pipeline_mode = #tpu.pipeline_mode<synchronous>, transform_indices = @transform_5, window_bounds = array<i64: 3, 1, 94>}, {pipeline_mode = #tpu.pipeline_mode<synchronous>, transform_indices = @transform_6, window_bounds = array<i64: 3, 1, 94>}, {pipeline_mode = #tpu.pipeline_mode<synchronous>, transform_indices = @transform_7, window_bounds = array<i64: 3, 94, 16>}, {pipeline_mode = #tpu.pipeline_mode<synchronous>, transform_indices = @transform_8, window_bounds = array<i64: 3, 1, 16>}, {pipeline_mode = #tpu.pipeline_mode<synchronous>, transform_indices = @transform_9, window_bounds = array<i64: 3, 16, 64>}, {pipeline_mode = #tpu.pipeline_mode<synchronous>, transform_indices = @transform_10, window_bounds = array<i64: 3, 1, 64>}, {pipeline_mode = #tpu.pipeline_mode<synchronous>, transform_indices = @transform_11, window_bounds = array<i64: 3, 1, 64>}, {pipeline_mode = #tpu.pipeline_mode<synchronous>, transform_indices = @transform_12, window_bounds = array<i64: 3, 1, 1>}, {pipeline_mode = #tpu.pipeline_mode<synchronous>, transform_indices = @transform_13, window_bounds = array<i64: 3, 64, 46>}, {pipeline_mode = #tpu.pipeline_mode<synchronous>, transform_indices = @transform_14, window_bounds = array<i64: 3, 1, 46>}, {pipeline_mode = #tpu.pipeline_mode<synchronous>, transform_indices = @transform_15, window_bounds = array<i64: 3, 46, 32>}, {pipeline_mode = #tpu.pipeline_mode<synchronous>, transform_indices = @transform_16, window_bounds = array<i64: 3, 1, 32>}, {pipeline_mode = #tpu.pipeline_mode<synchronous>, transform_indices = @transform_17, window_bounds = array<i64: 32, 46>}, {pipeline_mode = #tpu.pipeline_mode<synchronous>, transform_indices = @transform_18, window_bounds = array<i64: 1, 46>}, {pipeline_mode = #tpu.pipeline_mode<synchronous>, transform_indices = @transform_19, window_bounds = array<i64: 46, 2>}, {pipeline_mode = #tpu.pipeline_mode<synchronous>, transform_indices = @transform_20, window_bounds = array<i64: 1, 2>}, {pipeline_mode = #tpu.pipeline_mode<synchronous>, transform_indices = @transform_21, window_bounds = array<i64: 2, 2>}]} {
    %c0_i32 = arith.constant 0 : i32
    %0 = arith.cmpi eq, %arg0, %c0_i32 : i32
    %c0_i32_0 = arith.constant 0 : i32
    %1 = arith.cmpi eq, %arg1, %c0_i32_0 : i32
    %2 = arith.andi %0, %1 : i1
    %3 = arith.extui %2 : i1 to i32
    %c0_i32_1 = arith.constant 0 : i32
    %4 = arith.cmpi ne, %3, %c0_i32_1 : i32
    scf.if %4 {
      %c0_52 = arith.constant 0 : index
      %c0_53 = arith.constant 0 : index
      %119 = vector.load %arg2[%c0_52, %c0_53] : memref<128x32xf32, #tpu.memory_space<vmem>>, vector<128x32xf32>
      %c0_54 = arith.constant 0 : index
      %c0_55 = arith.constant 0 : index
      %120 = vector.load %arg24[%c0_54, %c0_55] : memref<128x32xf32, #tpu.memory_space<vmem>>, vector<128x32xf32>
      tpu.vector_store %arg24[%c0_54, %c0_55], %119 {strides = array<i32>} : memref<128x32xf32, #tpu.memory_space<vmem>>, vector<128x32xf32>,
    } else {
    }
    %c0_i32_2 = arith.constant 0 : i32
    %5 = arith.cmpi eq, %arg1, %c0_i32_2 : i32
    %6 = arith.extui %5 : i1 to i32
    %c0_i32_3 = arith.constant 0 : i32
    %7 = arith.cmpi ne, %6, %c0_i32_3 : i32
    scf.if %7 {
      %cst_52 = arith.constant 0.000000e+00 : f32
      %119 = vector.broadcast %cst_52 : f32 to vector<128x32xf32>
      %c0_53 = arith.constant 0 : index
      %c0_54 = arith.constant 0 : index
      %120 = vector.load %arg25[%c0_53, %c0_54] : memref<128x32xf32, #tpu.memory_space<vmem>>, vector<128x32xf32>
      tpu.vector_store %arg25[%c0_53, %c0_54], %119 {strides = array<i32>} : memref<128x32xf32, #tpu.memory_space<vmem>>, vector<128x32xf32>,
    } else {
    }
    %c0 = arith.constant 0 : index
    %c0_4 = arith.constant 0 : index
    %8 = vector.load %arg24[%c0, %c0_4] : memref<128x32xf32, #tpu.memory_space<vmem>>, vector<128x32xf32>
    %c0_5 = arith.constant 0 : index
    %c0_6 = arith.constant 0 : index
    %c0_7 = arith.constant 0 : index
    %9 = vector.load %arg3[%c0_5, %c0_6, %c0_7] : memref<1x16x1xi32, #tpu.memory_space<vmem>>, vector<1x16x1xi32>
    %10 = vector.shape_cast %9 : vector<1x16x1xi32> to vector<16x1xi32>
    %11 = tpu.iota {dimensions = array<i32: 1>} : vector<16x128xi32>
    %12 = vector.broadcast %10 : vector<16x1xi32> to vector<16x128xi32>
    %13 = arith.cmpi eq, %11, %12 : vector<16x128xi32>
    %14 = arith.extui %13 : vector<16x128xi1> to vector<16x128xi32>
    %15 = arith.sitofp %14 : vector<16x128xi32> to vector<16x128xf32>
    %cst = arith.constant dense<0.000000e+00> : vector<16x32xf32>
    %16 = tpu.matmul %15, %8, %cst {dimension_numbers = #tpu.dot_dimension_numbers<[1], [0], [0], [1], [0, 0, 1, 1], [], []>} : vector<16x128xf32>, vector<128x32xf32>, vector<16x32xf32> -> vector<16x32xf32>
    %17 = vector.extract_strided_slice %16 {offsets = [0, 0], sizes = [8, 32], strides = [1, 1]} : vector<16x32xf32> to vector<8x32xf32>
    %18 = vector.extract_strided_slice %16 {offsets = [8, 0], sizes = [8, 32], strides = [1, 1]} : vector<16x32xf32> to vector<8x32xf32>
    %19 = vector.extract_strided_slice %17 {offsets = [0, 0], sizes = [8, 3], strides = [1, 1]} : vector<8x32xf32> to vector<8x3xf32>
    %20 = vector.extract_strided_slice %18 {offsets = [0, 0], sizes = [8, 3], strides = [1, 1]} : vector<8x32xf32> to vector<8x3xf32>
    %21 = arith.subf %19, %20 : vector<8x3xf32>
    %22 = arith.mulf %21, %21 : vector<8x3xf32>
    %cst_8 = arith.constant dense<0.000000e+00> : vector<8xf32>
    %23 = vector.multi_reduction <add>, %22, %cst_8 [1] : vector<8x3xf32> to vector<8xf32>
    %24 = vector.shape_cast %23 : vector<8xf32> to vector<8x1xf32>
    %25 = tpu.concatenate %18, %17 in 1 : vector<8x32xf32>, vector<8x32xf32> -> vector<8x64xf32>
    %26 = arith.index_cast %arg0 : i32 to index
    %c0_9 = arith.constant 0 : index
    %c0_10 = arith.constant 0 : index
    %27 = vector.load %arg6[%26, %c0_9, %c0_10] : memref<3x64x94xf32, #tpu.memory_space<vmem>>, vector<1x64x94xf32>
    %28 = vector.shape_cast %27 : vector<1x64x94xf32> to vector<64x94xf32>
    %cst_11 = arith.constant dense<0.000000e+00> : vector<8x94xf32>
    %29 = tpu.matmul %25, %28, %cst_11 {dimension_numbers = #tpu.dot_dimension_numbers<[1], [0], [0], [1], [0, 0, 1, 1], [], []>} : vector<8x64xf32>, vector<64x94xf32>, vector<8x94xf32> -> vector<8x94xf32>
    %30 = arith.index_cast %arg0 : i32 to index
    %c0_12 = arith.constant 0 : index
    %c0_13 = arith.constant 0 : index
    %31 = vector.load %arg7[%30, %c0_12, %c0_13] : memref<3x1x94xf32, #tpu.memory_space<vmem>>, vector<1x1x94xf32>
    %32 = vector.shape_cast %31 : vector<1x1x94xf32> to vector<1x94xf32>
    %33 = vector.broadcast %24 : vector<8x1xf32> to vector<8x94xf32>
    %34 = vector.broadcast %32 : vector<1x94xf32> to vector<8x94xf32>
    %35 = arith.mulf %33, %34 : vector<8x94xf32>
    %36 = arith.addf %29, %35 : vector<8x94xf32>
    %37 = arith.index_cast %arg0 : i32 to index
    %c0_14 = arith.constant 0 : index
    %c0_15 = arith.constant 0 : index
    %38 = vector.load %arg8[%37, %c0_14, %c0_15] : memref<3x1x94xf32, #tpu.memory_space<vmem>>, vector<1x1x94xf32>
    %39 = vector.shape_cast %38 : vector<1x1x94xf32> to vector<1x94xf32>
    %40 = vector.broadcast %39 : vector<1x94xf32> to vector<8x94xf32>
    %41 = arith.addf %36, %40 : vector<8x94xf32>
    %cst_16 = arith.constant 5.000000e-01 : f32
    %42 = vector.broadcast %cst_16 : f32 to vector<8x94xf32>
    %43 = arith.mulf %42, %41 : vector<8x94xf32>
    %44 = math.tanh %43 : vector<8x94xf32>
    %cst_17 = arith.constant 1.000000e+00 : f32
    %45 = vector.broadcast %cst_17 : f32 to vector<8x94xf32>
    %46 = arith.addf %44, %45 : vector<8x94xf32>
    %cst_18 = arith.constant 5.000000e-01 : f32
    %47 = vector.broadcast %cst_18 : f32 to vector<8x94xf32>
    %48 = arith.mulf %47, %46 : vector<8x94xf32>
    %49 = arith.mulf %41, %48 : vector<8x94xf32>
    %50 = arith.index_cast %arg0 : i32 to index
    %c0_19 = arith.constant 0 : index
    %c0_20 = arith.constant 0 : index
    %51 = vector.load %arg9[%50, %c0_19, %c0_20] : memref<3x94x16xf32, #tpu.memory_space<vmem>>, vector<1x94x16xf32>
    %52 = vector.shape_cast %51 : vector<1x94x16xf32> to vector<94x16xf32>
    %cst_21 = arith.constant dense<0.000000e+00> : vector<8x16xf32>
    %53 = tpu.matmul %49, %52, %cst_21 {dimension_numbers = #tpu.dot_dimension_numbers<[1], [0], [0], [1], [0, 0, 1, 1], [], []>} : vector<8x94xf32>, vector<94x16xf32>, vector<8x16xf32> -> vector<8x16xf32>
    %54 = arith.index_cast %arg0 : i32 to index
    %c0_22 = arith.constant 0 : index
    %c0_23 = arith.constant 0 : index
    %55 = vector.load %arg10[%54, %c0_22, %c0_23] : memref<3x1x16xf32, #tpu.memory_space<vmem>>, vector<1x1x16xf32>
    %56 = vector.shape_cast %55 : vector<1x1x16xf32> to vector<1x16xf32>
    %57 = vector.broadcast %56 : vector<1x16xf32> to vector<8x16xf32>
    %58 = arith.addf %53, %57 : vector<8x16xf32>
    %cst_24 = arith.constant 5.000000e-01 : f32
    %59 = vector.broadcast %cst_24 : f32 to vector<8x16xf32>
    %60 = arith.mulf %59, %58 : vector<8x16xf32>
    %61 = math.tanh %60 : vector<8x16xf32>
    %cst_25 = arith.constant 1.000000e+00 : f32
    %62 = vector.broadcast %cst_25 : f32 to vector<8x16xf32>
    %63 = arith.addf %61, %62 : vector<8x16xf32>
    %cst_26 = arith.constant 5.000000e-01 : f32
    %64 = vector.broadcast %cst_26 : f32 to vector<8x16xf32>
    %65 = arith.mulf %64, %63 : vector<8x16xf32>
    %66 = arith.mulf %58, %65 : vector<8x16xf32>
    %67 = arith.index_cast %arg0 : i32 to index
    %c0_27 = arith.constant 0 : index
    %c0_28 = arith.constant 0 : index
    %68 = vector.load %arg11[%67, %c0_27, %c0_28] : memref<3x16x64xf32, #tpu.memory_space<vmem>>, vector<1x16x64xf32>
    %69 = vector.shape_cast %68 : vector<1x16x64xf32> to vector<16x64xf32>
    %cst_29 = arith.constant dense<0.000000e+00> : vector<8x64xf32>
    %70 = tpu.matmul %66, %69, %cst_29 {dimension_numbers = #tpu.dot_dimension_numbers<[1], [0], [0], [1], [0, 0, 1, 1], [], []>} : vector<8x16xf32>, vector<16x64xf32>, vector<8x64xf32> -> vector<8x64xf32>
    %71 = arith.index_cast %arg0 : i32 to index
    %c0_30 = arith.constant 0 : index
    %c0_31 = arith.constant 0 : index
    %72 = vector.load %arg12[%71, %c0_30, %c0_31] : memref<3x1x64xf32, #tpu.memory_space<vmem>>, vector<1x1x64xf32>
    %73 = vector.shape_cast %72 : vector<1x1x64xf32> to vector<1x64xf32>
    %74 = vector.broadcast %73 : vector<1x64xf32> to vector<8x64xf32>
    %75 = arith.addf %70, %74 : vector<8x64xf32>
    %cst_32 = arith.constant 5.000000e-01 : f32
    %76 = vector.broadcast %cst_32 : f32 to vector<8x64xf32>
    %77 = arith.mulf %76, %75 : vector<8x64xf32>
    %78 = math.tanh %77 : vector<8x64xf32>
    %cst_33 = arith.constant 1.000000e+00 : f32
    %79 = vector.broadcast %cst_33 : f32 to vector<8x64xf32>
    %80 = arith.addf %78, %79 : vector<8x64xf32>
    %cst_34 = arith.constant 5.000000e-01 : f32
    %81 = vector.broadcast %cst_34 : f32 to vector<8x64xf32>
    %82 = arith.mulf %81, %80 : vector<8x64xf32>
    %83 = arith.mulf %75, %82 : vector<8x64xf32>
    %84 = arith.index_cast %arg0 : i32 to index
    %c0_35 = arith.constant 0 : index
    %c0_36 = arith.constant 0 : index
    %85 = vector.load %arg13[%84, %c0_35, %c0_36] : memref<3x1x64xf32, #tpu.memory_space<vmem>>, vector<1x1x64xf32>
    %86 = vector.shape_cast %85 : vector<1x1x64xf32> to vector<1x64xf32>
    %87 = vector.broadcast %86 : vector<1x64xf32> to vector<8x64xf32>
    %88 = arith.mulf %83, %87 : vector<8x64xf32>
    %cst_37 = arith.constant dense<0.000000e+00> : vector<8xf32>
    %89 = vector.multi_reduction <add>, %88, %cst_37 [1] : vector<8x64xf32> to vector<8xf32>
    %90 = vector.shape_cast %89 : vector<8xf32> to vector<8x1xf32>
    %91 = arith.index_cast %arg0 : i32 to index
    %c0_38 = arith.constant 0 : index
    %c0_39 = arith.constant 0 : index
    %92 = vector.load %arg14[%91, %c0_38, %c0_39] : memref<3x1x1xf32, #tpu.memory_space<vmem>>, vector<1x1x1xf32>
    %93 = vector.shape_cast %92 : vector<1x1x1xf32> to vector<1x1xf32>
    %94 = vector.broadcast %93 : vector<1x1xf32> to vector<8x1xf32>
    %95 = arith.addf %90, %94 : vector<8x1xf32>
    %96 = vector.broadcast %95 : vector<8x1xf32> to vector<8x3xf32>
    %97 = arith.mulf %96, %21 : vector<8x3xf32>
    %cst_40 = arith.constant 0.000000e+00 : f32
    %98 = vector.broadcast %cst_40 : f32 to vector<8x13xf32>
    %99 = tpu.concatenate %97, %66, %98 in 1 : vector<8x3xf32>, vector<8x16xf32>, vector<8x13xf32> -> vector<8x32xf32>
    %c0_41 = arith.constant 0 : index
    %c0_42 = arith.constant 0 : index
    %c0_43 = arith.constant 0 : index
    %100 = vector.load %arg4[%c0_41, %c0_42, %c0_43] : memref<1x1x8xi32, #tpu.memory_space<vmem>>, vector<1x1x8xi32>
    %101 = vector.shape_cast %100 : vector<1x1x8xi32> to vector<1x8xi32>
    %102 = tpu.iota {dimensions = array<i32: 0>} : vector<128x8xi32>
    %103 = vector.broadcast %101 : vector<1x8xi32> to vector<128x8xi32>
    %104 = arith.cmpi eq, %102, %103 : vector<128x8xi32>
    %105 = arith.extui %104 : vector<128x8xi1> to vector<128x8xi32>
    %106 = arith.sitofp %105 : vector<128x8xi32> to vector<128x8xf32>
    %c0_44 = arith.constant 0 : index
    %c0_45 = arith.constant 0 : index
    %107 = vector.load %arg25[%c0_44, %c0_45] : memref<128x32xf32, #tpu.memory_space<vmem>>, vector<128x32xf32>
    %cst_46 = arith.constant dense<0.000000e+00> : vector<128x32xf32>
    %108 = tpu.matmul %106, %99, %cst_46 {dimension_numbers = #tpu.dot_dimension_numbers<[1], [0], [0], [1], [0, 0, 1, 1], [], []>} : vector<128x8xf32>, vector<8x32xf32>, vector<128x32xf32> -> vector<128x32xf32>
    %109 = arith.addf %107, %108 : vector<128x32xf32>
    %c0_47 = arith.constant 0 : index
    %c0_48 = arith.constant 0 : index
    %110 = vector.load %arg25[%c0_47, %c0_48] : memref<128x32xf32, #tpu.memory_space<vmem>>, vector<128x32xf32>
    tpu.vector_store %arg25[%c0_47, %c0_48], %109 {strides = array<i32>} : memref<128x32xf32, #tpu.memory_space<vmem>>, vector<128x32xf32>,
    %c1_i32 = arith.constant 1 : i32
    %111 = arith.cmpi eq, %arg1, %c1_i32 : i32
    %112 = arith.extui %111 : i1 to i32
    %c0_i32_49 = arith.constant 0 : i32
    %113 = arith.cmpi ne, %112, %c0_i32_49 : i32
    scf.if %113 {
      %c0_52 = arith.constant 0 : index
      %c0_53 = arith.constant 0 : index
      %119 = vector.load %arg25[%c0_52, %c0_53] : memref<128x32xf32, #tpu.memory_space<vmem>>, vector<128x32xf32>
      %120 = tpu.iota {dimensions = array<i32: 1>} : vector<128x32xi32>
      %c3_i32 = arith.constant 3 : i32
      %121 = vector.broadcast %c3_i32 : i32 to vector<128x32xi32>
      %122 = arith.cmpi slt, %120, %121 : vector<128x32xi32>
      %cst_54 = arith.constant 0.000000e+00 : f32
      %123 = vector.broadcast %cst_54 : f32 to vector<128x32xf32>
      %124 = arith.select %122, %119, %123 : vector<128x32xi1>, vector<128x32xf32>
      %125 = tpu.concatenate %8, %119 in 1 : vector<128x32xf32>, vector<128x32xf32> -> vector<128x64xf32>
      %126 = arith.index_cast %arg0 : i32 to index
      %c0_55 = arith.constant 0 : index
      %c0_56 = arith.constant 0 : index
      %127 = vector.load %arg15[%126, %c0_55, %c0_56] : memref<3x64x46xf32, #tpu.memory_space<vmem>>, vector<1x64x46xf32>
      %128 = vector.shape_cast %127 : vector<1x64x46xf32> to vector<64x46xf32>
      %cst_57 = arith.constant dense<0.000000e+00> : vector<128x46xf32>
      %129 = tpu.matmul %125, %128, %cst_57 {dimension_numbers = #tpu.dot_dimension_numbers<[1], [0], [0], [1], [0, 0, 1, 1], [], []>} : vector<128x64xf32>, vector<64x46xf32>, vector<128x46xf32> -> vector<128x46xf32>
      %130 = arith.index_cast %arg0 : i32 to index
      %c0_58 = arith.constant 0 : index
      %c0_59 = arith.constant 0 : index
      %131 = vector.load %arg16[%130, %c0_58, %c0_59] : memref<3x1x46xf32, #tpu.memory_space<vmem>>, vector<1x1x46xf32>
      %132 = vector.shape_cast %131 : vector<1x1x46xf32> to vector<1x46xf32>
      %133 = vector.broadcast %132 : vector<1x46xf32> to vector<128x46xf32>
      %134 = arith.addf %129, %133 : vector<128x46xf32>
      %cst_60 = arith.constant 5.000000e-01 : f32
      %135 = vector.broadcast %cst_60 : f32 to vector<128x46xf32>
      %136 = arith.mulf %135, %134 : vector<128x46xf32>
      %137 = math.tanh %136 : vector<128x46xf32>
      %cst_61 = arith.constant 1.000000e+00 : f32
      %138 = vector.broadcast %cst_61 : f32 to vector<128x46xf32>
      %139 = arith.addf %137, %138 : vector<128x46xf32>
      %cst_62 = arith.constant 5.000000e-01 : f32
      %140 = vector.broadcast %cst_62 : f32 to vector<128x46xf32>
      %141 = arith.mulf %140, %139 : vector<128x46xf32>
      %142 = arith.mulf %134, %141 : vector<128x46xf32>
      %143 = arith.index_cast %arg0 : i32 to index
      %c0_63 = arith.constant 0 : index
      %c0_64 = arith.constant 0 : index
      %144 = vector.load %arg17[%143, %c0_63, %c0_64] : memref<3x46x32xf32, #tpu.memory_space<vmem>>, vector<1x46x32xf32>
      %145 = vector.shape_cast %144 : vector<1x46x32xf32> to vector<46x32xf32>
      %cst_65 = arith.constant dense<0.000000e+00> : vector<128x32xf32>
      %146 = tpu.matmul %142, %145, %cst_65 {dimension_numbers = #tpu.dot_dimension_numbers<[1], [0], [0], [1], [0, 0, 1, 1], [], []>} : vector<128x46xf32>, vector<46x32xf32>, vector<128x32xf32> -> vector<128x32xf32>
      %147 = arith.index_cast %arg0 : i32 to index
      %c0_66 = arith.constant 0 : index
      %c0_67 = arith.constant 0 : index
      %148 = vector.load %arg18[%147, %c0_66, %c0_67] : memref<3x1x32xf32, #tpu.memory_space<vmem>>, vector<1x1x32xf32>
      %149 = vector.shape_cast %148 : vector<1x1x32xf32> to vector<1x32xf32>
      %150 = vector.broadcast %149 : vector<1x32xf32> to vector<128x32xf32>
      %151 = arith.addf %146, %150 : vector<128x32xf32>
      %152 = arith.addf %8, %124 : vector<128x32xf32>
      %153 = arith.addf %152, %151 : vector<128x32xf32>
      %c0_68 = arith.constant 0 : index
      %c0_69 = arith.constant 0 : index
      %154 = vector.load %arg24[%c0_68, %c0_69] : memref<128x32xf32, #tpu.memory_space<vmem>>, vector<128x32xf32>
      tpu.vector_store %arg24[%c0_68, %c0_69], %153 {strides = array<i32>} : memref<128x32xf32, #tpu.memory_space<vmem>>, vector<128x32xf32>,
    } else {
    }
    %c2_i32 = arith.constant 2 : i32
    %114 = arith.cmpi eq, %arg0, %c2_i32 : i32
    %c1_i32_50 = arith.constant 1 : i32
    %115 = arith.cmpi eq, %arg1, %c1_i32_50 : i32
    %116 = arith.andi %114, %115 : i1
    %117 = arith.extui %116 : i1 to i32
    %c0_i32_51 = arith.constant 0 : i32
    %118 = arith.cmpi ne, %117, %c0_i32_51 : i32
    scf.if %118 {
      %c0_52 = arith.constant 0 : index
      %c0_53 = arith.constant 0 : index
      %119 = vector.load %arg24[%c0_52, %c0_53] : memref<128x32xf32, #tpu.memory_space<vmem>>, vector<128x32xf32>
      %c0_54 = arith.constant 0 : index
      %c0_55 = arith.constant 0 : index
      %120 = vector.load %arg5[%c0_54, %c0_55] : memref<2x128xf32, #tpu.memory_space<vmem>>, vector<2x128xf32>
      %cst_56 = arith.constant dense<0.000000e+00> : vector<2x32xf32>
      %121 = tpu.matmul %120, %119, %cst_56 {dimension_numbers = #tpu.dot_dimension_numbers<[1], [0], [0], [1], [0, 0, 1, 1], [], []>} : vector<2x128xf32>, vector<128x32xf32>, vector<2x32xf32> -> vector<2x32xf32>
      %c0_57 = arith.constant 0 : index
      %c0_58 = arith.constant 0 : index
      %122 = vector.load %arg19[%c0_57, %c0_58] : memref<32x46xf32, #tpu.memory_space<vmem>>, vector<32x46xf32>
      %cst_59 = arith.constant dense<0.000000e+00> : vector<2x46xf32>
      %123 = tpu.matmul %121, %122, %cst_59 {dimension_numbers = #tpu.dot_dimension_numbers<[1], [0], [0], [1], [0, 0, 1, 1], [], []>} : vector<2x32xf32>, vector<32x46xf32>, vector<2x46xf32> -> vector<2x46xf32>
      %c0_60 = arith.constant 0 : index
      %c0_61 = arith.constant 0 : index
      %124 = vector.load %arg20[%c0_60, %c0_61] : memref<1x46xf32, #tpu.memory_space<vmem>>, vector<1x46xf32>
      %125 = vector.broadcast %124 : vector<1x46xf32> to vector<2x46xf32>
      %126 = arith.addf %123, %125 : vector<2x46xf32>
      %cst_62 = arith.constant 0.000000e+00 : f32
      %127 = vector.broadcast %cst_62 : f32 to vector<2x46xf32>
      %128 = arith.maximumf %126, %127 : vector<2x46xf32>
      %c0_63 = arith.constant 0 : index
      %c0_64 = arith.constant 0 : index
      %129 = vector.load %arg21[%c0_63, %c0_64] : memref<46x2xf32, #tpu.memory_space<vmem>>, vector<46x2xf32>
      %cst_65 = arith.constant dense<0.000000e+00> : vector<2x2xf32>
      %130 = tpu.matmul %128, %129, %cst_65 {dimension_numbers = #tpu.dot_dimension_numbers<[1], [0], [0], [1], [0, 0, 1, 1], [], []>} : vector<2x46xf32>, vector<46x2xf32>, vector<2x2xf32> -> vector<2x2xf32>
      %c0_66 = arith.constant 0 : index
      %c0_67 = arith.constant 0 : index
      %131 = vector.load %arg22[%c0_66, %c0_67] : memref<1x2xf32, #tpu.memory_space<vmem>>, vector<1x2xf32>
      %132 = vector.broadcast %131 : vector<1x2xf32> to vector<2x2xf32>
      %133 = arith.addf %130, %132 : vector<2x2xf32>
      %c0_68 = arith.constant 0 : index
      %c0_69 = arith.constant 0 : index
      %134 = vector.load %arg23[%c0_68, %c0_69] : memref<2x2xf32, #tpu.memory_space<vmem>>, vector<2x2xf32>
      tpu.vector_store %arg23[%c0_68, %c0_69], %133 {strides = array<i32>} : memref<2x2xf32, #tpu.memory_space<vmem>>, vector<2x2xf32>,
    } else {
    }
    return
  }
  func.func @transform_0(%arg0: i32, %arg1: i32) -> (i32, i32) {
    %c0_i32 = arith.constant 0 : i32
    %c0_i32_0 = arith.constant 0 : i32
    %c0_i32_1 = arith.constant 0 : i32
    return %c0_i32, %c0_i32_0 : i32, i32
  }
  func.func @transform_1(%arg0: i32, %arg1: i32) -> (i32, i32, i32) {
    %c0_i32 = arith.constant 0 : i32
    %c0_i32_0 = arith.constant 0 : i32
    %c0_i32_1 = arith.constant 0 : i32
    return %arg1, %c0_i32, %c0_i32_0 : i32, i32, i32
  }
  func.func @transform_2(%arg0: i32, %arg1: i32) -> (i32, i32, i32) {
    %c0_i32 = arith.constant 0 : i32
    %c0_i32_0 = arith.constant 0 : i32
    %c0_i32_1 = arith.constant 0 : i32
    return %arg1, %c0_i32, %c0_i32_0 : i32, i32, i32
  }
  func.func @transform_3(%arg0: i32, %arg1: i32) -> (i32, i32) {
    %c0_i32 = arith.constant 0 : i32
    %c0_i32_0 = arith.constant 0 : i32
    %c0_i32_1 = arith.constant 0 : i32
    return %c0_i32, %c0_i32_0 : i32, i32
  }
  func.func @transform_4(%arg0: i32, %arg1: i32) -> (i32, i32, i32) {
    %c0_i32 = arith.constant 0 : i32
    %c0_i32_0 = arith.constant 0 : i32
    %c0_i32_1 = arith.constant 0 : i32
    %c0_i32_2 = arith.constant 0 : i32
    return %c0_i32, %c0_i32_0, %c0_i32_1 : i32, i32, i32
  }
  func.func @transform_5(%arg0: i32, %arg1: i32) -> (i32, i32, i32) {
    %c0_i32 = arith.constant 0 : i32
    %c0_i32_0 = arith.constant 0 : i32
    %c0_i32_1 = arith.constant 0 : i32
    %c0_i32_2 = arith.constant 0 : i32
    return %c0_i32, %c0_i32_0, %c0_i32_1 : i32, i32, i32
  }
  func.func @transform_6(%arg0: i32, %arg1: i32) -> (i32, i32, i32) {
    %c0_i32 = arith.constant 0 : i32
    %c0_i32_0 = arith.constant 0 : i32
    %c0_i32_1 = arith.constant 0 : i32
    %c0_i32_2 = arith.constant 0 : i32
    return %c0_i32, %c0_i32_0, %c0_i32_1 : i32, i32, i32
  }
  func.func @transform_7(%arg0: i32, %arg1: i32) -> (i32, i32, i32) {
    %c0_i32 = arith.constant 0 : i32
    %c0_i32_0 = arith.constant 0 : i32
    %c0_i32_1 = arith.constant 0 : i32
    %c0_i32_2 = arith.constant 0 : i32
    return %c0_i32, %c0_i32_0, %c0_i32_1 : i32, i32, i32
  }
  func.func @transform_8(%arg0: i32, %arg1: i32) -> (i32, i32, i32) {
    %c0_i32 = arith.constant 0 : i32
    %c0_i32_0 = arith.constant 0 : i32
    %c0_i32_1 = arith.constant 0 : i32
    %c0_i32_2 = arith.constant 0 : i32
    return %c0_i32, %c0_i32_0, %c0_i32_1 : i32, i32, i32
  }
  func.func @transform_9(%arg0: i32, %arg1: i32) -> (i32, i32, i32) {
    %c0_i32 = arith.constant 0 : i32
    %c0_i32_0 = arith.constant 0 : i32
    %c0_i32_1 = arith.constant 0 : i32
    %c0_i32_2 = arith.constant 0 : i32
    return %c0_i32, %c0_i32_0, %c0_i32_1 : i32, i32, i32
  }
  func.func @transform_10(%arg0: i32, %arg1: i32) -> (i32, i32, i32) {
    %c0_i32 = arith.constant 0 : i32
    %c0_i32_0 = arith.constant 0 : i32
    %c0_i32_1 = arith.constant 0 : i32
    %c0_i32_2 = arith.constant 0 : i32
    return %c0_i32, %c0_i32_0, %c0_i32_1 : i32, i32, i32
  }
  func.func @transform_11(%arg0: i32, %arg1: i32) -> (i32, i32, i32) {
    %c0_i32 = arith.constant 0 : i32
    %c0_i32_0 = arith.constant 0 : i32
    %c0_i32_1 = arith.constant 0 : i32
    %c0_i32_2 = arith.constant 0 : i32
    return %c0_i32, %c0_i32_0, %c0_i32_1 : i32, i32, i32
  }
  func.func @transform_12(%arg0: i32, %arg1: i32) -> (i32, i32, i32) {
    %c0_i32 = arith.constant 0 : i32
    %c0_i32_0 = arith.constant 0 : i32
    %c0_i32_1 = arith.constant 0 : i32
    %c0_i32_2 = arith.constant 0 : i32
    return %c0_i32, %c0_i32_0, %c0_i32_1 : i32, i32, i32
  }
  func.func @transform_13(%arg0: i32, %arg1: i32) -> (i32, i32, i32) {
    %c0_i32 = arith.constant 0 : i32
    %c0_i32_0 = arith.constant 0 : i32
    %c0_i32_1 = arith.constant 0 : i32
    %c0_i32_2 = arith.constant 0 : i32
    return %c0_i32, %c0_i32_0, %c0_i32_1 : i32, i32, i32
  }
  func.func @transform_14(%arg0: i32, %arg1: i32) -> (i32, i32, i32) {
    %c0_i32 = arith.constant 0 : i32
    %c0_i32_0 = arith.constant 0 : i32
    %c0_i32_1 = arith.constant 0 : i32
    %c0_i32_2 = arith.constant 0 : i32
    return %c0_i32, %c0_i32_0, %c0_i32_1 : i32, i32, i32
  }
  func.func @transform_15(%arg0: i32, %arg1: i32) -> (i32, i32, i32) {
    %c0_i32 = arith.constant 0 : i32
    %c0_i32_0 = arith.constant 0 : i32
    %c0_i32_1 = arith.constant 0 : i32
    %c0_i32_2 = arith.constant 0 : i32
    return %c0_i32, %c0_i32_0, %c0_i32_1 : i32, i32, i32
  }
  func.func @transform_16(%arg0: i32, %arg1: i32) -> (i32, i32, i32) {
    %c0_i32 = arith.constant 0 : i32
    %c0_i32_0 = arith.constant 0 : i32
    %c0_i32_1 = arith.constant 0 : i32
    %c0_i32_2 = arith.constant 0 : i32
    return %c0_i32, %c0_i32_0, %c0_i32_1 : i32, i32, i32
  }
  func.func @transform_17(%arg0: i32, %arg1: i32) -> (i32, i32) {
    %c0_i32 = arith.constant 0 : i32
    %c0_i32_0 = arith.constant 0 : i32
    %c0_i32_1 = arith.constant 0 : i32
    return %c0_i32, %c0_i32_0 : i32, i32
  }
  func.func @transform_18(%arg0: i32, %arg1: i32) -> (i32, i32) {
    %c0_i32 = arith.constant 0 : i32
    %c0_i32_0 = arith.constant 0 : i32
    %c0_i32_1 = arith.constant 0 : i32
    return %c0_i32, %c0_i32_0 : i32, i32
  }
  func.func @transform_19(%arg0: i32, %arg1: i32) -> (i32, i32) {
    %c0_i32 = arith.constant 0 : i32
    %c0_i32_0 = arith.constant 0 : i32
    %c0_i32_1 = arith.constant 0 : i32
    return %c0_i32, %c0_i32_0 : i32, i32
  }
  func.func @transform_20(%arg0: i32, %arg1: i32) -> (i32, i32) {
    %c0_i32 = arith.constant 0 : i32
    %c0_i32_0 = arith.constant 0 : i32
    %c0_i32_1 = arith.constant 0 : i32
    return %c0_i32, %c0_i32_0 : i32, i32
  }
  func.func @transform_21(%arg0: i32, %arg1: i32) -> (i32, i32) {
    %c0_i32 = arith.constant 0 : i32
    %c0_i32_0 = arith.constant 0 : i32
    %c0_i32_1 = arith.constant 0 : i32
    return %c0_i32, %c0_i32_0 : i32, i32
  }
}

</mosaic_0001>

<llo_original>
// kernel: tpu_custom_call.1
$region0: #{tpu_custom_call.1}
  #allocation0 [shape = 'u32[]', space=smem, size = 0x4, offset = 0x4, fixed_abs, tag = 'smem constant byte address 0x4 - core index']
  #allocation1 [shape = 'u32[144,128]{1,0:T(1,128)}', space=vmem, size = 0x12000, scoped, tag = 'internal scratch']
  #allocation2 [shape = 'f32[128,32]{1,0:T(8,128)}', space=vmem, size = 0x10000, scoped, tag = 'scratch operand']
  #allocation3 [shape = 'f32[128,32]{1,0:T(8,128)}', space=vmem, size = 0x10000, scoped, tag = 'scratch operand']
  %s0 = inlined_call_operand.vmem [shape: f32[128,32], index: 0, kind: input, shape index: {}]
  %s1 = inlined_call_operand.vmem [shape: s32[2,16,1], index: 1, kind: input, shape index: {}]
  %s2 = inlined_call_operand.vmem [shape: s32[2,1,8], index: 2, kind: input, shape index: {}]
  %s3 = inlined_call_operand.vmem [shape: f32[2,128], index: 3, kind: input, shape index: {}]
  %s4 = inlined_call_operand.vmem [shape: f32[3,64,94], index: 4, kind: input, shape index: {}]
  %s5 = inlined_call_operand.vmem [shape: f32[3,1,94], index: 5, kind: input, shape index: {}]
  %s6 = inlined_call_operand.vmem [shape: f32[3,1,94], index: 6, kind: input, shape index: {}]
  %s7 = inlined_call_operand.vmem [shape: f32[3,94,16], index: 7, kind: input, shape index: {}]
  %s8 = inlined_call_operand.vmem [shape: f32[3,1,16], index: 8, kind: input, shape index: {}]
  %s9 = inlined_call_operand.vmem [shape: f32[3,16,64], index: 9, kind: input, shape index: {}]
  %s10 = inlined_call_operand.vmem [shape: f32[3,1,64], index: 10, kind: input, shape index: {}]
  %s11 = inlined_call_operand.vmem [shape: f32[3,1,64], index: 11, kind: input, shape index: {}]
  %s12 = inlined_call_operand.vmem [shape: f32[3,1,1], index: 12, kind: input, shape index: {}]
  %s13 = inlined_call_operand.vmem [shape: f32[3,64,46], index: 13, kind: input, shape index: {}]
  %s14 = inlined_call_operand.vmem [shape: f32[3,1,46], index: 14, kind: input, shape index: {}]
  %s15 = inlined_call_operand.vmem [shape: f32[3,46,32], index: 15, kind: input, shape index: {}]
  %s16 = inlined_call_operand.vmem [shape: f32[3,1,32], index: 16, kind: input, shape index: {}]
  %s17 = inlined_call_operand.vmem [shape: f32[32,46], index: 17, kind: input, shape index: {}]
  %s18 = inlined_call_operand.vmem [shape: f32[1,46], index: 18, kind: input, shape index: {}]
  %s19 = inlined_call_operand.vmem [shape: f32[46,2], index: 19, kind: input, shape index: {}]
  %s20 = inlined_call_operand.vmem [shape: f32[1,2], index: 20, kind: input, shape index: {}]
  %s21 = inlined_call_operand.hbm [shape: f32[2,2], index: 21, kind: output, shape index: {}]
  %s22 = sld [smem:[#allocation0]]
  $region133: #{tpu_custom_call.1} parent=0
    _
  %s24 = ssub.s32 1, %s22
  %s25 = scalar_select 0, %s24, %s22
  $region1: #{tpu_custom_call.1} parent=0
    #allocation4 [shape = 'u8[1024]{0}', space=vmem, size = 0x400, scoped, tag = 'output window, operand 0, single buffered']
    #allocation5 [shape = 's32[2]{0}', space=sflag, size = 0x8, scoped, tag = 'scoped memory for tpu_custom_call.1']
    %26 = vsyncpa [#allocation5], 0
    loop: start=0, step=1, limit=8
    $region2: #{tpu_custom_call.1} parent=1 // loop_pre_header
      _
    $region3: #{tpu_custom_call.1} parent=1 // loop_header
      %s28 = sphi 0, %s32
      %p29 = scmp.ge.s32.totalorder %s28, 8
      %s35 = sphi 0, %s47
      %s36 = sphi 0, %s43
      %s37 = sphi 0, %s35
      %s38 = sphi 0, %s36
      %s39 = sphi 0, %s37
      %s40 = sphi 0, %s38
      %s48 = sphi 0, %s48
      %s50 = sphi 0, %s48
      %s51 = sphi 0, %s50
      %s65 = sphi 0, %s51
      %s71 = sphi 0, %s73
      %s74 = sphi 0, %s71
      %s75 = sphi 0, %s74
      %s91 = sphi 0, %s75
      %s97 = sphi 0, %s99
      %s100 = sphi 0, %s97
      %s101 = sphi 0, %s100
      %s117 = sphi 0, %s101
      %s121 = sphi 0, %s121
      %s123 = sphi 0, %s121
      %s124 = sphi 0, %s123
      %s138 = sphi 0, %s124
      %s142 = sphi 0, %s142
      %s144 = sphi 0, %s142
      %s145 = sphi 0, %s144
      %s159 = sphi 0, %s145
      %s163 = sphi 0, %s163
      %s165 = sphi 0, %s163
      %s166 = sphi 0, %s165
      %s180 = sphi 0, %s166
      %s184 = sphi 0, %s184
      %s186 = sphi 0, %s184
      %s187 = sphi 0, %s186
      %s201 = sphi 0, %s187
      %s205 = sphi 0, %s205
      %s207 = sphi 0, %s205
      %s208 = sphi 0, %s207
      %s222 = sphi 0, %s208
      %s226 = sphi 0, %s226
      %s228 = sphi 0, %s226
      %s229 = sphi 0, %s228
      %s243 = sphi 0, %s229
      %s247 = sphi 0, %s247
      %s249 = sphi 0, %s247
      %s250 = sphi 0, %s249
      %s264 = sphi 0, %s250
      %s268 = sphi 0, %s268
      %s270 = sphi 0, %s268
      %s271 = sphi 0, %s270
      %s285 = sphi 0, %s271
      %s289 = sphi 0, %s289
      %s291 = sphi 0, %s289
      %s292 = sphi 0, %s291
      %s306 = sphi 0, %s292
      %s310 = sphi 0, %s310
      %s312 = sphi 0, %s310
      %s313 = sphi 0, %s312
      %s327 = sphi 0, %s313
      %s331 = sphi 0, %s331
      %s333 = sphi 0, %s331
      %s334 = sphi 0, %s333
      %s348 = sphi 0, %s334
      %s352 = sphi 0, %s352
      %s354 = sphi 0, %s352
      %s355 = sphi 0, %s354
      %s369 = sphi 0, %s355
      %s373 = sphi 0, %s373
      %s375 = sphi 0, %s373
      %s376 = sphi 0, %s375
      %s390 = sphi 0, %s376
      %s394 = sphi 0, %s394
      %s396 = sphi 0, %s394
      %s397 = sphi 0, %s396
      %s411 = sphi 0, %s397
      %s415 = sphi 0, %s415
      %s417 = sphi 0, %s415
      %s418 = sphi 0, %s417
      %s432 = sphi 0, %s418
      %s436 = sphi 0, %s436
      %s438 = sphi 0, %s436
      %s439 = sphi 0, %s438
      %s453 = sphi 0, %s439
      %s457 = sphi 0, %s457
      %s459 = sphi 0, %s457
      %s460 = sphi 0, %s459
      %s474 = sphi 0, %s460
      %s478 = sphi 0, %s478
      %s480 = sphi 0, %s478
      %s481 = sphi 0, %s480
      %s495 = sphi 0, %s481
      %s499 = sphi 0, %s499
      %s501 = sphi 0, %s499
      %s502 = sphi 0, %s501
      %s516 = sphi 0, %s502
    $region4: #{tpu_custom_call.1} parent=1 // loop_header_branch
      %31 = sbr.rel (%p29) target = $region8
    $region5: #{tpu_custom_call.1} parent=1 // loop_body
      %s33 = ssub.s32 %s28, 1
      %s34 = ssub.s32 %s28, 2
      %s41 = sadd.s32 1, %s36
      %p42 = scmp.ge.s32.totalorder %s41, 2
      %s43 = scalar_select %p42, 0, %s41
      %s44 = sadd.s32 1, %s35
      %s45 = scalar_select %p42, %s44, %s35
      %p46 = scmp.ge.s32.totalorder %s45, 3
      %s47 = scalar_select %p46, 0, %s45
      %s49 = sadd.s32 %s48, 1
      %p52 = scmp.eq.s32.totalorder %s28, 5
      %p53 = scmp.ne.s32.totalorder %s48, %s50
      %p54 = scmp.eq.s32.totalorder %s28, 0
      %p55 = por %p53, %p54
      %p56 = scmp.ne.s32.totalorder %s48, %s50
      %p57 = scmp.eq.s32.totalorder %s33, 5
      %p58 = por %p56, %p57
      %p59 = scmp.ne.s32.totalorder %s50, %s51
      %p60 = scmp.eq.s32.totalorder %s33, 0
      %p61 = por %p59, %p60
      %p62 = scmp.ne.s32.totalorder %s50, %s51
      %p63 = scmp.eq.s32.totalorder %s34, 5
      %p64 = por %p62, %p63
      %p66 = scmp.ne.s32.totalorder %s51, %s65
      %p67 = scmp.eq.s32.totalorder %s34, 0
      %p68 = por %p66, %p67
      %s69 = ssub.s32 %s36, %s43
      %p70 = scmp.eq.s32.totalorder %s69, 0
      %s72 = sadd.s32 %s71, 1
      %s73 = scalar_select %p70, %s71, %s72
      %p76 = pneg %p70
      %p77 = scmp.eq.s32.totalorder %s28, 5
      %p78 = por %p76, %p77
      %p79 = scmp.ne.s32.totalorder %s71, %s74
      %p80 = scmp.eq.s32.totalorder %s28, 0
      %p81 = por %p79, %p80
      %p82 = scmp.ne.s32.totalorder %s71, %s74
      %p83 = scmp.eq.s32.totalorder %s33, 5
      %p84 = por %p82, %p83
      %p85 = scmp.ne.s32.totalorder %s74, %s75
      %p86 = scmp.eq.s32.totalorder %s33, 0
      %p87 = por %p85, %p86
      %p88 = scmp.ne.s32.totalorder %s74, %s75
      %p89 = scmp.eq.s32.totalorder %s34, 5
      %p90 = por %p88, %p89
      %p92 = scmp.ne.s32.totalorder %s75, %s91
      %p93 = scmp.eq.s32.totalorder %s34, 0
      %p94 = por %p92, %p93
      %s95 = ssub.s32 %s36, %s43
      %p96 = scmp.eq.s32.totalorder %s95, 0
      %s98 = sadd.s32 %s97, 1
      %s99 = scalar_select %p96, %s97, %s98
      %p102 = pneg %p96
      %p103 = scmp.eq.s32.totalorder %s28, 5
      %p104 = por %p102, %p103
      %p105 = scmp.ne.s32.totalorder %s97, %s100
      %p106 = scmp.eq.s32.totalorder %s28, 0
      %p107 = por %p105, %p106
      %p108 = scmp.ne.s32.totalorder %s97, %s100
      %p109 = scmp.eq.s32.totalorder %s33, 5
      %p110 = por %p108, %p109
      %p111 = scmp.ne.s32.totalorder %s100, %s101
      %p112 = scmp.eq.s32.totalorder %s33, 0
      %p113 = por %p111, %p112
      %p114 = scmp.ne.s32.totalorder %s100, %s101
      %p115 = scmp.eq.s32.totalorder %s34, 5
      %p116 = por %p114, %p115
      %p118 = scmp.ne.s32.totalorder %s101, %s117
      %p119 = scmp.eq.s32.totalorder %s34, 0
      %p120 = por %p118, %p119
      %s122 = sadd.s32 %s121, 1
      %p125 = scmp.eq.s32.totalorder %s28, 5
      %p126 = scmp.ne.s32.totalorder %s121, %s123
      %p127 = scmp.eq.s32.totalorder %s28, 0
      %p128 = por %p126, %p127
      %p129 = scmp.ne.s32.totalorder %s121, %s123
      %p130 = scmp.eq.s32.totalorder %s33, 5
      %p131 = por %p129, %p130
      %p132 = scmp.ne.s32.totalorder %s123, %s124
      %p133 = scmp.eq.s32.totalorder %s33, 0
      %p134 = por %p132, %p133
      %p135 = scmp.ne.s32.totalorder %s123, %s124
      %p136 = scmp.eq.s32.totalorder %s34, 5
      %p137 = por %p135, %p136
      %p139 = scmp.ne.s32.totalorder %s124, %s138
      %p140 = scmp.eq.s32.totalorder %s34, 0
      %p141 = por %p139, %p140
      %s143 = sadd.s32 %s142, 1
      %p146 = scmp.eq.s32.totalorder %s28, 5
      %p147 = scmp.ne.s32.totalorder %s142, %s144
      %p148 = scmp.eq.s32.totalorder %s28, 0
      %p149 = por %p147, %p148
      %p150 = scmp.ne.s32.totalorder %s142, %s144
      %p151 = scmp.eq.s32.totalorder %s33, 5
      %p152 = por %p150, %p151
      %p153 = scmp.ne.s32.totalorder %s144, %s145
      %p154 = scmp.eq.s32.totalorder %s33, 0
      %p155 = por %p153, %p154
      %p156 = scmp.ne.s32.totalorder %s144, %s145
      %p157 = scmp.eq.s32.totalorder %s34, 5
      %p158 = por %p156, %p157
      %p160 = scmp.ne.s32.totalorder %s145, %s159
      %p161 = scmp.eq.s32.totalorder %s34, 0
      %p162 = por %p160, %p161
      %s164 = sadd.s32 %s163, 1
      %p167 = scmp.eq.s32.totalorder %s28, 5
      %p168 = scmp.ne.s32.totalorder %s163, %s165
      %p169 = scmp.eq.s32.totalorder %s28, 0
      %p170 = por %p168, %p169
      %p171 = scmp.ne.s32.totalorder %s163, %s165
      %p172 = scmp.eq.s32.totalorder %s33, 5
      %p173 = por %p171, %p172
      %p174 = scmp.ne.s32.totalorder %s165, %s166
      %p175 = scmp.eq.s32.totalorder %s33, 0
      %p176 = por %p174, %p175
      %p177 = scmp.ne.s32.totalorder %s165, %s166
      %p178 = scmp.eq.s32.totalorder %s34, 5
      %p179 = por %p177, %p178
      %p181 = scmp.ne.s32.totalorder %s166, %s180
      %p182 = scmp.eq.s32.totalorder %s34, 0
      %p183 = por %p181, %p182
      %s185 = sadd.s32 %s184, 1
      %p188 = scmp.eq.s32.totalorder %s28, 5
      %p189 = scmp.ne.s32.totalorder %s184, %s186
      %p190 = scmp.eq.s32.totalorder %s28, 0
      %p191 = por %p189, %p190
      %p192 = scmp.ne.s32.totalorder %s184, %s186
      %p193 = scmp.eq.s32.totalorder %s33, 5
      %p194 = por %p192, %p193
      %p195 = scmp.ne.s32.totalorder %s186, %s187
      %p196 = scmp.eq.s32.totalorder %s33, 0
      %p197 = por %p195, %p196
      %p198 = scmp.ne.s32.totalorder %s186, %s187
      %p199 = scmp.eq.s32.totalorder %s34, 5
      %p200 = por %p198, %p199
      %p202 = scmp.ne.s32.totalorder %s187, %s201
      %p203 = scmp.eq.s32.totalorder %s34, 0
      %p204 = por %p202, %p203
      %s206 = sadd.s32 %s205, 1
      %p209 = scmp.eq.s32.totalorder %s28, 5
      %p210 = scmp.ne.s32.totalorder %s205, %s207
      %p211 = scmp.eq.s32.totalorder %s28, 0
      %p212 = por %p210, %p211
      %p213 = scmp.ne.s32.totalorder %s205, %s207
      %p214 = scmp.eq.s32.totalorder %s33, 5
      %p215 = por %p213, %p214
      %p216 = scmp.ne.s32.totalorder %s207, %s208
      %p217 = scmp.eq.s32.totalorder %s33, 0
      %p218 = por %p216, %p217
      %p219 = scmp.ne.s32.totalorder %s207, %s208
      %p220 = scmp.eq.s32.totalorder %s34, 5
      %p221 = por %p219, %p220
      %p223 = scmp.ne.s32.totalorder %s208, %s222
      %p224 = scmp.eq.s32.totalorder %s34, 0
      %p225 = por %p223, %p224
      %s227 = sadd.s32 %s226, 1
      %p230 = scmp.eq.s32.totalorder %s28, 5
      %p231 = scmp.ne.s32.totalorder %s226, %s228
      %p232 = scmp.eq.s32.totalorder %s28, 0
      %p233 = por %p231, %p232
      %p234 = scmp.ne.s32.totalorder %s226, %s228
      %p235 = scmp.eq.s32.totalorder %s33, 5
      %p236 = por %p234, %p235
      %p237 = scmp.ne.s32.totalorder %s228, %s229
      %p238 = scmp.eq.s32.totalorder %s33, 0
      %p239 = por %p237, %p238
      %p240 = scmp.ne.s32.totalorder %s228, %s229
      %p241 = scmp.eq.s32.totalorder %s34, 5
      %p242 = por %p240, %p241
      %p244 = scmp.ne.s32.totalorder %s229, %s243
      %p245 = scmp.eq.s32.totalorder %s34, 0
      %p246 = por %p244, %p245
      %s248 = sadd.s32 %s247, 1
      %p251 = scmp.eq.s32.totalorder %s28, 5
      %p252 = scmp.ne.s32.totalorder %s247, %s249
      %p253 = scmp.eq.s32.totalorder %s28, 0
      %p254 = por %p252, %p253
      %p255 = scmp.ne.s32.totalorder %s247, %s249
      %p256 = scmp.eq.s32.totalorder %s33, 5
      %p257 = por %p255, %p256
      %p258 = scmp.ne.s32.totalorder %s249, %s250
      %p259 = scmp.eq.s32.totalorder %s33, 0
      %p260 = por %p258, %p259
      %p261 = scmp.ne.s32.totalorder %s249, %s250
      %p262 = scmp.eq.s32.totalorder %s34, 5
      %p263 = por %p261, %p262
      %p265 = scmp.ne.s32.totalorder %s250, %s264
      %p266 = scmp.eq.s32.totalorder %s34, 0
      %p267 = por %p265, %p266
      %s269 = sadd.s32 %s268, 1
      %p272 = scmp.eq.s32.totalorder %s28, 5
      %p273 = scmp.ne.s32.totalorder %s268, %s270
      %p274 = scmp.eq.s32.totalorder %s28, 0
      %p275 = por %p273, %p274
      %p276 = scmp.ne.s32.totalorder %s268, %s270
      %p277 = scmp.eq.s32.totalorder %s33, 5
      %p278 = por %p276, %p277
      %p279 = scmp.ne.s32.totalorder %s270, %s271
      %p280 = scmp.eq.s32.totalorder %s33, 0
      %p281 = por %p279, %p280
      %p282 = scmp.ne.s32.totalorder %s270, %s271
      %p283 = scmp.eq.s32.totalorder %s34, 5
      %p284 = por %p282, %p283
      %p286 = scmp.ne.s32.totalorder %s271, %s285
      %p287 = scmp.eq.s32.totalorder %s34, 0
      %p288 = por %p286, %p287
      %s290 = sadd.s32 %s289, 1
      %p293 = scmp.eq.s32.totalorder %s28, 5
      %p294 = scmp.ne.s32.totalorder %s289, %s291
      %p295 = scmp.eq.s32.totalorder %s28, 0
      %p296 = por %p294, %p295
      %p297 = scmp.ne.s32.totalorder %s289, %s291
      %p298 = scmp.eq.s32.totalorder %s33, 5
      %p299 = por %p297, %p298
      %p300 = scmp.ne.s32.totalorder %s291, %s292
      %p301 = scmp.eq.s32.totalorder %s33, 0
      %p302 = por %p300, %p301
      %p303 = scmp.ne.s32.totalorder %s291, %s292
      %p304 = scmp.eq.s32.totalorder %s34, 5
      %p305 = por %p303, %p304
      %p307 = scmp.ne.s32.totalorder %s292, %s306
      %p308 = scmp.eq.s32.totalorder %s34, 0
      %p309 = por %p307, %p308
      %s311 = sadd.s32 %s310, 1
      %p314 = scmp.eq.s32.totalorder %s28, 5
      %p315 = scmp.ne.s32.totalorder %s310, %s312
      %p316 = scmp.eq.s32.totalorder %s28, 0
      %p317 = por %p315, %p316
      %p318 = scmp.ne.s32.totalorder %s310, %s312
      %p319 = scmp.eq.s32.totalorder %s33, 5
      %p320 = por %p318, %p319
      %p321 = scmp.ne.s32.totalorder %s312, %s313
      %p322 = scmp.eq.s32.totalorder %s33, 0
      %p323 = por %p321, %p322
      %p324 = scmp.ne.s32.totalorder %s312, %s313
      %p325 = scmp.eq.s32.totalorder %s34, 5
      %p326 = por %p324, %p325
      %p328 = scmp.ne.s32.totalorder %s313, %s327
      %p329 = scmp.eq.s32.totalorder %s34, 0
      %p330 = por %p328, %p329
      %s332 = sadd.s32 %s331, 1
      %p335 = scmp.eq.s32.totalorder %s28, 5
      %p336 = scmp.ne.s32.totalorder %s331, %s333
      %p337 = scmp.eq.s32.totalorder %s28, 0
      %p338 = por %p336, %p337
      %p339 = scmp.ne.s32.totalorder %s331, %s333
      %p340 = scmp.eq.s32.totalorder %s33, 5
      %p341 = por %p339, %p340
      %p342 = scmp.ne.s32.totalorder %s333, %s334
      %p343 = scmp.eq.s32.totalorder %s33, 0
      %p344 = por %p342, %p343
      %p345 = scmp.ne.s32.totalorder %s333, %s334
      %p346 = scmp.eq.s32.totalorder %s34, 5
      %p347 = por %p345, %p346
      %p349 = scmp.ne.s32.totalorder %s334, %s348
      %p350 = scmp.eq.s32.totalorder %s34, 0
      %p351 = por %p349, %p350
      %s353 = sadd.s32 %s352, 1
      %p356 = scmp.eq.s32.totalorder %s28, 5
      %p357 = scmp.ne.s32.totalorder %s352, %s354
      %p358 = scmp.eq.s32.totalorder %s28, 0
      %p359 = por %p357, %p358
      %p360 = scmp.ne.s32.totalorder %s352, %s354
      %p361 = scmp.eq.s32.totalorder %s33, 5
      %p362 = por %p360, %p361
      %p363 = scmp.ne.s32.totalorder %s354, %s355
      %p364 = scmp.eq.s32.totalorder %s33, 0
      %p365 = por %p363, %p364
      %p366 = scmp.ne.s32.totalorder %s354, %s355
      %p367 = scmp.eq.s32.totalorder %s34, 5
      %p368 = por %p366, %p367
      %p370 = scmp.ne.s32.totalorder %s355, %s369
      %p371 = scmp.eq.s32.totalorder %s34, 0
      %p372 = por %p370, %p371
      %s374 = sadd.s32 %s373, 1
      %p377 = scmp.eq.s32.totalorder %s28, 5
      %p378 = scmp.ne.s32.totalorder %s373, %s375
      %p379 = scmp.eq.s32.totalorder %s28, 0
      %p380 = por %p378, %p379
      %p381 = scmp.ne.s32.totalorder %s373, %s375
      %p382 = scmp.eq.s32.totalorder %s33, 5
      %p383 = por %p381, %p382
      %p384 = scmp.ne.s32.totalorder %s375, %s376
      %p385 = scmp.eq.s32.totalorder %s33, 0
      %p386 = por %p384, %p385
      %p387 = scmp.ne.s32.totalorder %s375, %s376
      %p388 = scmp.eq.s32.totalorder %s34, 5
      %p389 = por %p387, %p388
      %p391 = scmp.ne.s32.totalorder %s376, %s390
      %p392 = scmp.eq.s32.totalorder %s34, 0
      %p393 = por %p391, %p392
      %s395 = sadd.s32 %s394, 1
      %p398 = scmp.eq.s32.totalorder %s28, 5
      %p399 = scmp.ne.s32.totalorder %s394, %s396
      %p400 = scmp.eq.s32.totalorder %s28, 0
      %p401 = por %p399, %p400
      %p402 = scmp.ne.s32.totalorder %s394, %s396
      %p403 = scmp.eq.s32.totalorder %s33, 5
      %p404 = por %p402, %p403
      %p405 = scmp.ne.s32.totalorder %s396, %s397
      %p406 = scmp.eq.s32.totalorder %s33, 0
      %p407 = por %p405, %p406
      %p408 = scmp.ne.s32.totalorder %s396, %s397
      %p409 = scmp.eq.s32.totalorder %s34, 5
      %p410 = por %p408, %p409
      %p412 = scmp.ne.s32.totalorder %s397, %s411
      %p413 = scmp.eq.s32.totalorder %s34, 0
      %p414 = por %p412, %p413
      %s416 = sadd.s32 %s415, 1
      %p419 = scmp.eq.s32.totalorder %s28, 5
      %p420 = scmp.ne.s32.totalorder %s415, %s417
      %p421 = scmp.eq.s32.totalorder %s28, 0
      %p422 = por %p420, %p421
      %p423 = scmp.ne.s32.totalorder %s415, %s417
      %p424 = scmp.eq.s32.totalorder %s33, 5
      %p425 = por %p423, %p424
      %p426 = scmp.ne.s32.totalorder %s417, %s418
      %p427 = scmp.eq.s32.totalorder %s33, 0
      %p428 = por %p426, %p427
      %p429 = scmp.ne.s32.totalorder %s417, %s418
      %p430 = scmp.eq.s32.totalorder %s34, 5
      %p431 = por %p429, %p430
      %p433 = scmp.ne.s32.totalorder %s418, %s432
      %p434 = scmp.eq.s32.totalorder %s34, 0
      %p435 = por %p433, %p434
      %s437 = sadd.s32 %s436, 1
      %p440 = scmp.eq.s32.totalorder %s28, 5
      %p441 = scmp.ne.s32.totalorder %s436, %s438
      %p442 = scmp.eq.s32.totalorder %s28, 0
      %p443 = por %p441, %p442
      %p444 = scmp.ne.s32.totalorder %s436, %s438
      %p445 = scmp.eq.s32.totalorder %s33, 5
      %p446 = por %p444, %p445
      %p447 = scmp.ne.s32.totalorder %s438, %s439
      %p448 = scmp.eq.s32.totalorder %s33, 0
      %p449 = por %p447, %p448
      %p450 = scmp.ne.s32.totalorder %s438, %s439
      %p451 = scmp.eq.s32.totalorder %s34, 5
      %p452 = por %p450, %p451
      %p454 = scmp.ne.s32.totalorder %s439, %s453
      %p455 = scmp.eq.s32.totalorder %s34, 0
      %p456 = por %p454, %p455
      %s458 = sadd.s32 %s457, 1
      %p461 = scmp.eq.s32.totalorder %s28, 5
      %p462 = scmp.ne.s32.totalorder %s457, %s459
      %p463 = scmp.eq.s32.totalorder %s28, 0
      %p464 = por %p462, %p463
      %p465 = scmp.ne.s32.totalorder %s457, %s459
      %p466 = scmp.eq.s32.totalorder %s33, 5
      %p467 = por %p465, %p466
      %p468 = scmp.ne.s32.totalorder %s459, %s460
      %p469 = scmp.eq.s32.totalorder %s33, 0
      %p470 = por %p468, %p469
      %p471 = scmp.ne.s32.totalorder %s459, %s460
      %p472 = scmp.eq.s32.totalorder %s34, 5
      %p473 = por %p471, %p472
      %p475 = scmp.ne.s32.totalorder %s460, %s474
      %p476 = scmp.eq.s32.totalorder %s34, 0
      %p477 = por %p475, %p476
      %s479 = sadd.s32 %s478, 1
      %p482 = scmp.eq.s32.totalorder %s28, 5
      %p483 = scmp.ne.s32.totalorder %s478, %s480
      %p484 = scmp.eq.s32.totalorder %s28, 0
      %p485 = por %p483, %p484
      %p486 = scmp.ne.s32.totalorder %s478, %s480
      %p487 = scmp.eq.s32.totalorder %s33, 5
      %p488 = por %p486, %p487
      %p489 = scmp.ne.s32.totalorder %s480, %s481
      %p490 = scmp.eq.s32.totalorder %s33, 0
      %p491 = por %p489, %p490
      %p492 = scmp.ne.s32.totalorder %s480, %s481
      %p493 = scmp.eq.s32.totalorder %s34, 5
      %p494 = por %p492, %p493
      %p496 = scmp.ne.s32.totalorder %s481, %s495
      %p497 = scmp.eq.s32.totalorder %s34, 0
      %p498 = por %p496, %p497
      %s500 = sadd.s32 %s499, 1
      %p503 = scmp.eq.s32.totalorder %s28, 5
      %p504 = scmp.ne.s32.totalorder %s499, %s501
      %p505 = scmp.eq.s32.totalorder %s28, 0
      %p506 = por %p504, %p505
      %p507 = scmp.ne.s32.totalorder %s499, %s501
      %p508 = scmp.eq.s32.totalorder %s33, 5
      %p509 = por %p507, %p508
      %p510 = scmp.ne.s32.totalorder %s501, %s502
      %p511 = scmp.eq.s32.totalorder %s33, 0
      %p512 = por %p510, %p511
      %p513 = scmp.ne.s32.totalorder %s501, %s502
      %p514 = scmp.eq.s32.totalorder %s34, 5
      %p515 = por %p513, %p514
      %p517 = scmp.ne.s32.totalorder %s502, %s516
      %p518 = scmp.eq.s32.totalorder %s34, 0
      %p519 = por %p517, %p518
      %p520 = scmp.le.s32.totalorder 1, %s28
      %p521 = scmp.lt.s32.totalorder %s28, 7
      %p522 = pnand %p520, %p521
      %p523 = pneg %p522
      // Predicated region
      $region9: #{tpu_custom_call.1} parent=5 // pred_check
        _
      $region10: #{tpu_custom_call.1} parent=5 // pred_check_branch
        %525 = sbr.rel (%p522) target = $region12
      $region11: #{tpu_custom_call.1} parent=5 // pred_region
        %s526 = ssub.s32 %s28, 1
        // Predicated region
        $region13: #{tpu_custom_call.1} parent=11 // pred_check
          %p527 = pneg %p61
        $region14: #{tpu_custom_call.1} parent=11 // pred_check_branch
          %529 = sbr.rel (%p527) target = $region16
        $region15: #{tpu_custom_call.1} parent=11 // pred_region
          _
        $region16: #{tpu_custom_call.1} parent=11 // pred_fallthru
          _
        // Predicated region
        $region17: #{tpu_custom_call.1} parent=11 // pred_check
          %p530 = pneg %p134
        $region18: #{tpu_custom_call.1} parent=11 // pred_check_branch
          %532 = sbr.rel (%p530) target = $region20
        $region19: #{tpu_custom_call.1} parent=11 // pred_region
          _
        $region20: #{tpu_custom_call.1} parent=11 // pred_fallthru
          _
        // Predicated region
        $region21: #{tpu_custom_call.1} parent=11 // pred_check
          %p533 = pneg %p155
        $region22: #{tpu_custom_call.1} parent=11 // pred_check_branch
          %535 = sbr.rel (%p533) target = $region24
        $region23: #{tpu_custom_call.1} parent=11 // pred_region
          _
        $region24: #{tpu_custom_call.1} parent=11 // pred_fallthru
          _
        // Predicated region
        $region25: #{tpu_custom_call.1} parent=11 // pred_check
          %p536 = pneg %p176
        $region26: #{tpu_custom_call.1} parent=11 // pred_check_branch
          %538 = sbr.rel (%p536) target = $region28
        $region27: #{tpu_custom_call.1} parent=11 // pred_region
          _
        $region28: #{tpu_custom_call.1} parent=11 // pred_fallthru
          _
        // Predicated region
        $region29: #{tpu_custom_call.1} parent=11 // pred_check
          %p539 = pneg %p197
        $region30: #{tpu_custom_call.1} parent=11 // pred_check_branch
          %541 = sbr.rel (%p539) target = $region32
        $region31: #{tpu_custom_call.1} parent=11 // pred_region
          _
        $region32: #{tpu_custom_call.1} parent=11 // pred_fallthru
          _
        // Predicated region
        $region33: #{tpu_custom_call.1} parent=11 // pred_check
          %p542 = pneg %p218
        $region34: #{tpu_custom_call.1} parent=11 // pred_check_branch
          %544 = sbr.rel (%p542) target = $region36
        $region35: #{tpu_custom_call.1} parent=11 // pred_region
          _
        $region36: #{tpu_custom_call.1} parent=11 // pred_fallthru
          _
        // Predicated region
        $region37: #{tpu_custom_call.1} parent=11 // pred_check
          %p545 = pneg %p239
        $region38: #{tpu_custom_call.1} parent=11 // pred_check_branch
          %547 = sbr.rel (%p545) target = $region40
        $region39: #{tpu_custom_call.1} parent=11 // pred_region
          _
        $region40: #{tpu_custom_call.1} parent=11 // pred_fallthru
          _
        // Predicated region
        $region41: #{tpu_custom_call.1} parent=11 // pred_check
          %p548 = pneg %p260
        $region42: #{tpu_custom_call.1} parent=11 // pred_check_branch
          %550 = sbr.rel (%p548) target = $region44
        $region43: #{tpu_custom_call.1} parent=11 // pred_region
          _
        $region44: #{tpu_custom_call.1} parent=11 // pred_fallthru
          _
        // Predicated region
        $region45: #{tpu_custom_call.1} parent=11 // pred_check
          %p551 = pneg %p281
        $region46: #{tpu_custom_call.1} parent=11 // pred_check_branch
          %553 = sbr.rel (%p551) target = $region48
        $region47: #{tpu_custom_call.1} parent=11 // pred_region
          _
        $region48: #{tpu_custom_call.1} parent=11 // pred_fallthru
          _
        // Predicated region
        $region49: #{tpu_custom_call.1} parent=11 // pred_check
          %p554 = pneg %p302
        $region50: #{tpu_custom_call.1} parent=11 // pred_check_branch
          %556 = sbr.rel (%p554) target = $region52
        $region51: #{tpu_custom_call.1} parent=11 // pred_region
          _
        $region52: #{tpu_custom_call.1} parent=11 // pred_fallthru
          _
        // Predicated region
        $region53: #{tpu_custom_call.1} parent=11 // pred_check
          %p557 = pneg %p323
        $region54: #{tpu_custom_call.1} parent=11 // pred_check_branch
          %559 = sbr.rel (%p557) target = $region56
        $region55: #{tpu_custom_call.1} parent=11 // pred_region
          _
        $region56: #{tpu_custom_call.1} parent=11 // pred_fallthru
          _
        // Predicated region
        $region57: #{tpu_custom_call.1} parent=11 // pred_check
          %p560 = pneg %p344
        $region58: #{tpu_custom_call.1} parent=11 // pred_check_branch
          %562 = sbr.rel (%p560) target = $region60
        $region59: #{tpu_custom_call.1} parent=11 // pred_region
          _
        $region60: #{tpu_custom_call.1} parent=11 // pred_fallthru
          _
        // Predicated region
        $region61: #{tpu_custom_call.1} parent=11 // pred_check
          %p563 = pneg %p365
        $region62: #{tpu_custom_call.1} parent=11 // pred_check_branch
          %565 = sbr.rel (%p563) target = $region64
        $region63: #{tpu_custom_call.1} parent=11 // pred_region
          _
        $region64: #{tpu_custom_call.1} parent=11 // pred_fallthru
          _
        // Predicated region
        $region65: #{tpu_custom_call.1} parent=11 // pred_check
          %p566 = pneg %p386
        $region66: #{tpu_custom_call.1} parent=11 // pred_check_branch
          %568 = sbr.rel (%p566) target = $region68
        $region67: #{tpu_custom_call.1} parent=11 // pred_region
          _
        $region68: #{tpu_custom_call.1} parent=11 // pred_fallthru
          _
        // Predicated region
        $region69: #{tpu_custom_call.1} parent=11 // pred_check
          %p569 = pneg %p407
        $region70: #{tpu_custom_call.1} parent=11 // pred_check_branch
          %571 = sbr.rel (%p569) target = $region72
        $region71: #{tpu_custom_call.1} parent=11 // pred_region
          _
        $region72: #{tpu_custom_call.1} parent=11 // pred_fallthru
          _
        // Predicated region
        $region73: #{tpu_custom_call.1} parent=11 // pred_check
          %p572 = pneg %p428
        $region74: #{tpu_custom_call.1} parent=11 // pred_check_branch
          %574 = sbr.rel (%p572) target = $region76
        $region75: #{tpu_custom_call.1} parent=11 // pred_region
          _
        $region76: #{tpu_custom_call.1} parent=11 // pred_fallthru
          _
        // Predicated region
        $region77: #{tpu_custom_call.1} parent=11 // pred_check
          %p575 = pneg %p449
        $region78: #{tpu_custom_call.1} parent=11 // pred_check_branch
          %577 = sbr.rel (%p575) target = $region80
        $region79: #{tpu_custom_call.1} parent=11 // pred_region
          _
        $region80: #{tpu_custom_call.1} parent=11 // pred_fallthru
          _
        // Predicated region
        $region81: #{tpu_custom_call.1} parent=11 // pred_check
          %p578 = pneg %p470
        $region82: #{tpu_custom_call.1} parent=11 // pred_check_branch
          %580 = sbr.rel (%p578) target = $region84
        $region83: #{tpu_custom_call.1} parent=11 // pred_region
          _
        $region84: #{tpu_custom_call.1} parent=11 // pred_fallthru
          _
        // Predicated region
        $region85: #{tpu_custom_call.1} parent=11 // pred_check
          %p581 = pneg %p491
        $region86: #{tpu_custom_call.1} parent=11 // pred_check_branch
          %583 = sbr.rel (%p581) target = $region88
        $region87: #{tpu_custom_call.1} parent=11 // pred_region
          _
        $region88: #{tpu_custom_call.1} parent=11 // pred_fallthru
          _
      $region12: #{tpu_custom_call.1} parent=5 // pred_fallthru
        _
      %p584 = scmp.lt.s32.totalorder %s28, 6
      // Predicated region
      $region89: #{tpu_custom_call.1} parent=5 // pred_check
        %p585 = pneg %p584
      $region90: #{tpu_custom_call.1} parent=5 // pred_check_branch
        %587 = sbr.rel (%p585) target = $region92
      $region91: #{tpu_custom_call.1} parent=5 // pred_region
        // Predicated region
        $region93: #{tpu_custom_call.1} parent=91 // pred_check
          %p588 = pneg %p81
        $region94: #{tpu_custom_call.1} parent=91 // pred_check_branch
          %590 = sbr.rel (%p588) target = $region96
        $region95: #{tpu_custom_call.1} parent=91 // pred_region
          %p591 = scmp.lt.s32.totalorder %s36, 1
          %s592 = scalar_select %p591, %s36, 1
          %s593 = smul.addr %s592, 2
          %s594 = smul.addr %s593, 8
          %s595 = scalar_lea.vmem %s1, %s594
        $region96: #{tpu_custom_call.1} parent=91 // pred_fallthru
          _
        // Predicated region
        $region97: #{tpu_custom_call.1} parent=91 // pred_check
          %p596 = pneg %p107
        $region98: #{tpu_custom_call.1} parent=91 // pred_check_branch
          %598 = sbr.rel (%p596) target = $region100
        $region99: #{tpu_custom_call.1} parent=91 // pred_region
          %p599 = scmp.lt.s32.totalorder %s36, 1
          %s600 = scalar_select %p599, %s36, 1
          %s601 = scalar_lea.vmem %s2, %s600
        $region100: #{tpu_custom_call.1} parent=91 // pred_fallthru
          _
      $region92: #{tpu_custom_call.1} parent=5 // pred_fallthru
        _
      %p602 = scmp.le.s32.totalorder 1, %s28
      %p603 = scmp.lt.s32.totalorder %s28, 7
      %p604 = pnand %p602, %p603
      %p605 = pneg %p604
      // Predicated region
      $region101: #{tpu_custom_call.1} parent=5 // pred_check
        _
      $region102: #{tpu_custom_call.1} parent=5 // pred_check_branch
        %607 = sbr.rel (%p604) target = $region104
      $region103: #{tpu_custom_call.1} parent=5 // pred_region
        %s608 = ssub.s32 %s28, 1
        %p609 = pneg %p61
        %p610 = pneg %p58
        %p611 = scmp.lt.s32.totalorder %s38, 1
        %s612 = scalar_select %p611, %s38, 1
        %s613 = smul.addr %s612, 2
        %s614 = smul.addr %s613, 8
        %s615 = scalar_lea.vmem %s1, %s614
        %p616 = pneg %p87
        %p617 = pneg %p84
        %p618 = scmp.lt.s32.totalorder %s38, 1
        %s619 = scalar_select %p618, %s38, 1
        %s620 = scalar_lea.vmem %s2, %s619
        %p621 = pneg %p113
        %p622 = pneg %p110
        %p623 = pneg %p134
        %p624 = pneg %p131
        %p625 = pneg %p155
        %p626 = pneg %p152
        %p627 = pneg %p176
        %p628 = pneg %p173
        %p629 = pneg %p197
        %p630 = pneg %p194
        %p631 = pneg %p218
        %p632 = pneg %p215
        %p633 = pneg %p239
        %p634 = pneg %p236
        %p635 = pneg %p260
        %p636 = pneg %p257
        %p637 = pneg %p281
        %p638 = pneg %p278
        %p639 = pneg %p302
        %p640 = pneg %p299
        %p641 = pneg %p323
        %p642 = pneg %p320
        %p643 = pneg %p344
        %p644 = pneg %p341
        %p645 = pneg %p365
        %p646 = pneg %p362
        %p647 = pneg %p386
        %p648 = pneg %p383
        %p649 = pneg %p407
        %p650 = pneg %p404
        %p651 = pneg %p428
        %p652 = pneg %p425
        %p653 = pneg %p449
        %p654 = pneg %p446
        %p655 = pneg %p470
        %p656 = pneg %p467
        %p657 = pneg %p491
        %p658 = pneg %p488
        %p659 = pneg %p512
        %p660 = pneg %p509
        %p661 = scmp.lt.s32.totalorder %s38, 1
        %s662 = scalar_select %p661, %s38, 1
        %s663 = smul.addr %s662, 2
        %s664 = smul.addr %s663, 8
        %s665 = scalar_lea.vmem %s1, %s664
        %p666 = scmp.lt.s32.totalorder %s38, 1
        %s667 = scalar_select %p666, %s38, 1
        %s668 = scalar_lea.vmem %s2, %s667
        %p669 = scmp.eq.s32.totalorder %s37, 0
        %p670 = scmp.eq.s32.totalorder %s38, 0
        %p671 = pnand %p669, %p670
        %p672 = pneg %p671
        // Predicated region
        $region105: #{tpu_custom_call.1} parent=103 // pred_check
          _
        $region106: #{tpu_custom_call.1} parent=103 // pred_check_branch
          %674 = sbr.rel (%p671) target = $region108
        $region107: #{tpu_custom_call.1} parent=103 // pred_region
          %v675 = vld [vmem:[%s0] sm:$0xff]
          %v676 = vld [vmem:[%s0 + $0x8] sm:$0xff]
          %v677 = vld [vmem:[%s0 + $0x10] sm:$0xff]
          %v678 = vld [vmem:[%s0 + $0x18] sm:$0xff]
          %v679 = vld [vmem:[%s0 + $0x20] sm:$0xff]
          %v680 = vld [vmem:[%s0 + $0x28] sm:$0xff]
          %v681 = vld [vmem:[%s0 + $0x30] sm:$0xff]
          %v682 = vld [vmem:[%s0 + $0x38] sm:$0xff]
          %v683 = vld [vmem:[%s0 + $0x40] sm:$0xff]
          %v684 = vld [vmem:[%s0 + $0x48] sm:$0xff]
          %v685 = vld [vmem:[%s0 + $0x50] sm:$0xff]
          %v686 = vld [vmem:[%s0 + $0x58] sm:$0xff]
          %v687 = vld [vmem:[%s0 + $0x60] sm:$0xff]
          %v688 = vld [vmem:[%s0 + $0x68] sm:$0xff]
          %v689 = vld [vmem:[%s0 + $0x70] sm:$0xff]
          %v690 = vld [vmem:[%s0 + $0x78] sm:$0xff]
          %vm691 = vcmask 261120
          %692 = vst.msk [vmem:[#allocation2] sm:$0xff] %vm691, %v675
          %693 = vst.msk [vmem:[#allocation2 + $0x8] sm:$0xff] %vm691, %v676
          %694 = vst.msk [vmem:[#allocation2 + $0x10] sm:$0xff] %vm691, %v677
          %695 = vst.msk [vmem:[#allocation2 + $0x18] sm:$0xff] %vm691, %v678
          %696 = vst.msk [vmem:[#allocation2 + $0x20] sm:$0xff] %vm691, %v679
          %697 = vst.msk [vmem:[#allocation2 + $0x28] sm:$0xff] %vm691, %v680
          %698 = vst.msk [vmem:[#allocation2 + $0x30] sm:$0xff] %vm691, %v681
          %699 = vst.msk [vmem:[#allocation2 + $0x38] sm:$0xff] %vm691, %v682
          %700 = vst.msk [vmem:[#allocation2 + $0x40] sm:$0xff] %vm691, %v683
          %701 = vst.msk [vmem:[#allocation2 + $0x48] sm:$0xff] %vm691, %v684
          %702 = vst.msk [vmem:[#allocation2 + $0x50] sm:$0xff] %vm691, %v685
          %703 = vst.msk [vmem:[#allocation2 + $0x58] sm:$0xff] %vm691, %v686
          %704 = vst.msk [vmem:[#allocation2 + $0x60] sm:$0xff] %vm691, %v687
          %705 = vst.msk [vmem:[#allocation2 + $0x68] sm:$0xff] %vm691, %v688
          %706 = vst.msk [vmem:[#allocation2 + $0x70] sm:$0xff] %vm691, %v689
          %707 = vst.msk [vmem:[#allocation2 + $0x78] sm:$0xff] %vm691, %v690
        $region108: #{tpu_custom_call.1} parent=103 // pred_fallthru
          _
        // Predicated region
        $region109: #{tpu_custom_call.1} parent=103 // pred_check
          %p708 = pneg %p670
        $region110: #{tpu_custom_call.1} parent=103 // pred_check_branch
          %710 = sbr.rel (%p708) target = $region112
        $region111: #{tpu_custom_call.1} parent=103 // pred_region
          %vm711 = vcmask 261120
          %712 = vst.msk [vmem:[#allocation3] sm:$0xff] %vm711, 0.0
          %713 = vst.msk [vmem:[#allocation3 + $0x8] sm:$0xff] %vm711, 0.0
          %714 = vst.msk [vmem:[#allocation3 + $0x10] sm:$0xff] %vm711, 0.0
          %715 = vst.msk [vmem:[#allocation3 + $0x18] sm:$0xff] %vm711, 0.0
          %716 = vst.msk [vmem:[#allocation3 + $0x20] sm:$0xff] %vm711, 0.0
          %717 = vst.msk [vmem:[#allocation3 + $0x28] sm:$0xff] %vm711, 0.0
          %718 = vst.msk [vmem:[#allocation3 + $0x30] sm:$0xff] %vm711, 0.0
          %719 = vst.msk [vmem:[#allocation3 + $0x38] sm:$0xff] %vm711, 0.0
          %720 = vst.msk [vmem:[#allocation3 + $0x40] sm:$0xff] %vm711, 0.0
          %721 = vst.msk [vmem:[#allocation3 + $0x48] sm:$0xff] %vm711, 0.0
          %722 = vst.msk [vmem:[#allocation3 + $0x50] sm:$0xff] %vm711, 0.0
          %723 = vst.msk [vmem:[#allocation3 + $0x58] sm:$0xff] %vm711, 0.0
          %724 = vst.msk [vmem:[#allocation3 + $0x60] sm:$0xff] %vm711, 0.0
          %725 = vst.msk [vmem:[#allocation3 + $0x68] sm:$0xff] %vm711, 0.0
          %726 = vst.msk [vmem:[#allocation3 + $0x70] sm:$0xff] %vm711, 0.0
          %727 = vst.msk [vmem:[#allocation3 + $0x78] sm:$0xff] %vm711, 0.0
        $region112: #{tpu_custom_call.1} parent=103 // pred_fallthru
          _
        %v728 = vld [vmem:[#allocation2] sm:$0xff]
        %v729 = vld [vmem:[#allocation2 + $0x8] sm:$0xff]
        %v730 = vld [vmem:[#allocation2 + $0x10] sm:$0xff]
        %v731 = vld [vmem:[#allocation2 + $0x18] sm:$0xff]
        %v732 = vld [vmem:[#allocation2 + $0x20] sm:$0xff]
        %v733 = vld [vmem:[#allocation2 + $0x28] sm:$0xff]
        %v734 = vld [vmem:[#allocation2 + $0x30] sm:$0xff]
        %v735 = vld [vmem:[#allocation2 + $0x38] sm:$0xff]
        %v736 = vld [vmem:[#allocation2 + $0x40] sm:$0xff]
        %v737 = vld [vmem:[#allocation2 + $0x48] sm:$0xff]
        %v738 = vld [vmem:[#allocation2 + $0x50] sm:$0xff]
        %v739 = vld [vmem:[#allocation2 + $0x58] sm:$0xff]
        %v740 = vld [vmem:[#allocation2 + $0x60] sm:$0xff]
        %v741 = vld [vmem:[#allocation2 + $0x68] sm:$0xff]
        %v742 = vld [vmem:[#allocation2 + $0x70] sm:$0xff]
        %v743 = vld [vmem:[#allocation2 + $0x78] sm:$0xff]
        %v744 = vld [vmem:[%s665] sm:$0xff]
        %v745 = vld [vmem:[%s665 + $0x8] sm:$0xff]
        %v746 = vlaneseq
        %v747 = vand.u32 %v746, 127
        %748 = vset.pattern.permute.xlu0 0
        %749 = vperm.xlu0 %748, %v744
        %v750 = vpop.permute.xlu0 %749
        %751 = vset.pattern.permute.xlu0 0
        %752 = vperm.xlu0 %751, %v745
        %v753 = vpop.permute.xlu0 %752
        %vm754 = vcmp.eq.s32.totalorder %v747, %v750
        %vm755 = vcmp.eq.s32.totalorder %v747, %v753
        %v756 = vsel %vm754, 1, 0
        %v757 = vsel %vm755, 1, 0
        %v758 = vcvt.s32.f32 %v756
        %v759 = vcvt.s32.f32 %v757
        %760 = vmatprep.subr.mxu0 0.0
        %761 = vmatpush1.msra.mxu0 %v743
        %762 = vmatprep.subr.mxu0 0.0
        %763 = vmatpush1.msra.mxu0 %v742
        %764 = vmatprep.subr.mxu0 0.0
        %765 = vmatpush1.msra.mxu0 %v741
        %766 = vmatprep.subr.mxu0 0.0
        %767 = vmatpush1.msra.mxu0 %v740
        %768 = vmatprep.subr.mxu0 0.0
        %769 = vmatpush1.msra.mxu0 %v739
        %770 = vmatprep.subr.mxu0 0.0
        %771 = vmatpush1.msra.mxu0 %v738
        %772 = vmatprep.subr.mxu0 0.0
        %773 = vmatpush1.msra.mxu0 %v737
        %774 = vmatprep.subr.mxu0 0.0
        %775 = vmatpush1.msra.mxu0 %v736
        %776 = vmatprep.subr.mxu0 0.0
        %777 = vmatpush1.msra.mxu0 %v735
        %778 = vmatprep.subr.mxu0 0.0
        %779 = vmatpush1.msra.mxu0 %v734
        %780 = vmatprep.subr.mxu0 0.0
        %781 = vmatpush1.msra.mxu0 %v733
        %782 = vmatprep.subr.mxu0 0.0
        %783 = vmatpush1.msra.mxu0 %v732
        %784 = vmatprep.subr.mxu0 0.0
        %785 = vmatpush1.msra.mxu0 %v731
        %786 = vmatprep.subr.mxu0 0.0
        %787 = vmatpush1.msra.mxu0 %v730
        %788 = vmatprep.subr.mxu0 0.0
        %789 = vmatpush1.msra.mxu0 %v729
        %790 = vmatprep.subr.mxu0 0.0
        %791 = vmatpush1.msra.mxu0 %v728
        %792 = vmatprep.subr.mxu0 0.0
        %793 = vmatpush2.msra.mxu0 0.0
        %794 = vmatprep.subr.mxu0 0.0
        %795 = vmatpush2.msra.mxu0 0.0
        %796 = vmatprep.subr.mxu0 0.0
        %797 = vmatpush2.msra.mxu0 0.0
        %798 = vmatprep.subr.mxu0 0.0
        %799 = vmatpush2.msra.mxu0 0.0
        %800 = vmatprep.subr.mxu0 0.0
        %801 = vmatpush2.msra.mxu0 0.0
        %802 = vmatprep.subr.mxu0 0.0
        %803 = vmatpush2.msra.mxu0 0.0
        %804 = vmatprep.subr.mxu0 0.0
        %805 = vmatpush2.msra.mxu0 0.0
        %806 = vmatprep.subr.mxu0 0.0
        %807 = vmatpush2.msra.mxu0 0.0
        %808 = vmatprep.subr.mxu0 0.0
        %809 = vmatpush2.msra.mxu0 0.0
        %810 = vmatprep.subr.mxu0 0.0
        %811 = vmatpush2.msra.mxu0 0.0
        %812 = vmatprep.subr.mxu0 0.0
        %813 = vmatpush2.msra.mxu0 0.0
        %814 = vmatprep.subr.mxu0 0.0
        %815 = vmatpush2.msra.mxu0 0.0
        %816 = vmatprep.subr.mxu0 0.0
        %817 = vmatpush2.msra.mxu0 0.0
        %818 = vmatprep.subr.mxu0 0.0
        %819 = vmatpush2.msra.mxu0 0.0
        %820 = vmatprep.subr.mxu0 0.0
        %821 = vmatpush2.msra.mxu0 0.0
        %822 = vmatprep.subr.mxu0 0.0
        %823 = vmatpush2.msra.mxu0 0.0
        %824 = vmatprep.mubr.f32.mxu0 0.0
        %825 = vmatmul.mubr.f32.gmra.mxu0 %v758
        %v826 = vpop.f32.mrf.mxu0
        %v827 = vadd.f32 0.0, %v826
        %v828 = vpop.f32.mrf.mxu0
        %829 = vmatprep.mubr.f32.mxu0 0.0
        %830 = vmatmul.mubr.f32.gmra.mxu0 %v759
        %v831 = vpop.f32.mrf.mxu0
        %v832 = vadd.f32 0.0, %v831
        %v833 = vpop.f32.mrf.mxu0
        %834 = vdwg.mxu0
        %v835 = vsub.f32 %v827, %v832
        %v836 = vmul.f32 %v835, %v835
        %vm837 = vcmask 23552
        %v838 = vsel %vm837, %v836, 0.0
        %839 = vadd.xlane.f32.xlu0 %v838
        %v840 = vpop.xlane.xlu0 %839
        %842 = vrot.lane.b32.xlu0 %v827, 32
        %v843 = vpop.permute.xlu0 %842
        %vm845 = vcmask 261120
        %v846 = vsel %vm845, %v832, %v843
        %s847 = smul.u32 %s37, 64
        %s848 = scalar_lea.vmem %s4, %s847
        %v849 = vld [vmem:[%s848] sm:$0xff]
        %v850 = vld [vmem:[%s848 + $0x8] sm:$0xff]
        %v851 = vld [vmem:[%s848 + $0x10] sm:$0xff]
        %v852 = vld [vmem:[%s848 + $0x18] sm:$0xff]
        %v853 = vld [vmem:[%s848 + $0x20] sm:$0xff]
        %v854 = vld [vmem:[%s848 + $0x28] sm:$0xff]
        %v855 = vld [vmem:[%s848 + $0x30] sm:$0xff]
        %v856 = vld [vmem:[%s848 + $0x38] sm:$0xff]
        %s857 = scalar_lea.vmem %s5, %s37
        %v858 = vld [vmem:[%s857] sm:$0x1]
        %v860 = vlaneseq
        %v861 = vshrl.u32 %v860, 7
        %v862 = vsub.s32 0, %v861
        %v863 = vrot.slane %v858, %v862
        %v865 = vmul.f32 %v840, %v863
        %vm866 = vcmask 523264
        %v868 = vsel %vm866, %v846, 0
        %870 = vmatprep.subr.mxu0 0.0
        %871 = vmatpush1.msra.mxu0 0.0
        %872 = vmatprep.subr.mxu0 0.0
        %873 = vmatpush1.msra.mxu0 0.0
        %874 = vmatprep.subr.mxu0 0.0
        %875 = vmatpush1.msra.mxu0 0.0
        %876 = vmatprep.subr.mxu0 0.0
        %877 = vmatpush1.msra.mxu0 0.0
        %878 = vmatprep.subr.mxu0 0.0
        %879 = vmatpush1.msra.mxu0 0.0
        %880 = vmatprep.subr.mxu0 0.0
        %881 = vmatpush1.msra.mxu0 0.0
        %882 = vmatprep.subr.mxu0 0.0
        %883 = vmatpush1.msra.mxu0 0.0
        %884 = vmatprep.subr.mxu0 0.0
        %885 = vmatpush1.msra.mxu0 0.0
        %886 = vmatprep.subr.mxu0 0.0
        %887 = vmatpush1.msra.mxu0 %v856
        %888 = vmatprep.subr.mxu0 0.0
        %889 = vmatpush1.msra.mxu0 %v855
        %890 = vmatprep.subr.mxu0 0.0
        %891 = vmatpush1.msra.mxu0 %v854
        %892 = vmatprep.subr.mxu0 0.0
        %893 = vmatpush1.msra.mxu0 %v853
        %894 = vmatprep.subr.mxu0 0.0
        %895 = vmatpush1.msra.mxu0 %v852
        %896 = vmatprep.subr.mxu0 0.0
        %897 = vmatpush1.msra.mxu0 %v851
        %898 = vmatprep.subr.mxu0 0.0
        %899 = vmatpush1.msra.mxu0 %v850
        %900 = vmatprep.subr.mxu0 0.0
        %901 = vmatpush1.msra.mxu0 %v849
        %902 = vmatprep.subr.mxu0 0.0
        %903 = vmatpush2.msra.mxu0 0.0
        %904 = vmatprep.subr.mxu0 0.0
        %905 = vmatpush2.msra.mxu0 0.0
        %906 = vmatprep.subr.mxu0 0.0
        %907 = vmatpush2.msra.mxu0 0.0
        %908 = vmatprep.subr.mxu0 0.0
        %909 = vmatpush2.msra.mxu0 0.0
        %910 = vmatprep.subr.mxu0 0.0
        %911 = vmatpush2.msra.mxu0 0.0
        %912 = vmatprep.subr.mxu0 0.0
        %913 = vmatpush2.msra.mxu0 0.0
        %914 = vmatprep.subr.mxu0 0.0
        %915 = vmatpush2.msra.mxu0 0.0
        %916 = vmatprep.subr.mxu0 0.0
        %917 = vmatpush2.msra.mxu0 0.0
        %918 = vmatprep.subr.mxu0 0.0
        %919 = vmatpush2.msra.mxu0 0.0
        %920 = vmatprep.subr.mxu0 0.0
        %921 = vmatpush2.msra.mxu0 0.0
        %922 = vmatprep.subr.mxu0 0.0
        %923 = vmatpush2.msra.mxu0 0.0
        %924 = vmatprep.subr.mxu0 0.0
        %925 = vmatpush2.msra.mxu0 0.0
        %926 = vmatprep.subr.mxu0 0.0
        %927 = vmatpush2.msra.mxu0 0.0
        %928 = vmatprep.subr.mxu0 0.0
        %929 = vmatpush2.msra.mxu0 0.0
        %930 = vmatprep.subr.mxu0 0.0
        %931 = vmatpush2.msra.mxu0 0.0
        %932 = vmatprep.subr.mxu0 0.0
        %933 = vmatpush2.msra.mxu0 0.0
        %934 = vmatprep.mubr.f32.mxu0 0.0
        %935 = vmatmul.mubr.f32.gmra.mxu0 %v868
        %v936 = vpop.f32.mrf.mxu0
        %v937 = vadd.f32 %v865, %v936
        %v938 = vpop.f32.mrf.mxu0
        %939 = vdwg.mxu0
        %s940 = scalar_lea.vmem %s6, %s37
        %v941 = vld [vmem:[%s940] sm:$0x1]
        %v943 = vlaneseq
        %v944 = vshrl.u32 %v943, 7
        %v945 = vsub.s32 0, %v944
        %v946 = vrot.slane %v941, %v945
        %v948 = vadd.f32 %v937, %v946
        %v949 = vmul.f32 %v948, 0.5
        %v950 = vtanh.pop %v949
        %v951 = vadd.f32 %v950, 1.0
        %v952 = vmul.f32 %v951, 0.5
        %v953 = vmul.f32 %v948, %v952
        %s954 = smul.u32 %s37, 96
        %s955 = scalar_lea.vmem %s7, %s954
        %v956 = vld [vmem:[%s955] sm:$0xff]
        %v957 = vld [vmem:[%s955 + $0x8] sm:$0xff]
        %v958 = vld [vmem:[%s955 + $0x10] sm:$0xff]
        %v959 = vld [vmem:[%s955 + $0x18] sm:$0xff]
        %v960 = vld [vmem:[%s955 + $0x20] sm:$0xff]
        %v961 = vld [vmem:[%s955 + $0x28] sm:$0xff]
        %v962 = vld [vmem:[%s955 + $0x30] sm:$0xff]
        %v963 = vld [vmem:[%s955 + $0x38] sm:$0xff]
        %v964 = vld [vmem:[%s955 + $0x40] sm:$0xff]
        %v965 = vld [vmem:[%s955 + $0x48] sm:$0xff]
        %v966 = vld [vmem:[%s955 + $0x50] sm:$0xff]
        %v967 = vld [vmem:[%s955 + $0x58] sm:$0x3f]
        %s968 = scalar_lea.vmem %s8, %s37
        %v969 = vld [vmem:[%s968] sm:$0x1]
        %v971 = vlaneseq
        %v972 = vshrl.u32 %v971, 7
        %v973 = vsub.s32 0, %v972
        %v974 = vrot.slane %v969, %v973
        %vm976 = vcmask 769024
        %v978 = vsel %vm976, %v953, 0
        %vm980 = vcmask 1045504
        %v982 = vsel %vm980, %v967, 0
        %984 = vmatprep.subr.mxu0 0.0
        %985 = vmatpush1.msra.mxu0 0.0
        %986 = vmatprep.subr.mxu0 0.0
        %987 = vmatpush1.msra.mxu0 0.0
        %988 = vmatprep.subr.mxu0 0.0
        %989 = vmatpush1.msra.mxu0 0.0
        %990 = vmatprep.subr.mxu0 0.0
        %991 = vmatpush1.msra.mxu0 0.0
        %992 = vmatprep.subr.mxu0 0.0
        %993 = vmatpush1.msra.mxu0 %v982
        %994 = vmatprep.subr.mxu0 0.0
        %995 = vmatpush1.msra.mxu0 %v966
        %996 = vmatprep.subr.mxu0 0.0
        %997 = vmatpush1.msra.mxu0 %v965
        %998 = vmatprep.subr.mxu0 0.0
        %999 = vmatpush1.msra.mxu0 %v964
        %1000 = vmatprep.subr.mxu0 0.0
        %1001 = vmatpush1.msra.mxu0 %v963
        %1002 = vmatprep.subr.mxu0 0.0
        %1003 = vmatpush1.msra.mxu0 %v962
        %1004 = vmatprep.subr.mxu0 0.0
        %1005 = vmatpush1.msra.mxu0 %v961
        %1006 = vmatprep.subr.mxu0 0.0
        %1007 = vmatpush1.msra.mxu0 %v960
        %1008 = vmatprep.subr.mxu0 0.0
        %1009 = vmatpush1.msra.mxu0 %v959
        %1010 = vmatprep.subr.mxu0 0.0
        %1011 = vmatpush1.msra.mxu0 %v958
        %1012 = vmatprep.subr.mxu0 0.0
        %1013 = vmatpush1.msra.mxu0 %v957
        %1014 = vmatprep.subr.mxu0 0.0
        %1015 = vmatpush1.msra.mxu0 %v956
        %1016 = vmatprep.subr.mxu0 0.0
        %1017 = vmatpush2.msra.mxu0 0.0
        %1018 = vmatprep.subr.mxu0 0.0
        %1019 = vmatpush2.msra.mxu0 0.0
        %1020 = vmatprep.subr.mxu0 0.0
        %1021 = vmatpush2.msra.mxu0 0.0
        %1022 = vmatprep.subr.mxu0 0.0
        %1023 = vmatpush2.msra.mxu0 0.0
        %1024 = vmatprep.subr.mxu0 0.0
        %1025 = vmatpush2.msra.mxu0 0.0
        %1026 = vmatprep.subr.mxu0 0.0
        %1027 = vmatpush2.msra.mxu0 0.0
        %1028 = vmatprep.subr.mxu0 0.0
        %1029 = vmatpush2.msra.mxu0 0.0
        %1030 = vmatprep.subr.mxu0 0.0
        %1031 = vmatpush2.msra.mxu0 0.0
        %1032 = vmatprep.subr.mxu0 0.0
        %1033 = vmatpush2.msra.mxu0 0.0
        %1034 = vmatprep.subr.mxu0 0.0
        %1035 = vmatpush2.msra.mxu0 0.0
        %1036 = vmatprep.subr.mxu0 0.0
        %1037 = vmatpush2.msra.mxu0 0.0
        %1038 = vmatprep.subr.mxu0 0.0
        %1039 = vmatpush2.msra.mxu0 0.0
        %1040 = vmatprep.subr.mxu0 0.0
        %1041 = vmatpush2.msra.mxu0 0.0
        %1042 = vmatprep.subr.mxu0 0.0
        %1043 = vmatpush2.msra.mxu0 0.0
        %1044 = vmatprep.subr.mxu0 0.0
        %1045 = vmatpush2.msra.mxu0 0.0
        %1046 = vmatprep.subr.mxu0 0.0
        %1047 = vmatpush2.msra.mxu0 0.0
        %1048 = vmatprep.mubr.f32.mxu0 0.0
        %1049 = vmatmul.mubr.f32.gmra.mxu0 %v978
        %v1050 = vpop.f32.mrf.mxu0
        %v1051 = vadd.f32 %v974, %v1050
        %v1052 = vpop.f32.mrf.mxu0
        %1053 = vdwg.mxu0
        %v1054 = vmul.f32 %v1051, 0.5
        %v1055 = vtanh.pop %v1054
        %v1056 = vadd.f32 %v1055, 1.0
        %v1057 = vmul.f32 %v1056, 0.5
        %v1058 = vmul.f32 %v1051, %v1057
        %s1059 = smul.u32 %s37, 16
        %s1060 = scalar_lea.vmem %s9, %s1059
        %v1061 = vld [vmem:[%s1060] sm:$0xff]
        %v1062 = vld [vmem:[%s1060 + $0x8] sm:$0xff]
        %s1063 = scalar_lea.vmem %s10, %s37
        %v1064 = vld [vmem:[%s1063] sm:$0x1]
        %v1066 = vlaneseq
        %v1067 = vshrl.u32 %v1066, 7
        %v1068 = vsub.s32 0, %v1067
        %v1069 = vrot.slane %v1064, %v1068
        %vm1071 = vcmask 130048
        %v1073 = vsel %vm1071, %v1058, 0
        %1075 = vmatprep.subr.mxu0 0.0
        %1076 = vmatpush1.msra.mxu0 0.0
        %1077 = vmatprep.subr.mxu0 0.0
        %1078 = vmatpush1.msra.mxu0 0.0
        %1079 = vmatprep.subr.mxu0 0.0
        %1080 = vmatpush1.msra.mxu0 0.0
        %1081 = vmatprep.subr.mxu0 0.0
        %1082 = vmatpush1.msra.mxu0 0.0
        %1083 = vmatprep.subr.mxu0 0.0
        %1084 = vmatpush1.msra.mxu0 0.0
        %1085 = vmatprep.subr.mxu0 0.0
        %1086 = vmatpush1.msra.mxu0 0.0
        %1087 = vmatprep.subr.mxu0 0.0
        %1088 = vmatpush1.msra.mxu0 0.0
        %1089 = vmatprep.subr.mxu0 0.0
        %1090 = vmatpush1.msra.mxu0 0.0
        %1091 = vmatprep.subr.mxu0 0.0
        %1092 = vmatpush1.msra.mxu0 0.0
        %1093 = vmatprep.subr.mxu0 0.0
        %1094 = vmatpush1.msra.mxu0 0.0
        %1095 = vmatprep.subr.mxu0 0.0
        %1096 = vmatpush1.msra.mxu0 0.0
        %1097 = vmatprep.subr.mxu0 0.0
        %1098 = vmatpush1.msra.mxu0 0.0
        %1099 = vmatprep.subr.mxu0 0.0
        %1100 = vmatpush1.msra.mxu0 0.0
        %1101 = vmatprep.subr.mxu0 0.0
        %1102 = vmatpush1.msra.mxu0 0.0
        %1103 = vmatprep.subr.mxu0 0.0
        %1104 = vmatpush1.msra.mxu0 %v1062
        %1105 = vmatprep.subr.mxu0 0.0
        %1106 = vmatpush1.msra.mxu0 %v1061
        %1107 = vmatprep.subr.mxu0 0.0
        %1108 = vmatpush2.msra.mxu0 0.0
        %1109 = vmatprep.subr.mxu0 0.0
        %1110 = vmatpush2.msra.mxu0 0.0
        %1111 = vmatprep.subr.mxu0 0.0
        %1112 = vmatpush2.msra.mxu0 0.0
        %1113 = vmatprep.subr.mxu0 0.0
        %1114 = vmatpush2.msra.mxu0 0.0
        %1115 = vmatprep.subr.mxu0 0.0
        %1116 = vmatpush2.msra.mxu0 0.0
        %1117 = vmatprep.subr.mxu0 0.0
        %1118 = vmatpush2.msra.mxu0 0.0
        %1119 = vmatprep.subr.mxu0 0.0
        %1120 = vmatpush2.msra.mxu0 0.0
        %1121 = vmatprep.subr.mxu0 0.0
        %1122 = vmatpush2.msra.mxu0 0.0
        %1123 = vmatprep.subr.mxu0 0.0
        %1124 = vmatpush2.msra.mxu0 0.0
        %1125 = vmatprep.subr.mxu0 0.0
        %1126 = vmatpush2.msra.mxu0 0.0
        %1127 = vmatprep.subr.mxu0 0.0
        %1128 = vmatpush2.msra.mxu0 0.0
        %1129 = vmatprep.subr.mxu0 0.0
        %1130 = vmatpush2.msra.mxu0 0.0
        %1131 = vmatprep.subr.mxu0 0.0
        %1132 = vmatpush2.msra.mxu0 0.0
        %1133 = vmatprep.subr.mxu0 0.0
        %1134 = vmatpush2.msra.mxu0 0.0
        %1135 = vmatprep.subr.mxu0 0.0
        %1136 = vmatpush2.msra.mxu0 0.0
        %1137 = vmatprep.subr.mxu0 0.0
        %1138 = vmatpush2.msra.mxu0 0.0
        %1139 = vmatprep.mubr.f32.mxu0 0.0
        %1140 = vmatmul.mubr.f32.gmra.mxu0 %v1073
        %v1141 = vpop.f32.mrf.mxu0
        %v1142 = vadd.f32 %v1069, %v1141
        %v1143 = vpop.f32.mrf.mxu0
        %1144 = vdwg.mxu0
        %v1145 = vmul.f32 %v1142, 0.5
        %v1146 = vtanh.pop %v1145
        %v1147 = vadd.f32 %v1146, 1.0
        %v1148 = vmul.f32 %v1147, 0.5
        %v1149 = vmul.f32 %v1142, %v1148
        %s1150 = scalar_lea.vmem %s11, %s37
        %v1151 = vld [vmem:[%s1150] sm:$0x1]
        %v1153 = vlaneseq
        %v1154 = vshrl.u32 %v1153, 7
        %v1155 = vsub.s32 0, %v1154
        %v1156 = vrot.slane %v1151, %v1155
        %v1158 = vmul.f32 %v1149, %v1156
        %v1159 = vsel %vm866, %v1158, 0.0
        %1160 = vadd.xlane.f32.xlu0 %v1159
        %v1161 = vpop.xlane.xlu0 %1160
        %s1162 = scalar_lea.vmem %s12, %s37
        %v1163 = vld [vmem:[%s1162] sm:$0x1]
        %v1165 = vlaneseq
        %v1166 = vshrl.u32 %v1165, 7
        %v1167 = vsub.s32 0, %v1166
        %v1168 = vrot.slane %v1163, %v1167
        %v1170 = vadd.f32 %v1161, %v1168
        %1172 = vset.pattern.permute.xlu0 0
        %1173 = vperm.xlu0 %1172, %v1170
        %v1174 = vpop.permute.xlu0 %1173
        %v1176 = vmul.f32 %v1174, %v835
        %1177 = vrot.lane.b32.xlu0 %v1058, 3
        %v1178 = vpop.permute.xlu0 %1177
        %v1180 = vsel %vm837, %v1176, %v1178
        %vm1181 = vcmask 154624
        %v1182 = vsel %vm1181, %v1180, 0.0
        %v1183 = vld [vmem:[%s668] sm:$0x1]
        %v1184 = vlaneseq
        %v1185 = vshrl.u32 %v1184, 7
        %v1186 = vadd.s32 %v1185, 8
        %v1187 = vadd.s32 %v1185, 16
        %v1188 = vadd.s32 %v1185, 24
        %v1189 = vadd.s32 %v1185, 32
        %v1190 = vadd.s32 %v1185, 40
        %v1191 = vadd.s32 %v1185, 48
        %v1192 = vadd.s32 %v1185, 56
        %v1193 = vadd.s32 %v1185, 64
        %v1194 = vadd.s32 %v1185, 72
        %v1195 = vadd.s32 %v1185, 80
        %v1196 = vadd.s32 %v1185, 88
        %v1197 = vadd.s32 %v1185, 96
        %v1198 = vadd.s32 %v1185, 104
        %v1199 = vadd.s32 %v1185, 112
        %v1200 = vadd.s32 %v1185, 120
        %v1201 = vlaneseq
        %v1202 = vshrl.u32 %v1201, 7
        %v1203 = vsub.s32 0, %v1202
        %v1204 = vrot.slane %v1183, %v1203
        %vm1205 = vcmp.eq.s32.totalorder %v1185, %v1204
        %vm1206 = vcmp.eq.s32.totalorder %v1186, %v1204
        %vm1207 = vcmp.eq.s32.totalorder %v1187, %v1204
        %vm1208 = vcmp.eq.s32.totalorder %v1188, %v1204
        %vm1209 = vcmp.eq.s32.totalorder %v1189, %v1204
        %vm1210 = vcmp.eq.s32.totalorder %v1190, %v1204
        %vm1211 = vcmp.eq.s32.totalorder %v1191, %v1204
        %vm1212 = vcmp.eq.s32.totalorder %v1192, %v1204
        %vm1213 = vcmp.eq.s32.totalorder %v1193, %v1204
        %vm1214 = vcmp.eq.s32.totalorder %v1194, %v1204
        %vm1215 = vcmp.eq.s32.totalorder %v1195, %v1204
        %vm1216 = vcmp.eq.s32.totalorder %v1196, %v1204
        %vm1217 = vcmp.eq.s32.totalorder %v1197, %v1204
        %vm1218 = vcmp.eq.s32.totalorder %v1198, %v1204
        %vm1219 = vcmp.eq.s32.totalorder %v1199, %v1204
        %vm1220 = vcmp.eq.s32.totalorder %v1200, %v1204
        %v1221 = vsel %vm1205, 1, 0
        %v1222 = vsel %vm1206, 1, 0
        %v1223 = vsel %vm1207, 1, 0
        %v1224 = vsel %vm1208, 1, 0
        %v1225 = vsel %vm1209, 1, 0
        %v1226 = vsel %vm1210, 1, 0
        %v1227 = vsel %vm1211, 1, 0
        %v1228 = vsel %vm1212, 1, 0
        %v1229 = vsel %vm1213, 1, 0
        %v1230 = vsel %vm1214, 1, 0
        %v1231 = vsel %vm1215, 1, 0
        %v1232 = vsel %vm1216, 1, 0
        %v1233 = vsel %vm1217, 1, 0
        %v1234 = vsel %vm1218, 1, 0
        %v1235 = vsel %vm1219, 1, 0
        %v1236 = vsel %vm1220, 1, 0
        %v1237 = vcvt.s32.f32 %v1221
        %v1238 = vcvt.s32.f32 %v1222
        %v1239 = vcvt.s32.f32 %v1223
        %v1240 = vcvt.s32.f32 %v1224
        %v1241 = vcvt.s32.f32 %v1225
        %v1242 = vcvt.s32.f32 %v1226
        %v1243 = vcvt.s32.f32 %v1227
        %v1244 = vcvt.s32.f32 %v1228
        %v1245 = vcvt.s32.f32 %v1229
        %v1246 = vcvt.s32.f32 %v1230
        %v1247 = vcvt.s32.f32 %v1231
        %v1248 = vcvt.s32.f32 %v1232
        %v1249 = vcvt.s32.f32 %v1233
        %v1250 = vcvt.s32.f32 %v1234
        %v1251 = vcvt.s32.f32 %v1235
        %v1252 = vcvt.s32.f32 %v1236
        %v1253 = vld [vmem:[#allocation3] sm:$0xff]
        %v1254 = vld [vmem:[#allocation3 + $0x8] sm:$0xff]
        %v1255 = vld [vmem:[#allocation3 + $0x10] sm:$0xff]
        %v1256 = vld [vmem:[#allocation3 + $0x18] sm:$0xff]
        %v1257 = vld [vmem:[#allocation3 + $0x20] sm:$0xff]
        %v1258 = vld [vmem:[#allocation3 + $0x28] sm:$0xff]
        %v1259 = vld [vmem:[#allocation3 + $0x30] sm:$0xff]
        %v1260 = vld [vmem:[#allocation3 + $0x38] sm:$0xff]
        %v1261 = vld [vmem:[#allocation3 + $0x40] sm:$0xff]
        %v1262 = vld [vmem:[#allocation3 + $0x48] sm:$0xff]
        %v1263 = vld [vmem:[#allocation3 + $0x50] sm:$0xff]
        %v1264 = vld [vmem:[#allocation3 + $0x58] sm:$0xff]
        %v1265 = vld [vmem:[#allocation3 + $0x60] sm:$0xff]
        %v1266 = vld [vmem:[#allocation3 + $0x68] sm:$0xff]
        %v1267 = vld [vmem:[#allocation3 + $0x70] sm:$0xff]
        %v1268 = vld [vmem:[#allocation3 + $0x78] sm:$0xff]
        %vm1269 = vcmask 64512
        %v1271 = vsel %vm1269, %v1237, 0
        %v1274 = vsel %vm1269, %v1238, 0
        %v1277 = vsel %vm1269, %v1239, 0
        %v1280 = vsel %vm1269, %v1240, 0
        %v1283 = vsel %vm1269, %v1241, 0
        %v1286 = vsel %vm1269, %v1242, 0
        %v1289 = vsel %vm1269, %v1243, 0
        %v1292 = vsel %vm1269, %v1244, 0
        %v1295 = vsel %vm1269, %v1245, 0
        %v1298 = vsel %vm1269, %v1246, 0
        %v1301 = vsel %vm1269, %v1247, 0
        %v1304 = vsel %vm1269, %v1248, 0
        %v1307 = vsel %vm1269, %v1249, 0
        %v1310 = vsel %vm1269, %v1250, 0
        %v1313 = vsel %vm1269, %v1251, 0
        %v1316 = vsel %vm1269, %v1252, 0
        %1318 = vmatprep.subr.mxu0 0.0
        %1319 = vmatpush1.msra.mxu0 0.0
        %1320 = vmatprep.subr.mxu0 0.0
        %1321 = vmatpush1.msra.mxu0 0.0
        %1322 = vmatprep.subr.mxu0 0.0
        %1323 = vmatpush1.msra.mxu0 0.0
        %1324 = vmatprep.subr.mxu0 0.0
        %1325 = vmatpush1.msra.mxu0 0.0
        %1326 = vmatprep.subr.mxu0 0.0
        %1327 = vmatpush1.msra.mxu0 0.0
        %1328 = vmatprep.subr.mxu0 0.0
        %1329 = vmatpush1.msra.mxu0 0.0
        %1330 = vmatprep.subr.mxu0 0.0
        %1331 = vmatpush1.msra.mxu0 0.0
        %1332 = vmatprep.subr.mxu0 0.0
        %1333 = vmatpush1.msra.mxu0 0.0
        %1334 = vmatprep.subr.mxu0 0.0
        %1335 = vmatpush1.msra.mxu0 0.0
        %1336 = vmatprep.subr.mxu0 0.0
        %1337 = vmatpush1.msra.mxu0 0.0
        %1338 = vmatprep.subr.mxu0 0.0
        %1339 = vmatpush1.msra.mxu0 0.0
        %1340 = vmatprep.subr.mxu0 0.0
        %1341 = vmatpush1.msra.mxu0 0.0
        %1342 = vmatprep.subr.mxu0 0.0
        %1343 = vmatpush1.msra.mxu0 0.0
        %1344 = vmatprep.subr.mxu0 0.0
        %1345 = vmatpush1.msra.mxu0 0.0
        %1346 = vmatprep.subr.mxu0 0.0
        %1347 = vmatpush1.msra.mxu0 0.0
        %1348 = vmatprep.subr.mxu0 0.0
        %1349 = vmatpush1.msra.mxu0 %v1182
        %1350 = vmatprep.subr.mxu0 0.0
        %1351 = vmatpush2.msra.mxu0 0.0
        %1352 = vmatprep.subr.mxu0 0.0
        %1353 = vmatpush2.msra.mxu0 0.0
        %1354 = vmatprep.subr.mxu0 0.0
        %1355 = vmatpush2.msra.mxu0 0.0
        %1356 = vmatprep.subr.mxu0 0.0
        %1357 = vmatpush2.msra.mxu0 0.0
        %1358 = vmatprep.subr.mxu0 0.0
        %1359 = vmatpush2.msra.mxu0 0.0
        %1360 = vmatprep.subr.mxu0 0.0
        %1361 = vmatpush2.msra.mxu0 0.0
        %1362 = vmatprep.subr.mxu0 0.0
        %1363 = vmatpush2.msra.mxu0 0.0
        %1364 = vmatprep.subr.mxu0 0.0
        %1365 = vmatpush2.msra.mxu0 0.0
        %1366 = vmatprep.subr.mxu0 0.0
        %1367 = vmatpush2.msra.mxu0 0.0
        %1368 = vmatprep.subr.mxu0 0.0
        %1369 = vmatpush2.msra.mxu0 0.0
        %1370 = vmatprep.subr.mxu0 0.0
        %1371 = vmatpush2.msra.mxu0 0.0
        %1372 = vmatprep.subr.mxu0 0.0
        %1373 = vmatpush2.msra.mxu0 0.0
        %1374 = vmatprep.subr.mxu0 0.0
        %1375 = vmatpush2.msra.mxu0 0.0
        %1376 = vmatprep.subr.mxu0 0.0
        %1377 = vmatpush2.msra.mxu0 0.0
        %1378 = vmatprep.subr.mxu0 0.0
        %1379 = vmatpush2.msra.mxu0 0.0
        %1380 = vmatprep.subr.mxu0 0.0
        %1381 = vmatpush2.msra.mxu0 0.0
        %1382 = vmatprep.mubr.f32.mxu0 0.0
        %1383 = vmatmul.mubr.f32.gmra.mxu0 %v1271
        %v1384 = vpop.f32.mrf.mxu0
        %v1385 = vadd.f32 0.0, %v1384
        %v1386 = vpop.f32.mrf.mxu0
        %1387 = vmatprep.mubr.f32.mxu0 0.0
        %1388 = vmatmul.mubr.f32.gmra.mxu0 %v1274
        %v1389 = vpop.f32.mrf.mxu0
        %v1390 = vadd.f32 0.0, %v1389
        %v1391 = vpop.f32.mrf.mxu0
        %1392 = vmatprep.mubr.f32.mxu0 0.0
        %1393 = vmatmul.mubr.f32.gmra.mxu0 %v1277
        %v1394 = vpop.f32.mrf.mxu0
        %v1395 = vadd.f32 0.0, %v1394
        %v1396 = vpop.f32.mrf.mxu0
        %1397 = vmatprep.mubr.f32.mxu0 0.0
        %1398 = vmatmul.mubr.f32.gmra.mxu0 %v1280
        %v1399 = vpop.f32.mrf.mxu0
        %v1400 = vadd.f32 0.0, %v1399
        %v1401 = vpop.f32.mrf.mxu0
        %1402 = vmatprep.mubr.f32.mxu0 0.0
        %1403 = vmatmul.mubr.f32.gmra.mxu0 %v1283
        %v1404 = vpop.f32.mrf.mxu0
        %v1405 = vadd.f32 0.0, %v1404
        %v1406 = vpop.f32.mrf.mxu0
        %1407 = vmatprep.mubr.f32.mxu0 0.0
        %1408 = vmatmul.mubr.f32.gmra.mxu0 %v1286
        %v1409 = vpop.f32.mrf.mxu0
        %v1410 = vadd.f32 0.0, %v1409
        %v1411 = vpop.f32.mrf.mxu0
        %1412 = vmatprep.mubr.f32.mxu0 0.0
        %1413 = vmatmul.mubr.f32.gmra.mxu0 %v1289
        %v1414 = vpop.f32.mrf.mxu0
        %v1415 = vadd.f32 0.0, %v1414
        %v1416 = vpop.f32.mrf.mxu0
        %1417 = vmatprep.mubr.f32.mxu0 0.0
        %1418 = vmatmul.mubr.f32.gmra.mxu0 %v1292
        %v1419 = vpop.f32.mrf.mxu0
        %v1420 = vadd.f32 0.0, %v1419
        %v1421 = vpop.f32.mrf.mxu0
        %1422 = vmatprep.mubr.f32.mxu0 0.0
        %1423 = vmatmul.mubr.f32.gmra.mxu0 %v1295
        %v1424 = vpop.f32.mrf.mxu0
        %v1425 = vadd.f32 0.0, %v1424
        %v1426 = vpop.f32.mrf.mxu0
        %1427 = vmatprep.mubr.f32.mxu0 0.0
        %1428 = vmatmul.mubr.f32.gmra.mxu0 %v1298
        %v1429 = vpop.f32.mrf.mxu0
        %v1430 = vadd.f32 0.0, %v1429
        %v1431 = vpop.f32.mrf.mxu0
        %1432 = vmatprep.mubr.f32.mxu0 0.0
        %1433 = vmatmul.mubr.f32.gmra.mxu0 %v1301
        %v1434 = vpop.f32.mrf.mxu0
        %v1435 = vadd.f32 0.0, %v1434
        %v1436 = vpop.f32.mrf.mxu0
        %1437 = vmatprep.mubr.f32.mxu0 0.0
        %1438 = vmatmul.mubr.f32.gmra.mxu0 %v1304
        %v1439 = vpop.f32.mrf.mxu0
        %v1440 = vadd.f32 0.0, %v1439
        %v1441 = vpop.f32.mrf.mxu0
        %1442 = vmatprep.mubr.f32.mxu0 0.0
        %1443 = vmatmul.mubr.f32.gmra.mxu0 %v1307
        %v1444 = vpop.f32.mrf.mxu0
        %v1445 = vadd.f32 0.0, %v1444
        %v1446 = vpop.f32.mrf.mxu0
        %1447 = vmatprep.mubr.f32.mxu0 0.0
        %1448 = vmatmul.mubr.f32.gmra.mxu0 %v1310
        %v1449 = vpop.f32.mrf.mxu0
        %v1450 = vadd.f32 0.0, %v1449
        %v1451 = vpop.f32.mrf.mxu0
        %1452 = vmatprep.mubr.f32.mxu0 0.0
        %1453 = vmatmul.mubr.f32.gmra.mxu0 %v1313
        %v1454 = vpop.f32.mrf.mxu0
        %v1455 = vadd.f32 0.0, %v1454
        %v1456 = vpop.f32.mrf.mxu0
        %1457 = vmatprep.mubr.f32.mxu0 0.0
        %1458 = vmatmul.mubr.f32.gmra.mxu0 %v1316
        %v1459 = vpop.f32.mrf.mxu0
        %v1460 = vadd.f32 0.0, %v1459
        %v1461 = vpop.f32.mrf.mxu0
        %1462 = vdwg.mxu0
        %v1463 = vadd.f32 %v1253, %v1385
        %v1464 = vadd.f32 %v1254, %v1390
        %v1465 = vadd.f32 %v1255, %v1395
        %v1466 = vadd.f32 %v1256, %v1400
        %v1467 = vadd.f32 %v1257, %v1405
        %v1468 = vadd.f32 %v1258, %v1410
        %v1469 = vadd.f32 %v1259, %v1415
        %v1470 = vadd.f32 %v1260, %v1420
        %v1471 = vadd.f32 %v1261, %v1425
        %v1472 = vadd.f32 %v1262, %v1430
        %v1473 = vadd.f32 %v1263, %v1435
        %v1474 = vadd.f32 %v1264, %v1440
        %v1475 = vadd.f32 %v1265, %v1445
        %v1476 = vadd.f32 %v1266, %v1450
        %v1477 = vadd.f32 %v1267, %v1455
        %v1478 = vadd.f32 %v1268, %v1460
        %1479 = vst.msk [vmem:[#allocation3] sm:$0xff] %vm845, %v1463
        %1480 = vst.msk [vmem:[#allocation3 + $0x8] sm:$0xff] %vm845, %v1464
        %1481 = vst.msk [vmem:[#allocation3 + $0x10] sm:$0xff] %vm845, %v1465
        %1482 = vst.msk [vmem:[#allocation3 + $0x18] sm:$0xff] %vm845, %v1466
        %1483 = vst.msk [vmem:[#allocation3 + $0x20] sm:$0xff] %vm845, %v1467
        %1484 = vst.msk [vmem:[#allocation3 + $0x28] sm:$0xff] %vm845, %v1468
        %1485 = vst.msk [vmem:[#allocation3 + $0x30] sm:$0xff] %vm845, %v1469
        %1486 = vst.msk [vmem:[#allocation3 + $0x38] sm:$0xff] %vm845, %v1470
        %1487 = vst.msk [vmem:[#allocation3 + $0x40] sm:$0xff] %vm845, %v1471
        %1488 = vst.msk [vmem:[#allocation3 + $0x48] sm:$0xff] %vm845, %v1472
        %1489 = vst.msk [vmem:[#allocation3 + $0x50] sm:$0xff] %vm845, %v1473
        %1490 = vst.msk [vmem:[#allocation3 + $0x58] sm:$0xff] %vm845, %v1474
        %1491 = vst.msk [vmem:[#allocation3 + $0x60] sm:$0xff] %vm845, %v1475
        %1492 = vst.msk [vmem:[#allocation3 + $0x68] sm:$0xff] %vm845, %v1476
        %1493 = vst.msk [vmem:[#allocation3 + $0x70] sm:$0xff] %vm845, %v1477
        %1494 = vst.msk [vmem:[#allocation3 + $0x78] sm:$0xff] %vm845, %v1478
        %p1495 = scmp.eq.s32.totalorder %s38, 1
        // Predicated region
        $region113: #{tpu_custom_call.1} parent=103 // pred_check
          %p1496 = pneg %p1495
        $region114: #{tpu_custom_call.1} parent=103 // pred_check_branch
          %1498 = sbr.rel (%p1496) target = $region116
        $region115: #{tpu_custom_call.1} parent=103 // pred_region
          %v1499 = vld [vmem:[#allocation3] sm:$0xff]
          %v1500 = vld [vmem:[#allocation3 + $0x8] sm:$0xff]
          %v1501 = vld [vmem:[#allocation3 + $0x10] sm:$0xff]
          %v1502 = vld [vmem:[#allocation3 + $0x18] sm:$0xff]
          %v1503 = vld [vmem:[#allocation3 + $0x20] sm:$0xff]
          %v1504 = vld [vmem:[#allocation3 + $0x28] sm:$0xff]
          %v1505 = vld [vmem:[#allocation3 + $0x30] sm:$0xff]
          %v1506 = vld [vmem:[#allocation3 + $0x38] sm:$0xff]
          %v1507 = vld [vmem:[#allocation3 + $0x40] sm:$0xff]
          %v1508 = vld [vmem:[#allocation3 + $0x48] sm:$0xff]
          %v1509 = vld [vmem:[#allocation3 + $0x50] sm:$0xff]
          %v1510 = vld [vmem:[#allocation3 + $0x58] sm:$0xff]
          %v1511 = vld [vmem:[#allocation3 + $0x60] sm:$0xff]
          %v1512 = vld [vmem:[#allocation3 + $0x68] sm:$0xff]
          %v1513 = vld [vmem:[#allocation3 + $0x70] sm:$0xff]
          %v1514 = vld [vmem:[#allocation3 + $0x78] sm:$0xff]
          %vm1515 = vcmp.lt.s32.totalorder %v747, 3
          %v1516 = vsel %vm1515, %v1499, 0.0
          %v1517 = vsel %vm1515, %v1500, 0.0
          %v1518 = vsel %vm1515, %v1501, 0.0
          %v1519 = vsel %vm1515, %v1502, 0.0
          %v1520 = vsel %vm1515, %v1503, 0.0
          %v1521 = vsel %vm1515, %v1504, 0.0
          %v1522 = vsel %vm1515, %v1505, 0.0
          %v1523 = vsel %vm1515, %v1506, 0.0
          %v1524 = vsel %vm1515, %v1507, 0.0
          %v1525 = vsel %vm1515, %v1508, 0.0
          %v1526 = vsel %vm1515, %v1509, 0.0
          %v1527 = vsel %vm1515, %v1510, 0.0
          %v1528 = vsel %vm1515, %v1511, 0.0
          %v1529 = vsel %vm1515, %v1512, 0.0
          %v1530 = vsel %vm1515, %v1513, 0.0
          %v1531 = vsel %vm1515, %v1514, 0.0
          %1548 = vrot.lane.b32.xlu0 %v1499, 32
          %v1549 = vpop.permute.xlu0 %1548
          %1550 = vrot.lane.b32.xlu0 %v1500, 32
          %v1551 = vpop.permute.xlu0 %1550
          %1552 = vrot.lane.b32.xlu0 %v1501, 32
          %v1553 = vpop.permute.xlu0 %1552
          %1554 = vrot.lane.b32.xlu0 %v1502, 32
          %v1555 = vpop.permute.xlu0 %1554
          %1556 = vrot.lane.b32.xlu0 %v1503, 32
          %v1557 = vpop.permute.xlu0 %1556
          %1558 = vrot.lane.b32.xlu0 %v1504, 32
          %v1559 = vpop.permute.xlu0 %1558
          %1560 = vrot.lane.b32.xlu0 %v1505, 32
          %v1561 = vpop.permute.xlu0 %1560
          %1562 = vrot.lane.b32.xlu0 %v1506, 32
          %v1563 = vpop.permute.xlu0 %1562
          %1564 = vrot.lane.b32.xlu0 %v1507, 32
          %v1565 = vpop.permute.xlu0 %1564
          %1566 = vrot.lane.b32.xlu0 %v1508, 32
          %v1567 = vpop.permute.xlu0 %1566
          %1568 = vrot.lane.b32.xlu0 %v1509, 32
          %v1569 = vpop.permute.xlu0 %1568
          %1570 = vrot.lane.b32.xlu0 %v1510, 32
          %v1571 = vpop.permute.xlu0 %1570
          %1572 = vrot.lane.b32.xlu0 %v1511, 32
          %v1573 = vpop.permute.xlu0 %1572
          %1574 = vrot.lane.b32.xlu0 %v1512, 32
          %v1575 = vpop.permute.xlu0 %1574
          %1576 = vrot.lane.b32.xlu0 %v1513, 32
          %v1577 = vpop.permute.xlu0 %1576
          %1578 = vrot.lane.b32.xlu0 %v1514, 32
          %v1579 = vpop.permute.xlu0 %1578
          %v1596 = vsel %vm845, %v728, %v1549
          %v1597 = vsel %vm845, %v729, %v1551
          %v1598 = vsel %vm845, %v730, %v1553
          %v1599 = vsel %vm845, %v731, %v1555
          %v1600 = vsel %vm845, %v732, %v1557
          %v1601 = vsel %vm845, %v733, %v1559
          %v1602 = vsel %vm845, %v734, %v1561
          %v1603 = vsel %vm845, %v735, %v1563
          %v1604 = vsel %vm845, %v736, %v1565
          %v1605 = vsel %vm845, %v737, %v1567
          %v1606 = vsel %vm845, %v738, %v1569
          %v1607 = vsel %vm845, %v739, %v1571
          %v1608 = vsel %vm845, %v740, %v1573
          %v1609 = vsel %vm845, %v741, %v1575
          %v1610 = vsel %vm845, %v742, %v1577
          %v1611 = vsel %vm845, %v743, %v1579
          %s1612 = scalar_lea.vmem %s13, %s847
          %v1613 = vld [vmem:[%s1612] sm:$0xff]
          %v1614 = vld [vmem:[%s1612 + $0x8] sm:$0xff]
          %v1615 = vld [vmem:[%s1612 + $0x10] sm:$0xff]
          %v1616 = vld [vmem:[%s1612 + $0x18] sm:$0xff]
          %v1617 = vld [vmem:[%s1612 + $0x20] sm:$0xff]
          %v1618 = vld [vmem:[%s1612 + $0x28] sm:$0xff]
          %v1619 = vld [vmem:[%s1612 + $0x30] sm:$0xff]
          %v1620 = vld [vmem:[%s1612 + $0x38] sm:$0xff]
          %s1621 = scalar_lea.vmem %s14, %s37
          %v1622 = vld [vmem:[%s1621] sm:$0x1]
          %v1624 = vlaneseq
          %v1625 = vshrl.u32 %v1624, 7
          %v1626 = vsub.s32 0, %v1625
          %v1627 = vrot.slane %v1622, %v1626
          %v1630 = vsel %vm866, %v1596, 0
          %v1633 = vsel %vm866, %v1597, 0
          %v1636 = vsel %vm866, %v1598, 0
          %v1639 = vsel %vm866, %v1599, 0
          %v1642 = vsel %vm866, %v1600, 0
          %v1645 = vsel %vm866, %v1601, 0
          %v1648 = vsel %vm866, %v1602, 0
          %v1651 = vsel %vm866, %v1603, 0
          %v1654 = vsel %vm866, %v1604, 0
          %v1657 = vsel %vm866, %v1605, 0
          %v1660 = vsel %vm866, %v1606, 0
          %v1663 = vsel %vm866, %v1607, 0
          %v1666 = vsel %vm866, %v1608, 0
          %v1669 = vsel %vm866, %v1609, 0
          %v1672 = vsel %vm866, %v1610, 0
          %v1675 = vsel %vm866, %v1611, 0
          %1677 = vmatprep.subr.mxu0 0.0
          %1678 = vmatpush1.msra.mxu0 0.0
          %1679 = vmatprep.subr.mxu0 0.0
          %1680 = vmatpush1.msra.mxu0 0.0
          %1681 = vmatprep.subr.mxu0 0.0
          %1682 = vmatpush1.msra.mxu0 0.0
          %1683 = vmatprep.subr.mxu0 0.0
          %1684 = vmatpush1.msra.mxu0 0.0
          %1685 = vmatprep.subr.mxu0 0.0
          %1686 = vmatpush1.msra.mxu0 0.0
          %1687 = vmatprep.subr.mxu0 0.0
          %1688 = vmatpush1.msra.mxu0 0.0
          %1689 = vmatprep.subr.mxu0 0.0
          %1690 = vmatpush1.msra.mxu0 0.0
          %1691 = vmatprep.subr.mxu0 0.0
          %1692 = vmatpush1.msra.mxu0 0.0
          %1693 = vmatprep.subr.mxu0 0.0
          %1694 = vmatpush1.msra.mxu0 %v1620
          %1695 = vmatprep.subr.mxu0 0.0
          %1696 = vmatpush1.msra.mxu0 %v1619
          %1697 = vmatprep.subr.mxu0 0.0
          %1698 = vmatpush1.msra.mxu0 %v1618
          %1699 = vmatprep.subr.mxu0 0.0
          %1700 = vmatpush1.msra.mxu0 %v1617
          %1701 = vmatprep.subr.mxu0 0.0
          %1702 = vmatpush1.msra.mxu0 %v1616
          %1703 = vmatprep.subr.mxu0 0.0
          %1704 = vmatpush1.msra.mxu0 %v1615
          %1705 = vmatprep.subr.mxu0 0.0
          %1706 = vmatpush1.msra.mxu0 %v1614
          %1707 = vmatprep.subr.mxu0 0.0
          %1708 = vmatpush1.msra.mxu0 %v1613
          %1709 = vmatprep.subr.mxu0 0.0
          %1710 = vmatpush2.msra.mxu0 0.0
          %1711 = vmatprep.subr.mxu0 0.0
          %1712 = vmatpush2.msra.mxu0 0.0
          %1713 = vmatprep.subr.mxu0 0.0
          %1714 = vmatpush2.msra.mxu0 0.0
          %1715 = vmatprep.subr.mxu0 0.0
          %1716 = vmatpush2.msra.mxu0 0.0
          %1717 = vmatprep.subr.mxu0 0.0
          %1718 = vmatpush2.msra.mxu0 0.0
          %1719 = vmatprep.subr.mxu0 0.0
          %1720 = vmatpush2.msra.mxu0 0.0
          %1721 = vmatprep.subr.mxu0 0.0
          %1722 = vmatpush2.msra.mxu0 0.0
          %1723 = vmatprep.subr.mxu0 0.0
          %1724 = vmatpush2.msra.mxu0 0.0
          %1725 = vmatprep.subr.mxu0 0.0
          %1726 = vmatpush2.msra.mxu0 0.0
          %1727 = vmatprep.subr.mxu0 0.0
          %1728 = vmatpush2.msra.mxu0 0.0
          %1729 = vmatprep.subr.mxu0 0.0
          %1730 = vmatpush2.msra.mxu0 0.0
          %1731 = vmatprep.subr.mxu0 0.0
          %1732 = vmatpush2.msra.mxu0 0.0
          %1733 = vmatprep.subr.mxu0 0.0
          %1734 = vmatpush2.msra.mxu0 0.0
          %1735 = vmatprep.subr.mxu0 0.0
          %1736 = vmatpush2.msra.mxu0 0.0
          %1737 = vmatprep.subr.mxu0 0.0
          %1738 = vmatpush2.msra.mxu0 0.0
          %1739 = vmatprep.subr.mxu0 0.0
          %1740 = vmatpush2.msra.mxu0 0.0
          %1741 = vmatprep.mubr.f32.mxu0 0.0
          %1742 = vmatmul.mubr.f32.gmra.mxu0 %v1630
          %v1743 = vpop.f32.mrf.mxu0
          %v1744 = vadd.f32 %v1627, %v1743
          %v1745 = vpop.f32.mrf.mxu0
          %1746 = vmatprep.mubr.f32.mxu0 0.0
          %1747 = vmatmul.mubr.f32.gmra.mxu0 %v1633
          %v1748 = vpop.f32.mrf.mxu0
          %v1749 = vadd.f32 %v1627, %v1748
          %v1750 = vpop.f32.mrf.mxu0
          %1751 = vmatprep.mubr.f32.mxu0 0.0
          %1752 = vmatmul.mubr.f32.gmra.mxu0 %v1636
          %v1753 = vpop.f32.mrf.mxu0
          %v1754 = vadd.f32 %v1627, %v1753
          %v1755 = vpop.f32.mrf.mxu0
          %1756 = vmatprep.mubr.f32.mxu0 0.0
          %1757 = vmatmul.mubr.f32.gmra.mxu0 %v1639
          %v1758 = vpop.f32.mrf.mxu0
          %v1759 = vadd.f32 %v1627, %v1758
          %v1760 = vpop.f32.mrf.mxu0
          %1761 = vmatprep.mubr.f32.mxu0 0.0
          %1762 = vmatmul.mubr.f32.gmra.mxu0 %v1642
          %v1763 = vpop.f32.mrf.mxu0
          %v1764 = vadd.f32 %v1627, %v1763
          %v1765 = vpop.f32.mrf.mxu0
          %1766 = vmatprep.mubr.f32.mxu0 0.0
          %1767 = vmatmul.mubr.f32.gmra.mxu0 %v1645
          %v1768 = vpop.f32.mrf.mxu0
          %v1769 = vadd.f32 %v1627, %v1768
          %v1770 = vpop.f32.mrf.mxu0
          %1771 = vmatprep.mubr.f32.mxu0 0.0
          %1772 = vmatmul.mubr.f32.gmra.mxu0 %v1648
          %v1773 = vpop.f32.mrf.mxu0
          %v1774 = vadd.f32 %v1627, %v1773
          %v1775 = vpop.f32.mrf.mxu0
          %1776 = vmatprep.mubr.f32.mxu0 0.0
          %1777 = vmatmul.mubr.f32.gmra.mxu0 %v1651
          %v1778 = vpop.f32.mrf.mxu0
          %v1779 = vadd.f32 %v1627, %v1778
          %v1780 = vpop.f32.mrf.mxu0
          %1781 = vmatprep.mubr.f32.mxu0 0.0
          %1782 = vmatmul.mubr.f32.gmra.mxu0 %v1654
          %v1783 = vpop.f32.mrf.mxu0
          %v1784 = vadd.f32 %v1627, %v1783
          %v1785 = vpop.f32.mrf.mxu0
          %1786 = vmatprep.mubr.f32.mxu0 0.0
          %1787 = vmatmul.mubr.f32.gmra.mxu0 %v1657
          %v1788 = vpop.f32.mrf.mxu0
          %v1789 = vadd.f32 %v1627, %v1788
          %v1790 = vpop.f32.mrf.mxu0
          %1791 = vmatprep.mubr.f32.mxu0 0.0
          %1792 = vmatmul.mubr.f32.gmra.mxu0 %v1660
          %v1793 = vpop.f32.mrf.mxu0
          %v1794 = vadd.f32 %v1627, %v1793
          %v1795 = vpop.f32.mrf.mxu0
          %1796 = vmatprep.mubr.f32.mxu0 0.0
          %1797 = vmatmul.mubr.f32.gmra.mxu0 %v1663
          %v1798 = vpop.f32.mrf.mxu0
          %v1799 = vadd.f32 %v1627, %v1798
          %v1800 = vpop.f32.mrf.mxu0
          %1801 = vmatprep.mubr.f32.mxu0 0.0
          %1802 = vmatmul.mubr.f32.gmra.mxu0 %v1666
          %v1803 = vpop.f32.mrf.mxu0
          %v1804 = vadd.f32 %v1627, %v1803
          %v1805 = vpop.f32.mrf.mxu0
          %1806 = vmatprep.mubr.f32.mxu0 0.0
          %1807 = vmatmul.mubr.f32.gmra.mxu0 %v1669
          %v1808 = vpop.f32.mrf.mxu0
          %v1809 = vadd.f32 %v1627, %v1808
          %v1810 = vpop.f32.mrf.mxu0
          %1811 = vmatprep.mubr.f32.mxu0 0.0
          %1812 = vmatmul.mubr.f32.gmra.mxu0 %v1672
          %v1813 = vpop.f32.mrf.mxu0
          %v1814 = vadd.f32 %v1627, %v1813
          %v1815 = vpop.f32.mrf.mxu0
          %1816 = vmatprep.mubr.f32.mxu0 0.0
          %1817 = vmatmul.mubr.f32.gmra.mxu0 %v1675
          %v1818 = vpop.f32.mrf.mxu0
          %v1819 = vadd.f32 %v1627, %v1818
          %v1820 = vpop.f32.mrf.mxu0
          %1821 = vdwg.mxu0
          %v1822 = vmul.f32 %v1744, 0.5
          %v1823 = vmul.f32 %v1749, 0.5
          %v1824 = vmul.f32 %v1754, 0.5
          %v1825 = vmul.f32 %v1759, 0.5
          %v1826 = vmul.f32 %v1764, 0.5
          %v1827 = vmul.f32 %v1769, 0.5
          %v1828 = vmul.f32 %v1774, 0.5
          %v1829 = vmul.f32 %v1779, 0.5
          %v1830 = vmul.f32 %v1784, 0.5
          %v1831 = vmul.f32 %v1789, 0.5
          %v1832 = vmul.f32 %v1794, 0.5
          %v1833 = vmul.f32 %v1799, 0.5
          %v1834 = vmul.f32 %v1804, 0.5
          %v1835 = vmul.f32 %v1809, 0.5
          %v1836 = vmul.f32 %v1814, 0.5
          %v1837 = vmul.f32 %v1819, 0.5
          %v1838 = vtanh.pop %v1822
          %v1839 = vtanh.pop %v1823
          %v1840 = vtanh.pop %v1824
          %v1841 = vtanh.pop %v1825
          %v1842 = vtanh.pop %v1826
          %v1843 = vtanh.pop %v1827
          %v1844 = vtanh.pop %v1828
          %v1845 = vtanh.pop %v1829
          %v1846 = vtanh.pop %v1830
          %v1847 = vtanh.pop %v1831
          %v1848 = vtanh.pop %v1832
          %v1849 = vtanh.pop %v1833
          %v1850 = vtanh.pop %v1834
          %v1851 = vtanh.pop %v1835
          %v1852 = vtanh.pop %v1836
          %v1853 = vtanh.pop %v1837
          %v1854 = vadd.f32 %v1838, 1.0
          %v1855 = vadd.f32 %v1839, 1.0
          %v1856 = vadd.f32 %v1840, 1.0
          %v1857 = vadd.f32 %v1841, 1.0
          %v1858 = vadd.f32 %v1842, 1.0
          %v1859 = vadd.f32 %v1843, 1.0
          %v1860 = vadd.f32 %v1844, 1.0
          %v1861 = vadd.f32 %v1845, 1.0
          %v1862 = vadd.f32 %v1846, 1.0
          %v1863 = vadd.f32 %v1847, 1.0
          %v1864 = vadd.f32 %v1848, 1.0
          %v1865 = vadd.f32 %v1849, 1.0
          %v1866 = vadd.f32 %v1850, 1.0
          %v1867 = vadd.f32 %v1851, 1.0
          %v1868 = vadd.f32 %v1852, 1.0
          %v1869 = vadd.f32 %v1853, 1.0
          %v1870 = vmul.f32 %v1854, 0.5
          %v1871 = vmul.f32 %v1855, 0.5
          %v1872 = vmul.f32 %v1856, 0.5
          %v1873 = vmul.f32 %v1857, 0.5
          %v1874 = vmul.f32 %v1858, 0.5
          %v1875 = vmul.f32 %v1859, 0.5
          %v1876 = vmul.f32 %v1860, 0.5
          %v1877 = vmul.f32 %v1861, 0.5
          %v1878 = vmul.f32 %v1862, 0.5
          %v1879 = vmul.f32 %v1863, 0.5
          %v1880 = vmul.f32 %v1864, 0.5
          %v1881 = vmul.f32 %v1865, 0.5
          %v1882 = vmul.f32 %v1866, 0.5
          %v1883 = vmul.f32 %v1867, 0.5
          %v1884 = vmul.f32 %v1868, 0.5
          %v1885 = vmul.f32 %v1869, 0.5
          %v1886 = vmul.f32 %v1744, %v1870
          %v1887 = vmul.f32 %v1749, %v1871
          %v1888 = vmul.f32 %v1754, %v1872
          %v1889 = vmul.f32 %v1759, %v1873
          %v1890 = vmul.f32 %v1764, %v1874
          %v1891 = vmul.f32 %v1769, %v1875
          %v1892 = vmul.f32 %v1774, %v1876
          %v1893 = vmul.f32 %v1779, %v1877
          %v1894 = vmul.f32 %v1784, %v1878
          %v1895 = vmul.f32 %v1789, %v1879
          %v1896 = vmul.f32 %v1794, %v1880
          %v1897 = vmul.f32 %v1799, %v1881
          %v1898 = vmul.f32 %v1804, %v1882
          %v1899 = vmul.f32 %v1809, %v1883
          %v1900 = vmul.f32 %v1814, %v1884
          %v1901 = vmul.f32 %v1819, %v1885
          %s1902 = smul.u32 %s37, 48
          %s1903 = scalar_lea.vmem %s15, %s1902
          %v1904 = vld [vmem:[%s1903] sm:$0xff]
          %v1905 = vld [vmem:[%s1903 + $0x8] sm:$0xff]
          %v1906 = vld [vmem:[%s1903 + $0x10] sm:$0xff]
          %v1907 = vld [vmem:[%s1903 + $0x18] sm:$0xff]
          %v1908 = vld [vmem:[%s1903 + $0x20] sm:$0xff]
          %v1909 = vld [vmem:[%s1903 + $0x28] sm:$0x3f]
          %s1910 = scalar_lea.vmem %s16, %s37
          %v1911 = vld [vmem:[%s1910] sm:$0x1]
          %v1913 = vlaneseq
          %v1914 = vshrl.u32 %v1913, 7
          %v1915 = vsub.s32 0, %v1914
          %v1916 = vrot.slane %v1911, %v1915
          %vm1918 = vcmask 375808
          %v1920 = vsel %vm1918, %v1886, 0
          %v1923 = vsel %vm1918, %v1887, 0
          %v1926 = vsel %vm1918, %v1888, 0
          %v1929 = vsel %vm1918, %v1889, 0
          %v1932 = vsel %vm1918, %v1890, 0
          %v1935 = vsel %vm1918, %v1891, 0
          %v1938 = vsel %vm1918, %v1892, 0
          %v1941 = vsel %vm1918, %v1893, 0
          %v1944 = vsel %vm1918, %v1894, 0
          %v1947 = vsel %vm1918, %v1895, 0
          %v1950 = vsel %vm1918, %v1896, 0
          %v1953 = vsel %vm1918, %v1897, 0
          %v1956 = vsel %vm1918, %v1898, 0
          %v1959 = vsel %vm1918, %v1899, 0
          %v1962 = vsel %vm1918, %v1900, 0
          %v1965 = vsel %vm1918, %v1901, 0
          %v1968 = vsel %vm980, %v1909, 0
          %1970 = vmatprep.subr.mxu0 0.0
          %1971 = vmatpush1.msra.mxu0 0.0
          %1972 = vmatprep.subr.mxu0 0.0
          %1973 = vmatpush1.msra.mxu0 0.0
          %1974 = vmatprep.subr.mxu0 0.0
          %1975 = vmatpush1.msra.mxu0 0.0
          %1976 = vmatprep.subr.mxu0 0.0
          %1977 = vmatpush1.msra.mxu0 0.0
          %1978 = vmatprep.subr.mxu0 0.0
          %1979 = vmatpush1.msra.mxu0 0.0
          %1980 = vmatprep.subr.mxu0 0.0
          %1981 = vmatpush1.msra.mxu0 0.0
          %1982 = vmatprep.subr.mxu0 0.0
          %1983 = vmatpush1.msra.mxu0 0.0
          %1984 = vmatprep.subr.mxu0 0.0
          %1985 = vmatpush1.msra.mxu0 0.0
          %1986 = vmatprep.subr.mxu0 0.0
          %1987 = vmatpush1.msra.mxu0 0.0
          %1988 = vmatprep.subr.mxu0 0.0
          %1989 = vmatpush1.msra.mxu0 0.0
          %1990 = vmatprep.subr.mxu0 0.0
          %1991 = vmatpush1.msra.mxu0 %v1968
          %1992 = vmatprep.subr.mxu0 0.0
          %1993 = vmatpush1.msra.mxu0 %v1908
          %1994 = vmatprep.subr.mxu0 0.0
          %1995 = vmatpush1.msra.mxu0 %v1907
          %1996 = vmatprep.subr.mxu0 0.0
          %1997 = vmatpush1.msra.mxu0 %v1906
          %1998 = vmatprep.subr.mxu0 0.0
          %1999 = vmatpush1.msra.mxu0 %v1905
          %2000 = vmatprep.subr.mxu0 0.0
          %2001 = vmatpush1.msra.mxu0 %v1904
          %2002 = vmatprep.subr.mxu0 0.0
          %2003 = vmatpush2.msra.mxu0 0.0
          %2004 = vmatprep.subr.mxu0 0.0
          %2005 = vmatpush2.msra.mxu0 0.0
          %2006 = vmatprep.subr.mxu0 0.0
          %2007 = vmatpush2.msra.mxu0 0.0
          %2008 = vmatprep.subr.mxu0 0.0
          %2009 = vmatpush2.msra.mxu0 0.0
          %2010 = vmatprep.subr.mxu0 0.0
          %2011 = vmatpush2.msra.mxu0 0.0
          %2012 = vmatprep.subr.mxu0 0.0
          %2013 = vmatpush2.msra.mxu0 0.0
          %2014 = vmatprep.subr.mxu0 0.0
          %2015 = vmatpush2.msra.mxu0 0.0
          %2016 = vmatprep.subr.mxu0 0.0
          %2017 = vmatpush2.msra.mxu0 0.0
          %2018 = vmatprep.subr.mxu0 0.0
          %2019 = vmatpush2.msra.mxu0 0.0
          %2020 = vmatprep.subr.mxu0 0.0
          %2021 = vmatpush2.msra.mxu0 0.0
          %2022 = vmatprep.subr.mxu0 0.0
          %2023 = vmatpush2.msra.mxu0 0.0
          %2024 = vmatprep.subr.mxu0 0.0
          %2025 = vmatpush2.msra.mxu0 0.0
          %2026 = vmatprep.subr.mxu0 0.0
          %2027 = vmatpush2.msra.mxu0 0.0
          %2028 = vmatprep.subr.mxu0 0.0
          %2029 = vmatpush2.msra.mxu0 0.0
          %2030 = vmatprep.subr.mxu0 0.0
          %2031 = vmatpush2.msra.mxu0 0.0
          %2032 = vmatprep.subr.mxu0 0.0
          %2033 = vmatpush2.msra.mxu0 0.0
          %2034 = vmatprep.mubr.f32.mxu0 0.0
          %2035 = vmatmul.mubr.f32.gmra.mxu0 %v1920
          %v2036 = vpop.f32.mrf.mxu0
          %v2037 = vadd.f32 %v1916, %v2036
          %v2038 = vpop.f32.mrf.mxu0
          %2039 = vmatprep.mubr.f32.mxu0 0.0
          %2040 = vmatmul.mubr.f32.gmra.mxu0 %v1923
          %v2041 = vpop.f32.mrf.mxu0
          %v2042 = vadd.f32 %v1916, %v2041
          %v2043 = vpop.f32.mrf.mxu0
          %2044 = vmatprep.mubr.f32.mxu0 0.0
          %2045 = vmatmul.mubr.f32.gmra.mxu0 %v1926
          %v2046 = vpop.f32.mrf.mxu0
          %v2047 = vadd.f32 %v1916, %v2046
          %v2048 = vpop.f32.mrf.mxu0
          %2049 = vmatprep.mubr.f32.mxu0 0.0
          %2050 = vmatmul.mubr.f32.gmra.mxu0 %v1929
          %v2051 = vpop.f32.mrf.mxu0
          %v2052 = vadd.f32 %v1916, %v2051
          %v2053 = vpop.f32.mrf.mxu0
          %2054 = vmatprep.mubr.f32.mxu0 0.0
          %2055 = vmatmul.mubr.f32.gmra.mxu0 %v1932
          %v2056 = vpop.f32.mrf.mxu0
          %v2057 = vadd.f32 %v1916, %v2056
          %v2058 = vpop.f32.mrf.mxu0
          %2059 = vmatprep.mubr.f32.mxu0 0.0
          %2060 = vmatmul.mubr.f32.gmra.mxu0 %v1935
          %v2061 = vpop.f32.mrf.mxu0
          %v2062 = vadd.f32 %v1916, %v2061
          %v2063 = vpop.f32.mrf.mxu0
          %2064 = vmatprep.mubr.f32.mxu0 0.0
          %2065 = vmatmul.mubr.f32.gmra.mxu0 %v1938
          %v2066 = vpop.f32.mrf.mxu0
          %v2067 = vadd.f32 %v1916, %v2066
          %v2068 = vpop.f32.mrf.mxu0
          %2069 = vmatprep.mubr.f32.mxu0 0.0
          %2070 = vmatmul.mubr.f32.gmra.mxu0 %v1941
          %v2071 = vpop.f32.mrf.mxu0
          %v2072 = vadd.f32 %v1916, %v2071
          %v2073 = vpop.f32.mrf.mxu0
          %2074 = vmatprep.mubr.f32.mxu0 0.0
          %2075 = vmatmul.mubr.f32.gmra.mxu0 %v1944
          %v2076 = vpop.f32.mrf.mxu0
          %v2077 = vadd.f32 %v1916, %v2076
          %v2078 = vpop.f32.mrf.mxu0
          %2079 = vmatprep.mubr.f32.mxu0 0.0
          %2080 = vmatmul.mubr.f32.gmra.mxu0 %v1947
          %v2081 = vpop.f32.mrf.mxu0
          %v2082 = vadd.f32 %v1916, %v2081
          %v2083 = vpop.f32.mrf.mxu0
          %2084 = vmatprep.mubr.f32.mxu0 0.0
          %2085 = vmatmul.mubr.f32.gmra.mxu0 %v1950
          %v2086 = vpop.f32.mrf.mxu0
          %v2087 = vadd.f32 %v1916, %v2086
          %v2088 = vpop.f32.mrf.mxu0
          %2089 = vmatprep.mubr.f32.mxu0 0.0
          %2090 = vmatmul.mubr.f32.gmra.mxu0 %v1953
          %v2091 = vpop.f32.mrf.mxu0
          %v2092 = vadd.f32 %v1916, %v2091
          %v2093 = vpop.f32.mrf.mxu0
          %2094 = vmatprep.mubr.f32.mxu0 0.0
          %2095 = vmatmul.mubr.f32.gmra.mxu0 %v1956
          %v2096 = vpop.f32.mrf.mxu0
          %v2097 = vadd.f32 %v1916, %v2096
          %v2098 = vpop.f32.mrf.mxu0
          %2099 = vmatprep.mubr.f32.mxu0 0.0
          %2100 = vmatmul.mubr.f32.gmra.mxu0 %v1959
          %v2101 = vpop.f32.mrf.mxu0
          %v2102 = vadd.f32 %v1916, %v2101
          %v2103 = vpop.f32.mrf.mxu0
          %2104 = vmatprep.mubr.f32.mxu0 0.0
          %2105 = vmatmul.mubr.f32.gmra.mxu0 %v1962
          %v2106 = vpop.f32.mrf.mxu0
          %v2107 = vadd.f32 %v1916, %v2106
          %v2108 = vpop.f32.mrf.mxu0
          %2109 = vmatprep.mubr.f32.mxu0 0.0
          %2110 = vmatmul.mubr.f32.gmra.mxu0 %v1965
          %v2111 = vpop.f32.mrf.mxu0
          %v2112 = vadd.f32 %v1916, %v2111
          %v2113 = vpop.f32.mrf.mxu0
          %2114 = vdwg.mxu0
          %v2115 = vadd.f32 %v728, %v1516
          %v2116 = vadd.f32 %v729, %v1517
          %v2117 = vadd.f32 %v730, %v1518
          %v2118 = vadd.f32 %v731, %v1519
          %v2119 = vadd.f32 %v732, %v1520
          %v2120 = vadd.f32 %v733, %v1521
          %v2121 = vadd.f32 %v734, %v1522
          %v2122 = vadd.f32 %v735, %v1523
          %v2123 = vadd.f32 %v736, %v1524
          %v2124 = vadd.f32 %v737, %v1525
          %v2125 = vadd.f32 %v738, %v1526
          %v2126 = vadd.f32 %v739, %v1527
          %v2127 = vadd.f32 %v740, %v1528
          %v2128 = vadd.f32 %v741, %v1529
          %v2129 = vadd.f32 %v742, %v1530
          %v2130 = vadd.f32 %v743, %v1531
          %v2131 = vadd.f32 %v2115, %v2037
          %v2132 = vadd.f32 %v2116, %v2042
          %v2133 = vadd.f32 %v2117, %v2047
          %v2134 = vadd.f32 %v2118, %v2052
          %v2135 = vadd.f32 %v2119, %v2057
          %v2136 = vadd.f32 %v2120, %v2062
          %v2137 = vadd.f32 %v2121, %v2067
          %v2138 = vadd.f32 %v2122, %v2072
          %v2139 = vadd.f32 %v2123, %v2077
          %v2140 = vadd.f32 %v2124, %v2082
          %v2141 = vadd.f32 %v2125, %v2087
          %v2142 = vadd.f32 %v2126, %v2092
          %v2143 = vadd.f32 %v2127, %v2097
          %v2144 = vadd.f32 %v2128, %v2102
          %v2145 = vadd.f32 %v2129, %v2107
          %v2146 = vadd.f32 %v2130, %v2112
          %2147 = vst.msk [vmem:[#allocation2] sm:$0xff] %vm845, %v2131
          %2148 = vst.msk [vmem:[#allocation2 + $0x8] sm:$0xff] %vm845, %v2132
          %2149 = vst.msk [vmem:[#allocation2 + $0x10] sm:$0xff] %vm845, %v2133
          %2150 = vst.msk [vmem:[#allocation2 + $0x18] sm:$0xff] %vm845, %v2134
          %2151 = vst.msk [vmem:[#allocation2 + $0x20] sm:$0xff] %vm845, %v2135
          %2152 = vst.msk [vmem:[#allocation2 + $0x28] sm:$0xff] %vm845, %v2136
          %2153 = vst.msk [vmem:[#allocation2 + $0x30] sm:$0xff] %vm845, %v2137
          %2154 = vst.msk [vmem:[#allocation2 + $0x38] sm:$0xff] %vm845, %v2138
          %2155 = vst.msk [vmem:[#allocation2 + $0x40] sm:$0xff] %vm845, %v2139
          %2156 = vst.msk [vmem:[#allocation2 + $0x48] sm:$0xff] %vm845, %v2140
          %2157 = vst.msk [vmem:[#allocation2 + $0x50] sm:$0xff] %vm845, %v2141
          %2158 = vst.msk [vmem:[#allocation2 + $0x58] sm:$0xff] %vm845, %v2142
          %2159 = vst.msk [vmem:[#allocation2 + $0x60] sm:$0xff] %vm845, %v2143
          %2160 = vst.msk [vmem:[#allocation2 + $0x68] sm:$0xff] %vm845, %v2144
          %2161 = vst.msk [vmem:[#allocation2 + $0x70] sm:$0xff] %vm845, %v2145
          %2162 = vst.msk [vmem:[#allocation2 + $0x78] sm:$0xff] %vm845, %v2146
        $region116: #{tpu_custom_call.1} parent=103 // pred_fallthru
          _
        %p2163 = scmp.eq.s32.totalorder %s37, 2
        %p2164 = pnand %p2163, %p1495
        %p2165 = pneg %p2164
        // Predicated region
        $region117: #{tpu_custom_call.1} parent=103 // pred_check
          _
        $region118: #{tpu_custom_call.1} parent=103 // pred_check_branch
          %2167 = sbr.rel (%p2164) target = $region120
        $region119: #{tpu_custom_call.1} parent=103 // pred_region
          %v2168 = vld [vmem:[#allocation2] sm:$0xff]
          %v2169 = vld [vmem:[#allocation2 + $0x8] sm:$0xff]
          %v2170 = vld [vmem:[#allocation2 + $0x10] sm:$0xff]
          %v2171 = vld [vmem:[#allocation2 + $0x18] sm:$0xff]
          %v2172 = vld [vmem:[#allocation2 + $0x20] sm:$0xff]
          %v2173 = vld [vmem:[#allocation2 + $0x28] sm:$0xff]
          %v2174 = vld [vmem:[#allocation2 + $0x30] sm:$0xff]
          %v2175 = vld [vmem:[#allocation2 + $0x38] sm:$0xff]
          %v2176 = vld [vmem:[#allocation2 + $0x40] sm:$0xff]
          %v2177 = vld [vmem:[#allocation2 + $0x48] sm:$0xff]
          %v2178 = vld [vmem:[#allocation2 + $0x50] sm:$0xff]
          %v2179 = vld [vmem:[#allocation2 + $0x58] sm:$0xff]
          %v2180 = vld [vmem:[#allocation2 + $0x60] sm:$0xff]
          %v2181 = vld [vmem:[#allocation2 + $0x68] sm:$0xff]
          %v2182 = vld [vmem:[#allocation2 + $0x70] sm:$0xff]
          %v2183 = vld [vmem:[#allocation2 + $0x78] sm:$0xff]
          %v2184 = vld [vmem:[%s3] sm:$0x3]
          %2185 = vmatprep.subr.mxu0 0.0
          %2186 = vmatpush1.msra.mxu0 %v2183
          %2187 = vmatprep.subr.mxu0 0.0
          %2188 = vmatpush1.msra.mxu0 %v2182
          %2189 = vmatprep.subr.mxu0 0.0
          %2190 = vmatpush1.msra.mxu0 %v2181
          %2191 = vmatprep.subr.mxu0 0.0
          %2192 = vmatpush1.msra.mxu0 %v2180
          %2193 = vmatprep.subr.mxu0 0.0
          %2194 = vmatpush1.msra.mxu0 %v2179
          %2195 = vmatprep.subr.mxu0 0.0
          %2196 = vmatpush1.msra.mxu0 %v2178
          %2197 = vmatprep.subr.mxu0 0.0
          %2198 = vmatpush1.msra.mxu0 %v2177
          %2199 = vmatprep.subr.mxu0 0.0
          %2200 = vmatpush1.msra.mxu0 %v2176
          %2201 = vmatprep.subr.mxu0 0.0
          %2202 = vmatpush1.msra.mxu0 %v2175
          %2203 = vmatprep.subr.mxu0 0.0
          %2204 = vmatpush1.msra.mxu0 %v2174
          %2205 = vmatprep.subr.mxu0 0.0
          %2206 = vmatpush1.msra.mxu0 %v2173
          %2207 = vmatprep.subr.mxu0 0.0
          %2208 = vmatpush1.msra.mxu0 %v2172
          %2209 = vmatprep.subr.mxu0 0.0
          %2210 = vmatpush1.msra.mxu0 %v2171
          %2211 = vmatprep.subr.mxu0 0.0
          %2212 = vmatpush1.msra.mxu0 %v2170
          %2213 = vmatprep.subr.mxu0 0.0
          %2214 = vmatpush1.msra.mxu0 %v2169
          %2215 = vmatprep.subr.mxu0 0.0
          %2216 = vmatpush1.msra.mxu0 %v2168
          %2217 = vmatprep.subr.mxu0 0.0
          %2218 = vmatpush2.msra.mxu0 0.0
          %2219 = vmatprep.subr.mxu0 0.0
          %2220 = vmatpush2.msra.mxu0 0.0
          %2221 = vmatprep.subr.mxu0 0.0
          %2222 = vmatpush2.msra.mxu0 0.0
          %2223 = vmatprep.subr.mxu0 0.0
          %2224 = vmatpush2.msra.mxu0 0.0
          %2225 = vmatprep.subr.mxu0 0.0
          %2226 = vmatpush2.msra.mxu0 0.0
          %2227 = vmatprep.subr.mxu0 0.0
          %2228 = vmatpush2.msra.mxu0 0.0
          %2229 = vmatprep.subr.mxu0 0.0
          %2230 = vmatpush2.msra.mxu0 0.0
          %2231 = vmatprep.subr.mxu0 0.0
          %2232 = vmatpush2.msra.mxu0 0.0
          %2233 = vmatprep.subr.mxu0 0.0
          %2234 = vmatpush2.msra.mxu0 0.0
          %2235 = vmatprep.subr.mxu0 0.0
          %2236 = vmatpush2.msra.mxu0 0.0
          %2237 = vmatprep.subr.mxu0 0.0
          %2238 = vmatpush2.msra.mxu0 0.0
          %2239 = vmatprep.subr.mxu0 0.0
          %2240 = vmatpush2.msra.mxu0 0.0
          %2241 = vmatprep.subr.mxu0 0.0
          %2242 = vmatpush2.msra.mxu0 0.0
          %2243 = vmatprep.subr.mxu0 0.0
          %2244 = vmatpush2.msra.mxu0 0.0
          %2245 = vmatprep.subr.mxu0 0.0
          %2246 = vmatpush2.msra.mxu0 0.0
          %2247 = vmatprep.subr.mxu0 0.0
          %2248 = vmatpush2.msra.mxu0 0.0
          %2249 = vmatprep.mubr.f32.mxu0 0.0
          %2250 = vmatmul.mubr.f32.gmra.mxu0 %v2184
          %v2251 = vpop.f32.mrf.mxu0
          %v2252 = vadd.f32 0.0, %v2251
          %v2253 = vpop.f32.mrf.mxu0
          %2254 = vdwg.mxu0
          %v2255 = vld [vmem:[%s17] sm:$0xff]
          %v2256 = vld [vmem:[%s17 + $0x8] sm:$0xff]
          %v2257 = vld [vmem:[%s17 + $0x10] sm:$0xff]
          %v2258 = vld [vmem:[%s17 + $0x18] sm:$0xff]
          %v2259 = vld [vmem:[%s18] sm:$0x1]
          %v2261 = vlaneseq
          %v2262 = vshrl.u32 %v2261, 7
          %v2263 = vsub.s32 0, %v2262
          %v2264 = vrot.slane %v2259, %v2263
          %v2267 = vsel %vm845, %v2252, 0
          %2269 = vmatprep.subr.mxu0 0.0
          %2270 = vmatpush1.msra.mxu0 0.0
          %2271 = vmatprep.subr.mxu0 0.0
          %2272 = vmatpush1.msra.mxu0 0.0
          %2273 = vmatprep.subr.mxu0 0.0
          %2274 = vmatpush1.msra.mxu0 0.0
          %2275 = vmatprep.subr.mxu0 0.0
          %2276 = vmatpush1.msra.mxu0 0.0
          %2277 = vmatprep.subr.mxu0 0.0
          %2278 = vmatpush1.msra.mxu0 0.0
          %2279 = vmatprep.subr.mxu0 0.0
          %2280 = vmatpush1.msra.mxu0 0.0
          %2281 = vmatprep.subr.mxu0 0.0
          %2282 = vmatpush1.msra.mxu0 0.0
          %2283 = vmatprep.subr.mxu0 0.0
          %2284 = vmatpush1.msra.mxu0 0.0
          %2285 = vmatprep.subr.mxu0 0.0
          %2286 = vmatpush1.msra.mxu0 0.0
          %2287 = vmatprep.subr.mxu0 0.0
          %2288 = vmatpush1.msra.mxu0 0.0
          %2289 = vmatprep.subr.mxu0 0.0
          %2290 = vmatpush1.msra.mxu0 0.0
          %2291 = vmatprep.subr.mxu0 0.0
          %2292 = vmatpush1.msra.mxu0 0.0
          %2293 = vmatprep.subr.mxu0 0.0
          %2294 = vmatpush1.msra.mxu0 %v2258
          %2295 = vmatprep.subr.mxu0 0.0
          %2296 = vmatpush1.msra.mxu0 %v2257
          %2297 = vmatprep.subr.mxu0 0.0
          %2298 = vmatpush1.msra.mxu0 %v2256
          %2299 = vmatprep.subr.mxu0 0.0
          %2300 = vmatpush1.msra.mxu0 %v2255
          %2301 = vmatprep.subr.mxu0 0.0
          %2302 = vmatpush2.msra.mxu0 0.0
          %2303 = vmatprep.subr.mxu0 0.0
          %2304 = vmatpush2.msra.mxu0 0.0
          %2305 = vmatprep.subr.mxu0 0.0
          %2306 = vmatpush2.msra.mxu0 0.0
          %2307 = vmatprep.subr.mxu0 0.0
          %2308 = vmatpush2.msra.mxu0 0.0
          %2309 = vmatprep.subr.mxu0 0.0
          %2310 = vmatpush2.msra.mxu0 0.0
          %2311 = vmatprep.subr.mxu0 0.0
          %2312 = vmatpush2.msra.mxu0 0.0
          %2313 = vmatprep.subr.mxu0 0.0
          %2314 = vmatpush2.msra.mxu0 0.0
          %2315 = vmatprep.subr.mxu0 0.0
          %2316 = vmatpush2.msra.mxu0 0.0
          %2317 = vmatprep.subr.mxu0 0.0
          %2318 = vmatpush2.msra.mxu0 0.0
          %2319 = vmatprep.subr.mxu0 0.0
          %2320 = vmatpush2.msra.mxu0 0.0
          %2321 = vmatprep.subr.mxu0 0.0
          %2322 = vmatpush2.msra.mxu0 0.0
          %2323 = vmatprep.subr.mxu0 0.0
          %2324 = vmatpush2.msra.mxu0 0.0
          %2325 = vmatprep.subr.mxu0 0.0
          %2326 = vmatpush2.msra.mxu0 0.0
          %2327 = vmatprep.subr.mxu0 0.0
          %2328 = vmatpush2.msra.mxu0 0.0
          %2329 = vmatprep.subr.mxu0 0.0
          %2330 = vmatpush2.msra.mxu0 0.0
          %2331 = vmatprep.subr.mxu0 0.0
          %2332 = vmatpush2.msra.mxu0 0.0
          %2333 = vmatprep.mubr.f32.mxu0 0.0
          %2334 = vmatmul.mubr.f32.gmra.mxu0 %v2267
          %v2335 = vpop.f32.mrf.mxu0
          %v2336 = vadd.f32 %v2264, %v2335
          %v2337 = vpop.f32.mrf.mxu0
          %2338 = vdwg.mxu0
          %v2339 = vmax.f32 %v2336, 0.0
          %v2340 = vld [vmem:[%s19] sm:$0xff]
          %v2341 = vld [vmem:[%s19 + $0x8] sm:$0xff]
          %v2342 = vld [vmem:[%s19 + $0x10] sm:$0xff]
          %v2343 = vld [vmem:[%s19 + $0x18] sm:$0xff]
          %v2344 = vld [vmem:[%s19 + $0x20] sm:$0xff]
          %v2345 = vld [vmem:[%s19 + $0x28] sm:$0x3f]
          %v2346 = vld [vmem:[%s20] sm:$0x1]
          %v2348 = vlaneseq
          %v2349 = vshrl.u32 %v2348, 7
          %v2350 = vsub.s32 0, %v2349
          %v2351 = vrot.slane %v2346, %v2350
          %vm2353 = vcmask 375808
          %v2355 = vsel %vm2353, %v2339, 0
          %v2358 = vsel %vm980, %v2345, 0
          %2360 = vmatprep.subr.mxu0 0.0
          %2361 = vmatpush1.msra.mxu0 0.0
          %2362 = vmatprep.subr.mxu0 0.0
          %2363 = vmatpush1.msra.mxu0 0.0
          %2364 = vmatprep.subr.mxu0 0.0
          %2365 = vmatpush1.msra.mxu0 0.0
          %2366 = vmatprep.subr.mxu0 0.0
          %2367 = vmatpush1.msra.mxu0 0.0
          %2368 = vmatprep.subr.mxu0 0.0
          %2369 = vmatpush1.msra.mxu0 0.0
          %2370 = vmatprep.subr.mxu0 0.0
          %2371 = vmatpush1.msra.mxu0 0.0
          %2372 = vmatprep.subr.mxu0 0.0
          %2373 = vmatpush1.msra.mxu0 0.0
          %2374 = vmatprep.subr.mxu0 0.0
          %2375 = vmatpush1.msra.mxu0 0.0
          %2376 = vmatprep.subr.mxu0 0.0
          %2377 = vmatpush1.msra.mxu0 0.0
          %2378 = vmatprep.subr.mxu0 0.0
          %2379 = vmatpush1.msra.mxu0 0.0
          %2380 = vmatprep.subr.mxu0 0.0
          %2381 = vmatpush1.msra.mxu0 %v2358
          %2382 = vmatprep.subr.mxu0 0.0
          %2383 = vmatpush1.msra.mxu0 %v2344
          %2384 = vmatprep.subr.mxu0 0.0
          %2385 = vmatpush1.msra.mxu0 %v2343
          %2386 = vmatprep.subr.mxu0 0.0
          %2387 = vmatpush1.msra.mxu0 %v2342
          %2388 = vmatprep.subr.mxu0 0.0
          %2389 = vmatpush1.msra.mxu0 %v2341
          %2390 = vmatprep.subr.mxu0 0.0
          %2391 = vmatpush1.msra.mxu0 %v2340
          %2392 = vmatprep.subr.mxu0 0.0
          %2393 = vmatpush2.msra.mxu0 0.0
          %2394 = vmatprep.subr.mxu0 0.0
          %2395 = vmatpush2.msra.mxu0 0.0
          %2396 = vmatprep.subr.mxu0 0.0
          %2397 = vmatpush2.msra.mxu0 0.0
          %2398 = vmatprep.subr.mxu0 0.0
          %2399 = vmatpush2.msra.mxu0 0.0
          %2400 = vmatprep.subr.mxu0 0.0
          %2401 = vmatpush2.msra.mxu0 0.0
          %2402 = vmatprep.subr.mxu0 0.0
          %2403 = vmatpush2.msra.mxu0 0.0
          %2404 = vmatprep.subr.mxu0 0.0
          %2405 = vmatpush2.msra.mxu0 0.0
          %2406 = vmatprep.subr.mxu0 0.0
          %2407 = vmatpush2.msra.mxu0 0.0
          %2408 = vmatprep.subr.mxu0 0.0
          %2409 = vmatpush2.msra.mxu0 0.0
          %2410 = vmatprep.subr.mxu0 0.0
          %2411 = vmatpush2.msra.mxu0 0.0
          %2412 = vmatprep.subr.mxu0 0.0
          %2413 = vmatpush2.msra.mxu0 0.0
          %2414 = vmatprep.subr.mxu0 0.0
          %2415 = vmatpush2.msra.mxu0 0.0
          %2416 = vmatprep.subr.mxu0 0.0
          %2417 = vmatpush2.msra.mxu0 0.0
          %2418 = vmatprep.subr.mxu0 0.0
          %2419 = vmatpush2.msra.mxu0 0.0
          %2420 = vmatprep.subr.mxu0 0.0
          %2421 = vmatpush2.msra.mxu0 0.0
          %2422 = vmatprep.subr.mxu0 0.0
          %2423 = vmatpush2.msra.mxu0 0.0
          %2424 = vmatprep.mubr.f32.mxu0 0.0
          %2425 = vmatmul.mubr.f32.gmra.mxu0 %v2355
          %v2426 = vpop.f32.mrf.mxu0
          %v2427 = vadd.f32 %v2351, %v2426
          %v2428 = vpop.f32.mrf.mxu0
          %2429 = vdwg.mxu0
          %vm2430 = vcmask 9216
          %2431 = vst.msk [vmem:[#allocation4] sm:$0x3] %vm2430, %v2427
        $region120: #{tpu_custom_call.1} parent=103 // pred_fallthru
          _
        // Predicated region
        $region121: #{tpu_custom_call.1} parent=103 // pred_check
          %p2432 = pneg %p509
        $region122: #{tpu_custom_call.1} parent=103 // pred_check_branch
          %2434 = sbr.rel (%p2432) target = $region124
        $region123: #{tpu_custom_call.1} parent=103 // pred_region
          %s2436 = ssub.s32 32, 32
          %2437 = vsyncadd [#allocation5], %s2436
          %s2439 = sshll.u32 [#allocation4], 4
          %s2440 = int_to_ptr.vmem [resolvable:$true] %s2439
          %2442 = dma.vmem_to_hbm [thread:$0]  %s2440, 32, %s21, [#allocation5]
        $region124: #{tpu_custom_call.1} parent=103 // pred_fallthru
          _
        // Predicated region
        $region125: #{tpu_custom_call.1} parent=103 // pred_check
          %p2443 = pneg %p509
        $region126: #{tpu_custom_call.1} parent=103 // pred_check_branch
          %2445 = sbr.rel (%p2443) target = $region128
        $region127: #{tpu_custom_call.1} parent=103 // pred_region
          %2446 = dma.done [#allocation5], 32
        $region128: #{tpu_custom_call.1} parent=103 // pred_fallthru
          _
      $region104: #{tpu_custom_call.1} parent=5 // pred_fallthru
        _
      %p2447 = scmp.le.s32.totalorder 2, %s28
      // Predicated region
      $region129: #{tpu_custom_call.1} parent=5 // pred_check
        %p2448 = pneg %p2447
      $region130: #{tpu_custom_call.1} parent=5 // pred_check_branch
        %2450 = sbr.rel (%p2448) target = $region132
      $region131: #{tpu_custom_call.1} parent=5 // pred_region
        %s2451 = ssub.s32 %s28, 2
      $region132: #{tpu_custom_call.1} parent=5 // pred_fallthru
        _
    $region6: #{tpu_custom_call.1} parent=1 // loop_footer
      %s32 = sadd.s32 1, %s28
    $region7: #{tpu_custom_call.1} parent=1 // loop_footer_branch
      %27 = sbr.rel target = $region3
    $region8: #{tpu_custom_call.1} parent=1 // loop_exit
      _
    %2452 = vsyncpa [#allocation5], 1
    %s2453 = scalar_lea.sflag [#allocation5], 1
    %2454 = vsyncpa %s2453, 1

</llo_original>
